<compile_context>
chip_gen: v7x
topology: tpu7x:2x2x1
jax: 0.10.0
libtpu: 0.0.40
codegen_flags: <defaults>
</compile_context>

<pallas_src>
import functools
import math

import jax
import jax.numpy as jnp
from jax.experimental import pallas as pl
from jax.experimental.pallas import tpu as pltpu


# ----------------------------- tiling helpers ------------------------------

def _pick_tile(rows):
    """Largest tile (multiple of 8) that divides `rows` and leaves >=2 grid blocks."""
    for c in (512, 256, 128, 64, 32, 16, 8):
        if c <= rows and rows % c == 0 and rows // c >= 2:
            return c
    return rows


# ------------------------ conv + bias + BN statistics -----------------------

def _conv_bn_stats_kernel(xw_ref, w_ref, b_ref, y_ref, s_ref, q_ref):
    # xw_ref: (1, H+2, W, 3*Cin) f32   kw-unrolled, padded input (one image)
    # w_ref : (3, 3*Cin, Cout)   bf16  conv weights, kh-major
    # b_ref : (1, Cout)          f32
    # y_ref : (1, H*W, Cout)     f32   conv output (pre-BN)
    # s_ref : (1, 1, Cout)       f32   per-channel sum   (partial, this image)
    # q_ref : (1, 1, Cout)       f32   per-channel sumsq (partial, this image)
    xw = xw_ref[0]                       # (H+2, W, 3*Cin)
    H = xw.shape[0] - 2
    W = xw.shape[1]
    K = xw.shape[2]
    Cout = w_ref.shape[2]

    acc = jnp.zeros((H * W, Cout), jnp.float32)
    for kh in range(3):                  # 3 accumulating MXU dots
        patch = xw[kh:kh + H].reshape(H * W, K).astype(jnp.bfloat16)
        acc = acc + jnp.dot(patch, w_ref[kh],
                            preferred_element_type=jnp.float32)
    y = acc + b_ref[...]                 # (H*W, Cout)
    y_ref[0] = y
    s_ref[0] = jnp.sum(y, axis=0, keepdims=True)
    q_ref[0] = jnp.sum(y * y, axis=0, keepdims=True)


def conv_bn_stats(xw, w, b):
    """xw: (N, H+2, W, 3*Cin) f32; w: (3, 3*Cin, Cout) bf16; b: (1, Cout) f32."""
    N, Hp, W, K = xw.shape
    H = Hp - 2
    Cout = w.shape[-1]
    return pl.pallas_call(
        _conv_bn_stats_kernel,
        out_shape=(jax.ShapeDtypeStruct((N, H * W, Cout), jnp.float32),
                   jax.ShapeDtypeStruct((N, 1, Cout), jnp.float32),
                   jax.ShapeDtypeStruct((N, 1, Cout), jnp.float32)),
        grid=(N,),
        in_specs=[pl.BlockSpec((1, Hp, W, K), lambda n: (n, 0, 0, 0)),
                  pl.BlockSpec((3, K, Cout), lambda n: (0, 0, 0)),
                  pl.BlockSpec((1, Cout), lambda n: (0, 0))],
        out_specs=(pl.BlockSpec((1, H * W, Cout), lambda n: (n, 0, 0)),
                   pl.BlockSpec((1, 1, Cout), lambda n: (n, 0, 0)),
                   pl.BlockSpec((1, 1, Cout), lambda n: (n, 0, 0))),
        compiler_params=pltpu.CompilerParams(
            dimension_semantics=("parallel",)),
    )(xw, w, b)


# ---------------- fused BN-normalize (+ 2x2 maxpool) + tanh epilogue --------

def _bn_pool_tanh_kernel(y_ref, sc_ref, sh_ref, o_ref):
    # y_ref: (T, tm, L) f32 -- T pooling taps (T=1: no pool, T=4: 2x2/stride-2)
    z = y_ref[...] * sc_ref[...] + sh_ref[...]          # BN normalize + affine
    o_ref[...] = jnp.tanh(jnp.max(z, axis=0))           # pool (monotone) then tanh


def bn_pool_tanh(taps, scale, shift):
    """taps: (T, M, C) f32; scale/shift: (1, C) f32 -> (M, C) f32."""
    T, M, C = taps.shape
    # Lane-dense view: present a last dim of exactly 128 to avoid masked stores.
    if C % 128 == 0:
        yl, sc, sh, R, L = taps, scale, shift, M, C
    elif 128 % C == 0 and (M * C) % 128 == 0:
        rep = 128 // C
        R, L = (M * C) // 128, 128
        yl = taps.reshape(T, R, L)
        sc = jnp.tile(scale, (1, rep))
        sh = jnp.tile(shift, (1, rep))
    else:
        yl, sc, sh, R, L = taps, scale, shift, M, C
    tm = _pick_tile(R)
    out = pl.pallas_call(
        _bn_pool_tanh_kernel,
        out_shape=jax.ShapeDtypeStruct((R, L), jnp.float32),
        grid=(R // tm,),
        in_specs=[pl.BlockSpec((T, tm, L), lambda i: (0, i, 0)),
                  pl.BlockSpec((1, L), lambda i: (0, 0)),
                  pl.BlockSpec((1, L), lambda i: (0, 0))],
        out_specs=pl.BlockSpec((tm, L), lambda i: (i, 0)),
        compiler_params=pltpu.CompilerParams(
            dimension_semantics=("parallel",)),
    )(yl, sc, sh)
    return out.reshape(M, C)


# ---------------------- standalone maxpool (fallback path) ------------------

def _max_taps_kernel(y_ref, o_ref):
    o_ref[...] = jnp.max(y_ref[...], axis=0)


def maxpool_2x2(x_nhwc):
    """MaxPool2d(2, stride=2) for an 'M' entry not fused into a conv block."""
    N, H, W, C = x_nhwc.shape
    Ho, Wo = H // 2, W // 2
    M = N * Ho * Wo
    taps = (x_nhwc.reshape(N, Ho, 2, Wo, 2, C)
            .transpose(2, 4, 0, 1, 3, 5).reshape(4, M, C))
    tm = _pick_tile(M)
    out = pl.pallas_call(
        _max_taps_kernel,
        out_shape=jax.ShapeDtypeStruct((M, C), jnp.float32),
        grid=(M // tm,),
        in_specs=[pl.BlockSpec((4, tm, C), lambda i: (0, i, 0))],
        out_specs=pl.BlockSpec((tm, C), lambda i: (i, 0)),
        compiler_params=pltpu.CompilerParams(
            dimension_semantics=("parallel",)),
    )(taps)
    return out.reshape(N, Ho, Wo, C)


# ------------------------------ dense (Linear) -------------------------------

def _matmul_bias_kernel(a_ref, w_ref, b_ref, o_ref, acc_ref):
    @pl.when(pl.program_id(1) == 0)
    def _():
        acc_ref[...] = jnp.zeros_like(acc_ref)

    acc_ref[...] += jnp.dot(a_ref[...], w_ref[...],
                            preferred_element_type=jnp.float32)

    @pl.when(pl.program_id(1) == pl.num_programs(1) - 1)
    def _():
        o_ref[...] = (acc_ref[...] + b_ref[...]).astype(o_ref.dtype)


def matmul_bias(a, w, b):
    """a: (M, K) @ w: (K, N) + b: (1, N) -> (M, N) f32 (bf16 MXU operands)."""
    M, K = a.shape
    N = w.shape[1]
    tk = K
    for c in (512, 256, 128):
        if K % c == 0 and K // c >= 2:
            tk = c
            break
    tm = _pick_tile(M) if (M >= 16 and M % 8 == 0) else M
    a = a.astype(jnp.bfloat16)
    return pl.pallas_call(
        _matmul_bias_kernel,
        out_shape=jax.ShapeDtypeStruct((M, N), jnp.float32),
        grid=(M // tm, K // tk),
        in_specs=[pl.BlockSpec((tm, tk), lambda i, k: (i, k)),
                  pl.BlockSpec((tk, N), lambda i, k: (k, 0)),
                  pl.BlockSpec((1, N), lambda i, k: (0, 0))],
        out_specs=pl.BlockSpec((tm, N), lambda i, k: (i, 0)),
        scratch_shapes=[pltpu.VMEM((tm, N), jnp.float32)],
        compiler_params=pltpu.CompilerParams(
            dimension_semantics=("parallel", "arbitrary")),
    )(a, w, b)


# ------------------------------ VGG assembly --------------------------------

def conv_block(x_nhwc, p, fuse_pool, eps=1e-5):
    """Conv2d(3x3, pad=1) -> BatchNorm2d (batch stats) -> Tanh [-> MaxPool 2x2]."""
    N, H, W, Cin = x_nhwc.shape
    Cout = p['w'].shape[-1]
    xp = jnp.pad(x_nhwc, ((0, 0), (1, 1), (1, 1), (0, 0)))
    # kw-unrolled im2col slab (3x, not 9x): channel index = kw*Cin + ci.
    xw = jnp.concatenate([xp[:, :, kw:kw + W, :] for kw in range(3)], axis=-1)

    y, s, q = conv_bn_stats(xw, p['w'], p['b'])          # conv + bias + stats

    cnt = float(N * H * W)
    mean = jnp.sum(s, axis=0) / cnt                      # (1, Cout)
    var = jnp.maximum(jnp.sum(q, axis=0) / cnt - mean * mean, 0.0)
    scale = p['gamma'] * jax.lax.rsqrt(var + eps)
    shift = p['beta'] - mean * scale

    if fuse_pool:
        Ho, Wo = H // 2, W // 2
        taps = (y.reshape(N, Ho, 2, Wo, 2, Cout)
                .transpose(2, 4, 0, 1, 3, 5).reshape(4, N * Ho * Wo, Cout))
    else:
        Ho, Wo = H, W
        taps = y.reshape(1, N * H * W, Cout)

    out = bn_pool_tanh(taps, scale, shift)               # normalize+pool+tanh
    return out.reshape(N, Ho, Wo, Cout)


def init_params(cfg, key):
    params = []
    for entry in cfg:
        kind, cin, cout, ksz = entry[0], entry[1], entry[2], entry[3]
        if kind == 'C':
            key, k1 = jax.random.split(key)
            # kaiming_normal_(mode='fan_out', nonlinearity='relu'), bias = 0
            fan_out = cout * ksz * ksz
            std = math.sqrt(2.0 / fan_out)
            w = std * jax.random.normal(k1, (cout, cin, ksz, ksz), jnp.float32)
            # hoisted layout: (Cout,Cin,kh,kw) -> (kh, kw*Cin, Cout), bf16 MXU operand
            w_mat = jnp.transpose(w, (2, 3, 1, 0)).reshape(ksz, ksz * cin, cout)
            params.append(dict(w=w_mat.astype(jnp.bfloat16),
                               b=jnp.zeros((1, cout), jnp.float32),
                               gamma=jnp.ones((1, cout), jnp.float32),
                               beta=jnp.zeros((1, cout), jnp.float32)))
        elif kind == 'M':
            params.append({})
        elif kind == 'D':
            key, k1 = jax.random.split(key)
            # nn.init.normal_(weight, 0, 0.01); bias = 0; hoisted W.T, bf16 operand
            w = 0.01 * jax.random.normal(k1, (cout, cin), jnp.float32)
            params.append(dict(w=jnp.transpose(w).astype(jnp.bfloat16),
                               b=jnp.zeros((1, cout), jnp.float32)))
    return params


def vgg_forward(cfg, params, x_nchw):
    out = jnp.transpose(x_nchw, (0, 2, 3, 1))            # NCHW -> NHWC
    flat = None
    i, n = 0, len(cfg)
    while i < n:
        kind = cfg[i][0]
        if kind == 'C':
            fuse = (i + 1 < n and cfg[i + 1][0] == 'M' and cfg[i + 1][3] == 2)
            out = conv_block(out, params[i], fuse)
            i += 2 if fuse else 1
        elif kind == 'M':
            assert cfg[i][3] == 2
            out = maxpool_2x2(out)
            i += 1
        else:  # 'D'
            if flat is None:
                # PyTorch flattens NCHW: out.view(N, -1).
                flat = jnp.transpose(out, (0, 3, 1, 2)).reshape(out.shape[0], -1)
            flat = matmul_bias(flat, params[i]['w'], params[i]['b'])
            i += 1
    # TODO(synk): noise_scale != 0 (Laplace noise sampling) is not implemented;
    # the reference module is exercised with noise_scale=0.
    return flat if flat is not None else out


# --------------------------------- main --------------------------------------

if __name__ == "__main__":
    # Small VGG-style config: [('C'|'M'|'D', in, out, kernel), ...]
    cfg = (
        ('C', 3, 32, 3),
        ('C', 32, 32, 3),
        ('M', 32, 32, 2),
        ('C', 32, 64, 3),
        ('M', 64, 64, 2),
        ('D', 64 * 4 * 4, 128, 1),
        ('D', 128, 10, 1),
    )

    key = jax.random.PRNGKey(0)
    key, kx = jax.random.split(key)
    x = jax.random.normal(kx, (2, 3, 16, 16), jnp.float32)   # NCHW, like torch

    params = init_params(cfg, key)
    forward = jax.jit(functools.partial(vgg_forward, cfg))
    out = forward(params, x)
    out = jax.block_until_ready(out)
    assert out.shape == (2, 10), out.shape
    assert bool(jnp.all(jnp.isfinite(out)))
    print("KERNEL_OK")
</pallas_src>

<mosaic_0001>
module attributes {stable_mosaic.version = 11 : i64} {
  func.func @_conv_bn_stats_kernel(%arg0: i32, %arg1: memref<1x18x16x9xf32, #tpu.memory_space<vmem>>, %arg2: memref<3x9x32xbf16, #tpu.memory_space<vmem>>, %arg3: memref<1x32xf32, #tpu.memory_space<vmem>>, %arg4: memref<1x256x32xf32, #tpu.memory_space<vmem>>, %arg5: memref<1x1x32xf32, #tpu.memory_space<vmem>>, %arg6: memref<1x1x32xf32, #tpu.memory_space<vmem>>) attributes {dimension_semantics = [#tpu.dimension_semantics<parallel>], iteration_bounds = array<i64: 2>, scalar_prefetch = 0 : i64, scratch_operands = 0 : i64, tpu.core_type = #tpu.core_type<tc>, window_params = [{transform_indices = @transform_0, window_bounds = array<i64: 1, 18, 16, 9>}, {pipeline_mode = #tpu.pipeline_mode<synchronous>, transform_indices = @transform_1, window_bounds = array<i64: 3, 9, 32>}, {pipeline_mode = #tpu.pipeline_mode<synchronous>, transform_indices = @transform_2, window_bounds = array<i64: 1, 32>}, {transform_indices = @transform_3, window_bounds = array<i64: 1, 256, 32>}, {transform_indices = @transform_4, window_bounds = array<i64: 1, 1, 32>}, {transform_indices = @transform_5, window_bounds = array<i64: 1, 1, 32>}]} {
    %c0 = arith.constant 0 : index
    %c0_0 = arith.constant 0 : index
    %c0_1 = arith.constant 0 : index
    %c0_2 = arith.constant 0 : index
    %0 = vector.load %arg1[%c0, %c0_0, %c0_1, %c0_2] : memref<1x18x16x9xf32, #tpu.memory_space<vmem>>, vector<1x18x16x9xf32>
    %1 = vector.shape_cast %0 : vector<1x18x16x9xf32> to vector<18x16x9xf32>
    %cst = arith.constant 0.000000e+00 : f32
    %2 = vector.broadcast %cst : f32 to vector<256x32xf32>
    %3 = vector.extract_strided_slice %1 {offsets = [0, 0, 0], sizes = [16, 16, 9], strides = [1, 1, 1]} : vector<18x16x9xf32> to vector<16x16x9xf32>
    %4 = vector.shape_cast %3 : vector<16x16x9xf32> to vector<256x9xf32>
    %5 = arith.truncf %4 : vector<256x9xf32> to vector<256x9xbf16>
    %c0_3 = arith.constant 0 : index
    %c0_4 = arith.constant 0 : index
    %c0_5 = arith.constant 0 : index
    %6 = vector.load %arg2[%c0_3, %c0_4, %c0_5] : memref<3x9x32xbf16, #tpu.memory_space<vmem>>, vector<1x9x32xbf16>
    %7 = vector.shape_cast %6 : vector<1x9x32xbf16> to vector<9x32xbf16>
    %cst_6 = arith.constant dense<0.000000e+00> : vector<256x32xf32>
    %8 = tpu.matmul %5, %7, %cst_6 {dimension_numbers = #tpu.dot_dimension_numbers<[1], [0], [0], [1], [0, 0, 1, 1], [], []>} : vector<256x9xbf16>, vector<9x32xbf16>, vector<256x32xf32> -> vector<256x32xf32>
    %9 = arith.addf %2, %8 : vector<256x32xf32>
    %10 = vector.extract_strided_slice %1 {offsets = [1, 0, 0], sizes = [16, 16, 9], strides = [1, 1, 1]} : vector<18x16x9xf32> to vector<16x16x9xf32>
    %11 = vector.shape_cast %10 : vector<16x16x9xf32> to vector<256x9xf32>
    %12 = arith.truncf %11 : vector<256x9xf32> to vector<256x9xbf16>
    %c1 = arith.constant 1 : index
    %c0_7 = arith.constant 0 : index
    %c0_8 = arith.constant 0 : index
    %13 = vector.load %arg2[%c1, %c0_7, %c0_8] : memref<3x9x32xbf16, #tpu.memory_space<vmem>>, vector<1x9x32xbf16>
    %14 = vector.shape_cast %13 : vector<1x9x32xbf16> to vector<9x32xbf16>
    %cst_9 = arith.constant dense<0.000000e+00> : vector<256x32xf32>
    %15 = tpu.matmul %12, %14, %cst_9 {dimension_numbers = #tpu.dot_dimension_numbers<[1], [0], [0], [1], [0, 0, 1, 1], [], []>} : vector<256x9xbf16>, vector<9x32xbf16>, vector<256x32xf32> -> vector<256x32xf32>
    %16 = arith.addf %9, %15 : vector<256x32xf32>
    %17 = vector.extract_strided_slice %1 {offsets = [2, 0, 0], sizes = [16, 16, 9], strides = [1, 1, 1]} : vector<18x16x9xf32> to vector<16x16x9xf32>
    %18 = vector.shape_cast %17 : vector<16x16x9xf32> to vector<256x9xf32>
    %19 = arith.truncf %18 : vector<256x9xf32> to vector<256x9xbf16>
    %c2 = arith.constant 2 : index
    %c0_10 = arith.constant 0 : index
    %c0_11 = arith.constant 0 : index
    %20 = vector.load %arg2[%c2, %c0_10, %c0_11] : memref<3x9x32xbf16, #tpu.memory_space<vmem>>, vector<1x9x32xbf16>
    %21 = vector.shape_cast %20 : vector<1x9x32xbf16> to vector<9x32xbf16>
    %cst_12 = arith.constant dense<0.000000e+00> : vector<256x32xf32>
    %22 = tpu.matmul %19, %21, %cst_12 {dimension_numbers = #tpu.dot_dimension_numbers<[1], [0], [0], [1], [0, 0, 1, 1], [], []>} : vector<256x9xbf16>, vector<9x32xbf16>, vector<256x32xf32> -> vector<256x32xf32>
    %23 = arith.addf %16, %22 : vector<256x32xf32>
    %c0_13 = arith.constant 0 : index
    %c0_14 = arith.constant 0 : index
    %24 = vector.load %arg3[%c0_13, %c0_14] : memref<1x32xf32, #tpu.memory_space<vmem>>, vector<1x32xf32>
    %25 = vector.broadcast %24 : vector<1x32xf32> to vector<256x32xf32>
    %26 = arith.addf %23, %25 : vector<256x32xf32>
    %c0_15 = arith.constant 0 : index
    %c0_16 = arith.constant 0 : index
    %c0_17 = arith.constant 0 : index
    %27 = vector.load %arg4[%c0_15, %c0_16, %c0_17] : memref<1x256x32xf32, #tpu.memory_space<vmem>>, vector<1x256x32xf32>
    %28 = vector.shape_cast %27 : vector<1x256x32xf32> to vector<256x32xf32>
    %29 = vector.shape_cast %26 : vector<256x32xf32> to vector<1x256x32xf32>
    tpu.vector_store %arg4[%c0_15, %c0_16, %c0_17], %29 {strides = array<i32>} : memref<1x256x32xf32, #tpu.memory_space<vmem>>, vector<1x256x32xf32>,
    %cst_18 = arith.constant dense<0.000000e+00> : vector<32xf32>
    %30 = vector.multi_reduction <add>, %26, %cst_18 [0] : vector<256x32xf32> to vector<32xf32>
    %31 = vector.shape_cast %30 : vector<32xf32> to vector<1x32xf32>
    %c0_19 = arith.constant 0 : index
    %c0_20 = arith.constant 0 : index
    %c0_21 = arith.constant 0 : index
    %32 = vector.load %arg5[%c0_19, %c0_20, %c0_21] : memref<1x1x32xf32, #tpu.memory_space<vmem>>, vector<1x1x32xf32>
    %33 = vector.shape_cast %32 : vector<1x1x32xf32> to vector<1x32xf32>
    %34 = vector.shape_cast %31 : vector<1x32xf32> to vector<1x1x32xf32>
    tpu.vector_store %arg5[%c0_19, %c0_20, %c0_21], %34 {strides = array<i32>} : memref<1x1x32xf32, #tpu.memory_space<vmem>>, vector<1x1x32xf32>,
    %35 = arith.mulf %26, %26 : vector<256x32xf32>
    %cst_22 = arith.constant dense<0.000000e+00> : vector<32xf32>
    %36 = vector.multi_reduction <add>, %35, %cst_22 [0] : vector<256x32xf32> to vector<32xf32>
    %37 = vector.shape_cast %36 : vector<32xf32> to vector<1x32xf32>
    %c0_23 = arith.constant 0 : index
    %c0_24 = arith.constant 0 : index
    %c0_25 = arith.constant 0 : index
    %38 = vector.load %arg6[%c0_23, %c0_24, %c0_25] : memref<1x1x32xf32, #tpu.memory_space<vmem>>, vector<1x1x32xf32>
    %39 = vector.shape_cast %38 : vector<1x1x32xf32> to vector<1x32xf32>
    %40 = vector.shape_cast %37 : vector<1x32xf32> to vector<1x1x32xf32>
    tpu.vector_store %arg6[%c0_23, %c0_24, %c0_25], %40 {strides = array<i32>} : memref<1x1x32xf32, #tpu.memory_space<vmem>>, vector<1x1x32xf32>,
    return
  }
  func.func @transform_0(%arg0: i32) -> (i32, i32, i32, i32) {
    %c0_i32 = arith.constant 0 : i32
    %c0_i32_0 = arith.constant 0 : i32
    %c0_i32_1 = arith.constant 0 : i32
    %c0_i32_2 = arith.constant 0 : i32
    return %arg0, %c0_i32, %c0_i32_0, %c0_i32_1 : i32, i32, i32, i32
  }
  func.func @transform_1(%arg0: i32) -> (i32, i32, i32) {
    %c0_i32 = arith.constant 0 : i32
    %c0_i32_0 = arith.constant 0 : i32
    %c0_i32_1 = arith.constant 0 : i32
    %c0_i32_2 = arith.constant 0 : i32
    return %c0_i32, %c0_i32_0, %c0_i32_1 : i32, i32, i32
  }
  func.func @transform_2(%arg0: i32) -> (i32, i32) {
    %c0_i32 = arith.constant 0 : i32
    %c0_i32_0 = arith.constant 0 : i32
    %c0_i32_1 = arith.constant 0 : i32
    return %c0_i32, %c0_i32_0 : i32, i32
  }
  func.func @transform_3(%arg0: i32) -> (i32, i32, i32) {
    %c0_i32 = arith.constant 0 : i32
    %c0_i32_0 = arith.constant 0 : i32
    %c0_i32_1 = arith.constant 0 : i32
    return %arg0, %c0_i32, %c0_i32_0 : i32, i32, i32
  }
  func.func @transform_4(%arg0: i32) -> (i32, i32, i32) {
    %c0_i32 = arith.constant 0 : i32
    %c0_i32_0 = arith.constant 0 : i32
    %c0_i32_1 = arith.constant 0 : i32
    return %arg0, %c0_i32, %c0_i32_0 : i32, i32, i32
  }
  func.func @transform_5(%arg0: i32) -> (i32, i32, i32) {
    %c0_i32 = arith.constant 0 : i32
    %c0_i32_0 = arith.constant 0 : i32
    %c0_i32_1 = arith.constant 0 : i32
    return %arg0, %c0_i32, %c0_i32_0 : i32, i32, i32
  }
}

module attributes {stable_mosaic.version = 11 : i64} {
  func.func @_bn_pool_tanh_kernel(%arg0: i32, %arg1: memref<1x64x128xf32, #tpu.memory_space<vmem>>, %arg2: memref<1x128xf32, #tpu.memory_space<vmem>>, %arg3: memref<1x128xf32, #tpu.memory_space<vmem>>, %arg4: memref<64x128xf32, #tpu.memory_space<vmem>>) attributes {dimension_semantics = [#tpu.dimension_semantics<parallel>], iteration_bounds = array<i64: 2>, scalar_prefetch = 0 : i64, scratch_operands = 0 : i64, tpu.core_type = #tpu.core_type<tc>, window_params = [{transform_indices = @transform_0, window_bounds = array<i64: 1, 64, 128>}, {pipeline_mode = #tpu.pipeline_mode<synchronous>, transform_indices = @transform_1, window_bounds = array<i64: 1, 128>}, {pipeline_mode = #tpu.pipeline_mode<synchronous>, transform_indices = @transform_2, window_bounds = array<i64: 1, 128>}, {transform_indices = @transform_3, window_bounds = array<i64: 64, 128>}]} {
    %c0 = arith.constant 0 : index
    %c0_0 = arith.constant 0 : index
    %c0_1 = arith.constant 0 : index
    %0 = vector.load %arg1[%c0, %c0_0, %c0_1] : memref<1x64x128xf32, #tpu.memory_space<vmem>>, vector<1x64x128xf32>
    %c0_2 = arith.constant 0 : index
    %c0_3 = arith.constant 0 : index
    %1 = vector.load %arg2[%c0_2, %c0_3] : memref<1x128xf32, #tpu.memory_space<vmem>>, vector<1x128xf32>
    %2 = vector.shape_cast %1 : vector<1x128xf32> to vector<1x1x128xf32>
    %3 = vector.broadcast %2 : vector<1x1x128xf32> to vector<1x64x128xf32>
    %4 = arith.mulf %0, %3 : vector<1x64x128xf32>
    %c0_4 = arith.constant 0 : index
    %c0_5 = arith.constant 0 : index
    %5 = vector.load %arg3[%c0_4, %c0_5] : memref<1x128xf32, #tpu.memory_space<vmem>>, vector<1x128xf32>
    %6 = vector.shape_cast %5 : vector<1x128xf32> to vector<1x1x128xf32>
    %7 = vector.broadcast %6 : vector<1x1x128xf32> to vector<1x64x128xf32>
    %8 = arith.addf %4, %7 : vector<1x64x128xf32>
    %cst = arith.constant dense<0xFF800000> : vector<64x128xf32>
    %9 = vector.multi_reduction <maximumf>, %8, %cst [0] : vector<1x64x128xf32> to vector<64x128xf32>
    %10 = math.tanh %9 : vector<64x128xf32>
    %c0_6 = arith.constant 0 : index
    %c0_7 = arith.constant 0 : index
    %11 = vector.load %arg4[%c0_6, %c0_7] : memref<64x128xf32, #tpu.memory_space<vmem>>, vector<64x128xf32>
    tpu.vector_store %arg4[%c0_6, %c0_7], %10 {strides = array<i32>} : memref<64x128xf32, #tpu.memory_space<vmem>>, vector<64x128xf32>,
    return
  }
  func.func @transform_0(%arg0: i32) -> (i32, i32, i32) {
    %c0_i32 = arith.constant 0 : i32
    %c0_i32_0 = arith.constant 0 : i32
    %c0_i32_1 = arith.constant 0 : i32
    return %c0_i32, %arg0, %c0_i32_0 : i32, i32, i32
  }
  func.func @transform_1(%arg0: i32) -> (i32, i32) {
    %c0_i32 = arith.constant 0 : i32
    %c0_i32_0 = arith.constant 0 : i32
    %c0_i32_1 = arith.constant 0 : i32
    return %c0_i32, %c0_i32_0 : i32, i32
  }
  func.func @transform_2(%arg0: i32) -> (i32, i32) {
    %c0_i32 = arith.constant 0 : i32
    %c0_i32_0 = arith.constant 0 : i32
    %c0_i32_1 = arith.constant 0 : i32
    return %c0_i32, %c0_i32_0 : i32, i32
  }
  func.func @transform_3(%arg0: i32) -> (i32, i32) {
    %c0_i32 = arith.constant 0 : i32
    %c0_i32_0 = arith.constant 0 : i32
    return %arg0, %c0_i32 : i32, i32
  }
}

module attributes {stable_mosaic.version = 11 : i64} {
  func.func @_conv_bn_stats_kernel(%arg0: i32, %arg1: memref<1x18x16x96xf32, #tpu.memory_space<vmem>>, %arg2: memref<3x96x32xbf16, #tpu.memory_space<vmem>>, %arg3: memref<1x32xf32, #tpu.memory_space<vmem>>, %arg4: memref<1x256x32xf32, #tpu.memory_space<vmem>>, %arg5: memref<1x1x32xf32, #tpu.memory_space<vmem>>, %arg6: memref<1x1x32xf32, #tpu.memory_space<vmem>>) attributes {dimension_semantics = [#tpu.dimension_semantics<parallel>], iteration_bounds = array<i64: 2>, scalar_prefetch = 0 : i64, scratch_operands = 0 : i64, tpu.core_type = #tpu.core_type<tc>, window_params = [{transform_indices = @transform_0, window_bounds = array<i64: 1, 18, 16, 96>}, {pipeline_mode = #tpu.pipeline_mode<synchronous>, transform_indices = @transform_1, window_bounds = array<i64: 3, 96, 32>}, {pipeline_mode = #tpu.pipeline_mode<synchronous>, transform_indices = @transform_2, window_bounds = array<i64: 1, 32>}, {transform_indices = @transform_3, window_bounds = array<i64: 1, 256, 32>}, {transform_indices = @transform_4, window_bounds = array<i64: 1, 1, 32>}, {transform_indices = @transform_5, window_bounds = array<i64: 1, 1, 32>}]} {
    %c0 = arith.constant 0 : index
    %c0_0 = arith.constant 0 : index
    %c0_1 = arith.constant 0 : index
    %c0_2 = arith.constant 0 : index
    %0 = vector.load %arg1[%c0, %c0_0, %c0_1, %c0_2] : memref<1x18x16x96xf32, #tpu.memory_space<vmem>>, vector<1x18x16x96xf32>
    %1 = vector.shape_cast %0 : vector<1x18x16x96xf32> to vector<18x16x96xf32>
    %cst = arith.constant 0.000000e+00 : f32
    %2 = vector.broadcast %cst : f32 to vector<256x32xf32>
    %3 = vector.extract_strided_slice %1 {offsets = [0, 0, 0], sizes = [16, 16, 96], strides = [1, 1, 1]} : vector<18x16x96xf32> to vector<16x16x96xf32>
    %4 = vector.shape_cast %3 : vector<16x16x96xf32> to vector<256x96xf32>
    %5 = arith.truncf %4 : vector<256x96xf32> to vector<256x96xbf16>
    %c0_3 = arith.constant 0 : index
    %c0_4 = arith.constant 0 : index
    %c0_5 = arith.constant 0 : index
    %6 = vector.load %arg2[%c0_3, %c0_4, %c0_5] : memref<3x96x32xbf16, #tpu.memory_space<vmem>>, vector<1x96x32xbf16>
    %7 = vector.shape_cast %6 : vector<1x96x32xbf16> to vector<96x32xbf16>
    %cst_6 = arith.constant dense<0.000000e+00> : vector<256x32xf32>
    %8 = tpu.matmul %5, %7, %cst_6 {dimension_numbers = #tpu.dot_dimension_numbers<[1], [0], [0], [1], [0, 0, 1, 1], [], []>} : vector<256x96xbf16>, vector<96x32xbf16>, vector<256x32xf32> -> vector<256x32xf32>
    %9 = arith.addf %2, %8 : vector<256x32xf32>
    %10 = vector.extract_strided_slice %1 {offsets = [1, 0, 0], sizes = [16, 16, 96], strides = [1, 1, 1]} : vector<18x16x96xf32> to vector<16x16x96xf32>
    %11 = vector.shape_cast %10 : vector<16x16x96xf32> to vector<256x96xf32>
    %12 = arith.truncf %11 : vector<256x96xf32> to vector<256x96xbf16>
    %c1 = arith.constant 1 : index
    %c0_7 = arith.constant 0 : index
    %c0_8 = arith.constant 0 : index
    %13 = vector.load %arg2[%c1, %c0_7, %c0_8] : memref<3x96x32xbf16, #tpu.memory_space<vmem>>, vector<1x96x32xbf16>
    %14 = vector.shape_cast %13 : vector<1x96x32xbf16> to vector<96x32xbf16>
    %cst_9 = arith.constant dense<0.000000e+00> : vector<256x32xf32>
    %15 = tpu.matmul %12, %14, %cst_9 {dimension_numbers = #tpu.dot_dimension_numbers<[1], [0], [0], [1], [0, 0, 1, 1], [], []>} : vector<256x96xbf16>, vector<96x32xbf16>, vector<256x32xf32> -> vector<256x32xf32>
    %16 = arith.addf %9, %15 : vector<256x32xf32>
    %17 = vector.extract_strided_slice %1 {offsets = [2, 0, 0], sizes = [16, 16, 96], strides = [1, 1, 1]} : vector<18x16x96xf32> to vector<16x16x96xf32>
    %18 = vector.shape_cast %17 : vector<16x16x96xf32> to vector<256x96xf32>
    %19 = arith.truncf %18 : vector<256x96xf32> to vector<256x96xbf16>
    %c2 = arith.constant 2 : index
    %c0_10 = arith.constant 0 : index
    %c0_11 = arith.constant 0 : index
    %20 = vector.load %arg2[%c2, %c0_10, %c0_11] : memref<3x96x32xbf16, #tpu.memory_space<vmem>>, vector<1x96x32xbf16>
    %21 = vector.shape_cast %20 : vector<1x96x32xbf16> to vector<96x32xbf16>
    %cst_12 = arith.constant dense<0.000000e+00> : vector<256x32xf32>
    %22 = tpu.matmul %19, %21, %cst_12 {dimension_numbers = #tpu.dot_dimension_numbers<[1], [0], [0], [1], [0, 0, 1, 1], [], []>} : vector<256x96xbf16>, vector<96x32xbf16>, vector<256x32xf32> -> vector<256x32xf32>
    %23 = arith.addf %16, %22 : vector<256x32xf32>
    %c0_13 = arith.constant 0 : index
    %c0_14 = arith.constant 0 : index
    %24 = vector.load %arg3[%c0_13, %c0_14] : memref<1x32xf32, #tpu.memory_space<vmem>>, vector<1x32xf32>
    %25 = vector.broadcast %24 : vector<1x32xf32> to vector<256x32xf32>
    %26 = arith.addf %23, %25 : vector<256x32xf32>
    %c0_15 = arith.constant 0 : index
    %c0_16 = arith.constant 0 : index
    %c0_17 = arith.constant 0 : index
    %27 = vector.load %arg4[%c0_15, %c0_16, %c0_17] : memref<1x256x32xf32, #tpu.memory_space<vmem>>, vector<1x256x32xf32>
    %28 = vector.shape_cast %27 : vector<1x256x32xf32> to vector<256x32xf32>
    %29 = vector.shape_cast %26 : vector<256x32xf32> to vector<1x256x32xf32>
    tpu.vector_store %arg4[%c0_15, %c0_16, %c0_17], %29 {strides = array<i32>} : memref<1x256x32xf32, #tpu.memory_space<vmem>>, vector<1x256x32xf32>,
    %cst_18 = arith.constant dense<0.000000e+00> : vector<32xf32>
    %30 = vector.multi_reduction <add>, %26, %cst_18 [0] : vector<256x32xf32> to vector<32xf32>
    %31 = vector.shape_cast %30 : vector<32xf32> to vector<1x32xf32>
    %c0_19 = arith.constant 0 : index
    %c0_20 = arith.constant 0 : index
    %c0_21 = arith.constant 0 : index
    %32 = vector.load %arg5[%c0_19, %c0_20, %c0_21] : memref<1x1x32xf32, #tpu.memory_space<vmem>>, vector<1x1x32xf32>
    %33 = vector.shape_cast %32 : vector<1x1x32xf32> to vector<1x32xf32>
    %34 = vector.shape_cast %31 : vector<1x32xf32> to vector<1x1x32xf32>
    tpu.vector_store %arg5[%c0_19, %c0_20, %c0_21], %34 {strides = array<i32>} : memref<1x1x32xf32, #tpu.memory_space<vmem>>, vector<1x1x32xf32>,
    %35 = arith.mulf %26, %26 : vector<256x32xf32>
    %cst_22 = arith.constant dense<0.000000e+00> : vector<32xf32>
    %36 = vector.multi_reduction <add>, %35, %cst_22 [0] : vector<256x32xf32> to vector<32xf32>
    %37 = vector.shape_cast %36 : vector<32xf32> to vector<1x32xf32>
    %c0_23 = arith.constant 0 : index
    %c0_24 = arith.constant 0 : index
    %c0_25 = arith.constant 0 : index
    %38 = vector.load %arg6[%c0_23, %c0_24, %c0_25] : memref<1x1x32xf32, #tpu.memory_space<vmem>>, vector<1x1x32xf32>
    %39 = vector.shape_cast %38 : vector<1x1x32xf32> to vector<1x32xf32>
    %40 = vector.shape_cast %37 : vector<1x32xf32> to vector<1x1x32xf32>
    tpu.vector_store %arg6[%c0_23, %c0_24, %c0_25], %40 {strides = array<i32>} : memref<1x1x32xf32, #tpu.memory_space<vmem>>, vector<1x1x32xf32>,
    return
  }
  func.func @transform_0(%arg0: i32) -> (i32, i32, i32, i32) {
    %c0_i32 = arith.constant 0 : i32
    %c0_i32_0 = arith.constant 0 : i32
    %c0_i32_1 = arith.constant 0 : i32
    %c0_i32_2 = arith.constant 0 : i32
    return %arg0, %c0_i32, %c0_i32_0, %c0_i32_1 : i32, i32, i32, i32
  }
  func.func @transform_1(%arg0: i32) -> (i32, i32, i32) {
    %c0_i32 = arith.constant 0 : i32
    %c0_i32_0 = arith.constant 0 : i32
    %c0_i32_1 = arith.constant 0 : i32
    %c0_i32_2 = arith.constant 0 : i32
    return %c0_i32, %c0_i32_0, %c0_i32_1 : i32, i32, i32
  }
  func.func @transform_2(%arg0: i32) -> (i32, i32) {
    %c0_i32 = arith.constant 0 : i32
    %c0_i32_0 = arith.constant 0 : i32
    %c0_i32_1 = arith.constant 0 : i32
    return %c0_i32, %c0_i32_0 : i32, i32
  }
  func.func @transform_3(%arg0: i32) -> (i32, i32, i32) {
    %c0_i32 = arith.constant 0 : i32
    %c0_i32_0 = arith.constant 0 : i32
    %c0_i32_1 = arith.constant 0 : i32
    return %arg0, %c0_i32, %c0_i32_0 : i32, i32, i32
  }
  func.func @transform_4(%arg0: i32) -> (i32, i32, i32) {
    %c0_i32 = arith.constant 0 : i32
    %c0_i32_0 = arith.constant 0 : i32
    %c0_i32_1 = arith.constant 0 : i32
    return %arg0, %c0_i32, %c0_i32_0 : i32, i32, i32
  }
  func.func @transform_5(%arg0: i32) -> (i32, i32, i32) {
    %c0_i32 = arith.constant 0 : i32
    %c0_i32_0 = arith.constant 0 : i32
    %c0_i32_1 = arith.constant 0 : i32
    return %arg0, %c0_i32, %c0_i32_0 : i32, i32, i32
  }
}

module attributes {stable_mosaic.version = 11 : i64} {
  func.func @_bn_pool_tanh_kernel(%arg0: i32, %arg1: memref<4x16x128xf32, #tpu.memory_space<vmem>>, %arg2: memref<1x128xf32, #tpu.memory_space<vmem>>, %arg3: memref<1x128xf32, #tpu.memory_space<vmem>>, %arg4: memref<16x128xf32, #tpu.memory_space<vmem>>) attributes {dimension_semantics = [#tpu.dimension_semantics<parallel>], iteration_bounds = array<i64: 2>, scalar_prefetch = 0 : i64, scratch_operands = 0 : i64, tpu.core_type = #tpu.core_type<tc>, window_params = [{transform_indices = @transform_0, window_bounds = array<i64: 4, 16, 128>}, {pipeline_mode = #tpu.pipeline_mode<synchronous>, transform_indices = @transform_1, window_bounds = array<i64: 1, 128>}, {pipeline_mode = #tpu.pipeline_mode<synchronous>, transform_indices = @transform_2, window_bounds = array<i64: 1, 128>}, {transform_indices = @transform_3, window_bounds = array<i64: 16, 128>}]} {
    %c0 = arith.constant 0 : index
    %c0_0 = arith.constant 0 : index
    %c0_1 = arith.constant 0 : index
    %0 = vector.load %arg1[%c0, %c0_0, %c0_1] : memref<4x16x128xf32, #tpu.memory_space<vmem>>, vector<4x16x128xf32>
    %c0_2 = arith.constant 0 : index
    %c0_3 = arith.constant 0 : index
    %1 = vector.load %arg2[%c0_2, %c0_3] : memref<1x128xf32, #tpu.memory_space<vmem>>, vector<1x128xf32>
    %2 = vector.shape_cast %1 : vector<1x128xf32> to vector<1x1x128xf32>
    %3 = vector.broadcast %2 : vector<1x1x128xf32> to vector<4x16x128xf32>
    %4 = arith.mulf %0, %3 : vector<4x16x128xf32>
    %c0_4 = arith.constant 0 : index
    %c0_5 = arith.constant 0 : index
    %5 = vector.load %arg3[%c0_4, %c0_5] : memref<1x128xf32, #tpu.memory_space<vmem>>, vector<1x128xf32>
    %6 = vector.shape_cast %5 : vector<1x128xf32> to vector<1x1x128xf32>
    %7 = vector.broadcast %6 : vector<1x1x128xf32> to vector<4x16x128xf32>
    %8 = arith.addf %4, %7 : vector<4x16x128xf32>
    %cst = arith.constant dense<0xFF800000> : vector<16x128xf32>
    %9 = vector.multi_reduction <maximumf>, %8, %cst [0] : vector<4x16x128xf32> to vector<16x128xf32>
    %10 = math.tanh %9 : vector<16x128xf32>
    %c0_6 = arith.constant 0 : index
    %c0_7 = arith.constant 0 : index
    %11 = vector.load %arg4[%c0_6, %c0_7] : memref<16x128xf32, #tpu.memory_space<vmem>>, vector<16x128xf32>
    tpu.vector_store %arg4[%c0_6, %c0_7], %10 {strides = array<i32>} : memref<16x128xf32, #tpu.memory_space<vmem>>, vector<16x128xf32>,
    return
  }
  func.func @transform_0(%arg0: i32) -> (i32, i32, i32) {
    %c0_i32 = arith.constant 0 : i32
    %c0_i32_0 = arith.constant 0 : i32
    %c0_i32_1 = arith.constant 0 : i32
    return %c0_i32, %arg0, %c0_i32_0 : i32, i32, i32
  }
  func.func @transform_1(%arg0: i32) -> (i32, i32) {
    %c0_i32 = arith.constant 0 : i32
    %c0_i32_0 = arith.constant 0 : i32
    %c0_i32_1 = arith.constant 0 : i32
    return %c0_i32, %c0_i32_0 : i32, i32
  }
  func.func @transform_2(%arg0: i32) -> (i32, i32) {
    %c0_i32 = arith.constant 0 : i32
    %c0_i32_0 = arith.constant 0 : i32
    %c0_i32_1 = arith.constant 0 : i32
    return %c0_i32, %c0_i32_0 : i32, i32
  }
  func.func @transform_3(%arg0: i32) -> (i32, i32) {
    %c0_i32 = arith.constant 0 : i32
    %c0_i32_0 = arith.constant 0 : i32
    return %arg0, %c0_i32 : i32, i32
  }
}

module attributes {stable_mosaic.version = 11 : i64} {
  func.func @_conv_bn_stats_kernel(%arg0: i32, %arg1: memref<1x10x8x96xf32, #tpu.memory_space<vmem>>, %arg2: memref<3x96x64xbf16, #tpu.memory_space<vmem>>, %arg3: memref<1x64xf32, #tpu.memory_space<vmem>>, %arg4: memref<1x64x64xf32, #tpu.memory_space<vmem>>, %arg5: memref<1x1x64xf32, #tpu.memory_space<vmem>>, %arg6: memref<1x1x64xf32, #tpu.memory_space<vmem>>) attributes {dimension_semantics = [#tpu.dimension_semantics<parallel>], iteration_bounds = array<i64: 2>, scalar_prefetch = 0 : i64, scratch_operands = 0 : i64, tpu.core_type = #tpu.core_type<tc>, window_params = [{transform_indices = @transform_0, window_bounds = array<i64: 1, 10, 8, 96>}, {pipeline_mode = #tpu.pipeline_mode<synchronous>, transform_indices = @transform_1, window_bounds = array<i64: 3, 96, 64>}, {pipeline_mode = #tpu.pipeline_mode<synchronous>, transform_indices = @transform_2, window_bounds = array<i64: 1, 64>}, {transform_indices = @transform_3, window_bounds = array<i64: 1, 64, 64>}, {transform_indices = @transform_4, window_bounds = array<i64: 1, 1, 64>}, {transform_indices = @transform_5, window_bounds = array<i64: 1, 1, 64>}]} {
    %c0 = arith.constant 0 : index
    %c0_0 = arith.constant 0 : index
    %c0_1 = arith.constant 0 : index
    %c0_2 = arith.constant 0 : index
    %0 = vector.load %arg1[%c0, %c0_0, %c0_1, %c0_2] : memref<1x10x8x96xf32, #tpu.memory_space<vmem>>, vector<1x10x8x96xf32>
    %1 = vector.shape_cast %0 : vector<1x10x8x96xf32> to vector<10x8x96xf32>
    %cst = arith.constant 0.000000e+00 : f32
    %2 = vector.broadcast %cst : f32 to vector<64x64xf32>
    %3 = vector.extract_strided_slice %1 {offsets = [0, 0, 0], sizes = [8, 8, 96], strides = [1, 1, 1]} : vector<10x8x96xf32> to vector<8x8x96xf32>
    %4 = vector.shape_cast %3 : vector<8x8x96xf32> to vector<64x96xf32>
    %5 = arith.truncf %4 : vector<64x96xf32> to vector<64x96xbf16>
    %c0_3 = arith.constant 0 : index
    %c0_4 = arith.constant 0 : index
    %c0_5 = arith.constant 0 : index
    %6 = vector.load %arg2[%c0_3, %c0_4, %c0_5] : memref<3x96x64xbf16, #tpu.memory_space<vmem>>, vector<1x96x64xbf16>
    %7 = vector.shape_cast %6 : vector<1x96x64xbf16> to vector<96x64xbf16>
    %cst_6 = arith.constant dense<0.000000e+00> : vector<64x64xf32>
    %8 = tpu.matmul %5, %7, %cst_6 {dimension_numbers = #tpu.dot_dimension_numbers<[1], [0], [0], [1], [0, 0, 1, 1], [], []>} : vector<64x96xbf16>, vector<96x64xbf16>, vector<64x64xf32> -> vector<64x64xf32>
    %9 = arith.addf %2, %8 : vector<64x64xf32>
    %10 = vector.extract_strided_slice %1 {offsets = [1, 0, 0], sizes = [8, 8, 96], strides = [1, 1, 1]} : vector<10x8x96xf32> to vector<8x8x96xf32>
    %11 = vector.shape_cast %10 : vector<8x8x96xf32> to vector<64x96xf32>
    %12 = arith.truncf %11 : vector<64x96xf32> to vector<64x96xbf16>
    %c1 = arith.constant 1 : index
    %c0_7 = arith.constant 0 : index
    %c0_8 = arith.constant 0 : index
    %13 = vector.load %arg2[%c1, %c0_7, %c0_8] : memref<3x96x64xbf16, #tpu.memory_space<vmem>>, vector<1x96x64xbf16>
    %14 = vector.shape_cast %13 : vector<1x96x64xbf16> to vector<96x64xbf16>
    %cst_9 = arith.constant dense<0.000000e+00> : vector<64x64xf32>
    %15 = tpu.matmul %12, %14, %cst_9 {dimension_numbers = #tpu.dot_dimension_numbers<[1], [0], [0], [1], [0, 0, 1, 1], [], []>} : vector<64x96xbf16>, vector<96x64xbf16>, vector<64x64xf32> -> vector<64x64xf32>
    %16 = arith.addf %9, %15 : vector<64x64xf32>
    %17 = vector.extract_strided_slice %1 {offsets = [2, 0, 0], sizes = [8, 8, 96], strides = [1, 1, 1]} : vector<10x8x96xf32> to vector<8x8x96xf32>
    %18 = vector.shape_cast %17 : vector<8x8x96xf32> to vector<64x96xf32>
    %19 = arith.truncf %18 : vector<64x96xf32> to vector<64x96xbf16>
    %c2 = arith.constant 2 : index
    %c0_10 = arith.constant 0 : index
    %c0_11 = arith.constant 0 : index
    %20 = vector.load %arg2[%c2, %c0_10, %c0_11] : memref<3x96x64xbf16, #tpu.memory_space<vmem>>, vector<1x96x64xbf16>
    %21 = vector.shape_cast %20 : vector<1x96x64xbf16> to vector<96x64xbf16>
    %cst_12 = arith.constant dense<0.000000e+00> : vector<64x64xf32>
    %22 = tpu.matmul %19, %21, %cst_12 {dimension_numbers = #tpu.dot_dimension_numbers<[1], [0], [0], [1], [0, 0, 1, 1], [], []>} : vector<64x96xbf16>, vector<96x64xbf16>, vector<64x64xf32> -> vector<64x64xf32>
    %23 = arith.addf %16, %22 : vector<64x64xf32>
    %c0_13 = arith.constant 0 : index
    %c0_14 = arith.constant 0 : index
    %24 = vector.load %arg3[%c0_13, %c0_14] : memref<1x64xf32, #tpu.memory_space<vmem>>, vector<1x64xf32>
    %25 = vector.broadcast %24 : vector<1x64xf32> to vector<64x64xf32>
    %26 = arith.addf %23, %25 : vector<64x64xf32>
    %c0_15 = arith.constant 0 : index
    %c0_16 = arith.constant 0 : index
    %c0_17 = arith.constant 0 : index
    %27 = vector.load %arg4[%c0_15, %c0_16, %c0_17] : memref<1x64x64xf32, #tpu.memory_space<vmem>>, vector<1x64x64xf32>
    %28 = vector.shape_cast %27 : vector<1x64x64xf32> to vector<64x64xf32>
    %29 = vector.shape_cast %26 : vector<64x64xf32> to vector<1x64x64xf32>
    tpu.vector_store %arg4[%c0_15, %c0_16, %c0_17], %29 {strides = array<i32>} : memref<1x64x64xf32, #tpu.memory_space<vmem>>, vector<1x64x64xf32>,
    %cst_18 = arith.constant dense<0.000000e+00> : vector<64xf32>
    %30 = vector.multi_reduction <add>, %26, %cst_18 [0] : vector<64x64xf32> to vector<64xf32>
    %31 = vector.shape_cast %30 : vector<64xf32> to vector<1x64xf32>
    %c0_19 = arith.constant 0 : index
    %c0_20 = arith.constant 0 : index
    %c0_21 = arith.constant 0 : index
    %32 = vector.load %arg5[%c0_19, %c0_20, %c0_21] : memref<1x1x64xf32, #tpu.memory_space<vmem>>, vector<1x1x64xf32>
    %33 = vector.shape_cast %32 : vector<1x1x64xf32> to vector<1x64xf32>
    %34 = vector.shape_cast %31 : vector<1x64xf32> to vector<1x1x64xf32>
    tpu.vector_store %arg5[%c0_19, %c0_20, %c0_21], %34 {strides = array<i32>} : memref<1x1x64xf32, #tpu.memory_space<vmem>>, vector<1x1x64xf32>,
    %35 = arith.mulf %26, %26 : vector<64x64xf32>
    %cst_22 = arith.constant dense<0.000000e+00> : vector<64xf32>
    %36 = vector.multi_reduction <add>, %35, %cst_22 [0] : vector<64x64xf32> to vector<64xf32>
    %37 = vector.shape_cast %36 : vector<64xf32> to vector<1x64xf32>
    %c0_23 = arith.constant 0 : index
    %c0_24 = arith.constant 0 : index
    %c0_25 = arith.constant 0 : index
    %38 = vector.load %arg6[%c0_23, %c0_24, %c0_25] : memref<1x1x64xf32, #tpu.memory_space<vmem>>, vector<1x1x64xf32>
    %39 = vector.shape_cast %38 : vector<1x1x64xf32> to vector<1x64xf32>
    %40 = vector.shape_cast %37 : vector<1x64xf32> to vector<1x1x64xf32>
    tpu.vector_store %arg6[%c0_23, %c0_24, %c0_25], %40 {strides = array<i32>} : memref<1x1x64xf32, #tpu.memory_space<vmem>>, vector<1x1x64xf32>,
    return
  }
  func.func @transform_0(%arg0: i32) -> (i32, i32, i32, i32) {
    %c0_i32 = arith.constant 0 : i32
    %c0_i32_0 = arith.constant 0 : i32
    %c0_i32_1 = arith.constant 0 : i32
    %c0_i32_2 = arith.constant 0 : i32
    return %arg0, %c0_i32, %c0_i32_0, %c0_i32_1 : i32, i32, i32, i32
  }
  func.func @transform_1(%arg0: i32) -> (i32, i32, i32) {
    %c0_i32 = arith.constant 0 : i32
    %c0_i32_0 = arith.constant 0 : i32
    %c0_i32_1 = arith.constant 0 : i32
    %c0_i32_2 = arith.constant 0 : i32
    return %c0_i32, %c0_i32_0, %c0_i32_1 : i32, i32, i32
  }
  func.func @transform_2(%arg0: i32) -> (i32, i32) {
    %c0_i32 = arith.constant 0 : i32
    %c0_i32_0 = arith.constant 0 : i32
    %c0_i32_1 = arith.constant 0 : i32
    return %c0_i32, %c0_i32_0 : i32, i32
  }
  func.func @transform_3(%arg0: i32) -> (i32, i32, i32) {
    %c0_i32 = arith.constant 0 : i32
    %c0_i32_0 = arith.constant 0 : i32
    %c0_i32_1 = arith.constant 0 : i32
    return %arg0, %c0_i32, %c0_i32_0 : i32, i32, i32
  }
  func.func @transform_4(%arg0: i32) -> (i32, i32, i32) {
    %c0_i32 = arith.constant 0 : i32
    %c0_i32_0 = arith.constant 0 : i32
    %c0_i32_1 = arith.constant 0 : i32
    return %arg0, %c0_i32, %c0_i32_0 : i32, i32, i32
  }
  func.func @transform_5(%arg0: i32) -> (i32, i32, i32) {
    %c0_i32 = arith.constant 0 : i32
    %c0_i32_0 = arith.constant 0 : i32
    %c0_i32_1 = arith.constant 0 : i32
    return %arg0, %c0_i32, %c0_i32_0 : i32, i32, i32
  }
}

module attributes {stable_mosaic.version = 11 : i64} {
  func.func @_bn_pool_tanh_kernel(%arg0: i32, %arg1: memref<4x8x128xf32, #tpu.memory_space<vmem>>, %arg2: memref<1x128xf32, #tpu.memory_space<vmem>>, %arg3: memref<1x128xf32, #tpu.memory_space<vmem>>, %arg4: memref<8x128xf32, #tpu.memory_space<vmem>>) attributes {dimension_semantics = [#tpu.dimension_semantics<parallel>], iteration_bounds = array<i64: 2>, scalar_prefetch = 0 : i64, scratch_operands = 0 : i64, tpu.core_type = #tpu.core_type<tc>, window_params = [{transform_indices = @transform_0, window_bounds = array<i64: 4, 8, 128>}, {pipeline_mode = #tpu.pipeline_mode<synchronous>, transform_indices = @transform_1, window_bounds = array<i64: 1, 128>}, {pipeline_mode = #tpu.pipeline_mode<synchronous>, transform_indices = @transform_2, window_bounds = array<i64: 1, 128>}, {transform_indices = @transform_3, window_bounds = array<i64: 8, 128>}]} {
    %c0 = arith.constant 0 : index
    %c0_0 = arith.constant 0 : index
    %c0_1 = arith.constant 0 : index
    %0 = vector.load %arg1[%c0, %c0_0, %c0_1] : memref<4x8x128xf32, #tpu.memory_space<vmem>>, vector<4x8x128xf32>
    %c0_2 = arith.constant 0 : index
    %c0_3 = arith.constant 0 : index
    %1 = vector.load %arg2[%c0_2, %c0_3] : memref<1x128xf32, #tpu.memory_space<vmem>>, vector<1x128xf32>
    %2 = vector.shape_cast %1 : vector<1x128xf32> to vector<1x1x128xf32>
    %3 = vector.broadcast %2 : vector<1x1x128xf32> to vector<4x8x128xf32>
    %4 = arith.mulf %0, %3 : vector<4x8x128xf32>
    %c0_4 = arith.constant 0 : index
    %c0_5 = arith.constant 0 : index
    %5 = vector.load %arg3[%c0_4, %c0_5] : memref<1x128xf32, #tpu.memory_space<vmem>>, vector<1x128xf32>
    %6 = vector.shape_cast %5 : vector<1x128xf32> to vector<1x1x128xf32>
    %7 = vector.broadcast %6 : vector<1x1x128xf32> to vector<4x8x128xf32>
    %8 = arith.addf %4, %7 : vector<4x8x128xf32>
    %cst = arith.constant dense<0xFF800000> : vector<8x128xf32>
    %9 = vector.multi_reduction <maximumf>, %8, %cst [0] : vector<4x8x128xf32> to vector<8x128xf32>
    %10 = math.tanh %9 : vector<8x128xf32>
    %c0_6 = arith.constant 0 : index
    %c0_7 = arith.constant 0 : index
    %11 = vector.load %arg4[%c0_6, %c0_7] : memref<8x128xf32, #tpu.memory_space<vmem>>, vector<8x128xf32>
    tpu.vector_store %arg4[%c0_6, %c0_7], %10 {strides = array<i32>} : memref<8x128xf32, #tpu.memory_space<vmem>>, vector<8x128xf32>,
    return
  }
  func.func @transform_0(%arg0: i32) -> (i32, i32, i32) {
    %c0_i32 = arith.constant 0 : i32
    %c0_i32_0 = arith.constant 0 : i32
    %c0_i32_1 = arith.constant 0 : i32
    return %c0_i32, %arg0, %c0_i32_0 : i32, i32, i32
  }
  func.func @transform_1(%arg0: i32) -> (i32, i32) {
    %c0_i32 = arith.constant 0 : i32
    %c0_i32_0 = arith.constant 0 : i32
    %c0_i32_1 = arith.constant 0 : i32
    return %c0_i32, %c0_i32_0 : i32, i32
  }
  func.func @transform_2(%arg0: i32) -> (i32, i32) {
    %c0_i32 = arith.constant 0 : i32
    %c0_i32_0 = arith.constant 0 : i32
    %c0_i32_1 = arith.constant 0 : i32
    return %c0_i32, %c0_i32_0 : i32, i32
  }
  func.func @transform_3(%arg0: i32) -> (i32, i32) {
    %c0_i32 = arith.constant 0 : i32
    %c0_i32_0 = arith.constant 0 : i32
    return %arg0, %c0_i32 : i32, i32
  }
}

module attributes {stable_mosaic.version = 11 : i64} {
  func.func @_matmul_bias_kernel(%arg0: i32, %arg1: i32, %arg2: memref<2x512xbf16, #tpu.memory_space<vmem>>, %arg3: memref<512x128xbf16, #tpu.memory_space<vmem>>, %arg4: memref<1x128xf32, #tpu.memory_space<vmem>>, %arg5: memref<2x128xf32, #tpu.memory_space<vmem>>, %arg6: memref<2x128xf32, #tpu.memory_space<vmem>>) attributes {dimension_semantics = [#tpu.dimension_semantics<parallel>, #tpu.dimension_semantics<arbitrary>], iteration_bounds = array<i64: 1, 2>, scalar_prefetch = 0 : i64, scratch_operands = 1 : i64, tpu.core_type = #tpu.core_type<tc>, window_params = [{transform_indices = @transform_0, window_bounds = array<i64: 2, 512>}, {transform_indices = @transform_1, window_bounds = array<i64: 512, 128>}, {pipeline_mode = #tpu.pipeline_mode<synchronous>, transform_indices = @transform_2, window_bounds = array<i64: 1, 128>}, {transform_indices = @transform_3, window_bounds = array<i64: 2, 128>}]} {
    %c0_i32 = arith.constant 0 : i32
    %0 = arith.cmpi eq, %arg1, %c0_i32 : i32
    %1 = arith.extui %0 : i1 to i32
    %c0_i32_0 = arith.constant 0 : i32
    %2 = arith.cmpi ne, %1, %c0_i32_0 : i32
    scf.if %2 {
      %cst_9 = arith.constant 0.000000e+00 : f32
      %12 = vector.broadcast %cst_9 : f32 to vector<2x128xf32>
      %c0_10 = arith.constant 0 : index
      %c0_11 = arith.constant 0 : index
      %13 = vector.load %arg6[%c0_10, %c0_11] : memref<2x128xf32, #tpu.memory_space<vmem>>, vector<2x128xf32>
      tpu.vector_store %arg6[%c0_10, %c0_11], %12 {strides = array<i32>} : memref<2x128xf32, #tpu.memory_space<vmem>>, vector<2x128xf32>,
    } else {
    }
    %c0 = arith.constant 0 : index
    %c0_1 = arith.constant 0 : index
    %3 = vector.load %arg6[%c0, %c0_1] : memref<2x128xf32, #tpu.memory_space<vmem>>, vector<2x128xf32>
    %c0_2 = arith.constant 0 : index
    %c0_3 = arith.constant 0 : index
    %4 = vector.load %arg2[%c0_2, %c0_3] : memref<2x512xbf16, #tpu.memory_space<vmem>>, vector<2x512xbf16>
    %c0_4 = arith.constant 0 : index
    %c0_5 = arith.constant 0 : index
    %5 = vector.load %arg3[%c0_4, %c0_5] : memref<512x128xbf16, #tpu.memory_space<vmem>>, vector<512x128xbf16>
    %cst = arith.constant dense<0.000000e+00> : vector<2x128xf32>
    %6 = tpu.matmul %4, %5, %cst {dimension_numbers = #tpu.dot_dimension_numbers<[1], [0], [0], [1], [0, 0, 1, 1], [], []>} : vector<2x512xbf16>, vector<512x128xbf16>, vector<2x128xf32> -> vector<2x128xf32>
    %7 = arith.addf %3, %6 : vector<2x128xf32>
    %c0_6 = arith.constant 0 : index
    %c0_7 = arith.constant 0 : index
    %8 = vector.load %arg6[%c0_6, %c0_7] : memref<2x128xf32, #tpu.memory_space<vmem>>, vector<2x128xf32>
    tpu.vector_store %arg6[%c0_6, %c0_7], %7 {strides = array<i32>} : memref<2x128xf32, #tpu.memory_space<vmem>>, vector<2x128xf32>,
    %c1_i32 = arith.constant 1 : i32
    %9 = arith.cmpi eq, %arg1, %c1_i32 : i32
    %10 = arith.extui %9 : i1 to i32
    %c0_i32_8 = arith.constant 0 : i32
    %11 = arith.cmpi ne, %10, %c0_i32_8 : i32
    scf.if %11 {
      %c0_9 = arith.constant 0 : index
      %c0_10 = arith.constant 0 : index
      %12 = vector.load %arg6[%c0_9, %c0_10] : memref<2x128xf32, #tpu.memory_space<vmem>>, vector<2x128xf32>
      %c0_11 = arith.constant 0 : index
      %c0_12 = arith.constant 0 : index
      %13 = vector.load %arg4[%c0_11, %c0_12] : memref<1x128xf32, #tpu.memory_space<vmem>>, vector<1x128xf32>
      %14 = vector.broadcast %13 : vector<1x128xf32> to vector<2x128xf32>
      %15 = arith.addf %12, %14 : vector<2x128xf32>
      %c0_13 = arith.constant 0 : index
      %c0_14 = arith.constant 0 : index
      %16 = vector.load %arg5[%c0_13, %c0_14] : memref<2x128xf32, #tpu.memory_space<vmem>>, vector<2x128xf32>
      tpu.vector_store %arg5[%c0_13, %c0_14], %15 {strides = array<i32>} : memref<2x128xf32, #tpu.memory_space<vmem>>, vector<2x128xf32>,
    } else {
    }
    return
  }
  func.func @transform_0(%arg0: i32, %arg1: i32) -> (i32, i32) {
    %c0_i32 = arith.constant 0 : i32
    return %arg0, %arg1 : i32, i32
  }
  func.func @transform_1(%arg0: i32, %arg1: i32) -> (i32, i32) {
    %c0_i32 = arith.constant 0 : i32
    %c0_i32_0 = arith.constant 0 : i32
    return %arg1, %c0_i32 : i32, i32
  }
  func.func @transform_2(%arg0: i32, %arg1: i32) -> (i32, i32) {
    %c0_i32 = arith.constant 0 : i32
    %c0_i32_0 = arith.constant 0 : i32
    %c0_i32_1 = arith.constant 0 : i32
    return %c0_i32, %c0_i32_0 : i32, i32
  }
  func.func @transform_3(%arg0: i32, %arg1: i32) -> (i32, i32) {
    %c0_i32 = arith.constant 0 : i32
    %c0_i32_0 = arith.constant 0 : i32
    return %arg0, %c0_i32 : i32, i32
  }
}

module attributes {stable_mosaic.version = 11 : i64} {
  func.func @_matmul_bias_kernel(%arg0: i32, %arg1: i32, %arg2: memref<2x128xbf16, #tpu.memory_space<vmem>>, %arg3: memref<128x10xbf16, #tpu.memory_space<vmem>>, %arg4: memref<1x10xf32, #tpu.memory_space<vmem>>, %arg5: memref<2x10xf32, #tpu.memory_space<vmem>>, %arg6: memref<2x10xf32, #tpu.memory_space<vmem>>) attributes {dimension_semantics = [#tpu.dimension_semantics<parallel>, #tpu.dimension_semantics<arbitrary>], iteration_bounds = array<i64: 1, 1>, scalar_prefetch = 0 : i64, scratch_operands = 1 : i64, tpu.core_type = #tpu.core_type<tc>, window_params = [{transform_indices = @transform_0, window_bounds = array<i64: 2, 128>}, {transform_indices = @transform_1, window_bounds = array<i64: 128, 10>}, {pipeline_mode = #tpu.pipeline_mode<synchronous>, transform_indices = @transform_2, window_bounds = array<i64: 1, 10>}, {transform_indices = @transform_3, window_bounds = array<i64: 2, 10>}]} {
    %c0_i32 = arith.constant 0 : i32
    %0 = arith.cmpi eq, %arg1, %c0_i32 : i32
    %1 = arith.extui %0 : i1 to i32
    %c0_i32_0 = arith.constant 0 : i32
    %2 = arith.cmpi ne, %1, %c0_i32_0 : i32
    scf.if %2 {
      %cst_10 = arith.constant 0.000000e+00 : f32
      %12 = vector.broadcast %cst_10 : f32 to vector<2x10xf32>
      %c0_11 = arith.constant 0 : index
      %c0_12 = arith.constant 0 : index
      %13 = vector.load %arg6[%c0_11, %c0_12] : memref<2x10xf32, #tpu.memory_space<vmem>>, vector<2x10xf32>
      tpu.vector_store %arg6[%c0_11, %c0_12], %12 {strides = array<i32>} : memref<2x10xf32, #tpu.memory_space<vmem>>, vector<2x10xf32>,
    } else {
    }
    %c0 = arith.constant 0 : index
    %c0_1 = arith.constant 0 : index
    %3 = vector.load %arg6[%c0, %c0_1] : memref<2x10xf32, #tpu.memory_space<vmem>>, vector<2x10xf32>
    %c0_2 = arith.constant 0 : index
    %c0_3 = arith.constant 0 : index
    %4 = vector.load %arg2[%c0_2, %c0_3] : memref<2x128xbf16, #tpu.memory_space<vmem>>, vector<2x128xbf16>
    %c0_4 = arith.constant 0 : index
    %c0_5 = arith.constant 0 : index
    %5 = vector.load %arg3[%c0_4, %c0_5] : memref<128x10xbf16, #tpu.memory_space<vmem>>, vector<128x10xbf16>
    %cst = arith.constant dense<0.000000e+00> : vector<2x10xf32>
    %6 = tpu.matmul %4, %5, %cst {dimension_numbers = #tpu.dot_dimension_numbers<[1], [0], [0], [1], [0, 0, 1, 1], [], []>} : vector<2x128xbf16>, vector<128x10xbf16>, vector<2x10xf32> -> vector<2x10xf32>
    %7 = arith.addf %3, %6 : vector<2x10xf32>
    %c0_6 = arith.constant 0 : index
    %c0_7 = arith.constant 0 : index
    %8 = vector.load %arg6[%c0_6, %c0_7] : memref<2x10xf32, #tpu.memory_space<vmem>>, vector<2x10xf32>
    tpu.vector_store %arg6[%c0_6, %c0_7], %7 {strides = array<i32>} : memref<2x10xf32, #tpu.memory_space<vmem>>, vector<2x10xf32>,
    %c0_i32_8 = arith.constant 0 : i32
    %9 = arith.cmpi eq, %arg1, %c0_i32_8 : i32
    %10 = arith.extui %9 : i1 to i32
    %c0_i32_9 = arith.constant 0 : i32
    %11 = arith.cmpi ne, %10, %c0_i32_9 : i32
    scf.if %11 {
      %c0_10 = arith.constant 0 : index
      %c0_11 = arith.constant 0 : index
      %12 = vector.load %arg6[%c0_10, %c0_11] : memref<2x10xf32, #tpu.memory_space<vmem>>, vector<2x10xf32>
      %c0_12 = arith.constant 0 : index
      %c0_13 = arith.constant 0 : index
      %13 = vector.load %arg4[%c0_12, %c0_13] : memref<1x10xf32, #tpu.memory_space<vmem>>, vector<1x10xf32>
      %14 = vector.broadcast %13 : vector<1x10xf32> to vector<2x10xf32>
      %15 = arith.addf %12, %14 : vector<2x10xf32>
      %c0_14 = arith.constant 0 : index
      %c0_15 = arith.constant 0 : index
      %16 = vector.load %arg5[%c0_14, %c0_15] : memref<2x10xf32, #tpu.memory_space<vmem>>, vector<2x10xf32>
      tpu.vector_store %arg5[%c0_14, %c0_15], %15 {strides = array<i32>} : memref<2x10xf32, #tpu.memory_space<vmem>>, vector<2x10xf32>,
    } else {
    }
    return
  }
  func.func @transform_0(%arg0: i32, %arg1: i32) -> (i32, i32) {
    %c0_i32 = arith.constant 0 : i32
    return %arg0, %arg1 : i32, i32
  }
  func.func @transform_1(%arg0: i32, %arg1: i32) -> (i32, i32) {
    %c0_i32 = arith.constant 0 : i32
    %c0_i32_0 = arith.constant 0 : i32
    return %arg1, %c0_i32 : i32, i32
  }
  func.func @transform_2(%arg0: i32, %arg1: i32) -> (i32, i32) {
    %c0_i32 = arith.constant 0 : i32
    %c0_i32_0 = arith.constant 0 : i32
    %c0_i32_1 = arith.constant 0 : i32
    return %c0_i32, %c0_i32_0 : i32, i32
  }
  func.func @transform_3(%arg0: i32, %arg1: i32) -> (i32, i32) {
    %c0_i32 = arith.constant 0 : i32
    %c0_i32_0 = arith.constant 0 : i32
    return %arg0, %c0_i32 : i32, i32
  }
}

</mosaic_0001>

<llo_original>
// kernel: vgg_forward.9
$region0: #{vgg_forward.9}
  #allocation0 [shape = 'u32[]', space=smem, size = 0x4, offset = 0x4, fixed_abs, tag = 'smem constant byte address 0x4 - core index']
  #allocation1 [shape = 'u32[144,128]{1,0:T(1,128)}', space=vmem, size = 0x12000, scoped, tag = 'internal scratch']
  %s0 = inlined_call_operand.vmem [shape: f32[1,128,128], index: 0, kind: input, shape index: {}]
  %s1 = inlined_call_operand.vmem [shape: f32[1,128], index: 1, kind: input, shape index: {}]
  %s2 = inlined_call_operand.vmem [shape: f32[1,128], index: 2, kind: input, shape index: {}]
  %s3 = inlined_call_operand.vmem [shape: f32[128,128], index: 3, kind: output, shape index: {}]
  %s4 = sld [smem:[#allocation0]]
  $region45: #{vgg_forward.9} parent=0
    _
  %s6 = ssub.s32 1, %s4
  %s7 = scalar_select 0, %s6, %s4
  loop: start=0, step=1, limit=4
  $region2: #{vgg_forward.9} parent=0 // loop_pre_header
    _
  $region3: #{vgg_forward.9} parent=0 // loop_header
    %s9 = sphi 0, %s13
    %p10 = scmp.ge.s32.totalorder %s9, 4
    %s19 = sphi 0, %s21
    %s22 = sphi 0, %s19
    %s23 = sphi 0, %s22
    %s39 = sphi 0, %s23
    %s43 = sphi 0, %s43
    %s45 = sphi 0, %s43
    %s46 = sphi 0, %s45
    %s60 = sphi 0, %s46
    %s64 = sphi 0, %s64
    %s66 = sphi 0, %s64
    %s67 = sphi 0, %s66
    %s81 = sphi 0, %s67
    %s87 = sphi 0, %s89
    %s90 = sphi 0, %s87
    %s91 = sphi 0, %s90
    %s107 = sphi 0, %s91
  $region4: #{vgg_forward.9} parent=0 // loop_header_branch
    %12 = sbr.rel (%p10) target = $region8
  $region5: #{vgg_forward.9} parent=0 // loop_body
    %s14 = ssub.s32 %s9, 1
    %s15 = ssub.s32 %s9, 2
    %s16 = sadd.s32 %s9, 1
    %s17 = ssub.s32 %s9, %s16
    %p18 = scmp.eq.s32.totalorder %s17, 0
    %s20 = sadd.s32 %s19, 1
    %s21 = scalar_select %p18, %s19, %s20
    %p24 = pneg %p18
    %p25 = scmp.eq.s32.totalorder %s9, 1
    %p26 = por %p24, %p25
    %p27 = scmp.ne.s32.totalorder %s19, %s22
    %p28 = scmp.eq.s32.totalorder %s9, 0
    %p29 = por %p27, %p28
    %p30 = scmp.ne.s32.totalorder %s19, %s22
    %p31 = scmp.eq.s32.totalorder %s14, 1
    %p32 = por %p30, %p31
    %p33 = scmp.ne.s32.totalorder %s22, %s23
    %p34 = scmp.eq.s32.totalorder %s14, 0
    %p35 = por %p33, %p34
    %p36 = scmp.ne.s32.totalorder %s22, %s23
    %p37 = scmp.eq.s32.totalorder %s15, 1
    %p38 = por %p36, %p37
    %p40 = scmp.ne.s32.totalorder %s23, %s39
    %p41 = scmp.eq.s32.totalorder %s15, 0
    %p42 = por %p40, %p41
    %s44 = sadd.s32 %s43, 1
    %p47 = scmp.eq.s32.totalorder %s9, 1
    %p48 = scmp.ne.s32.totalorder %s43, %s45
    %p49 = scmp.eq.s32.totalorder %s9, 0
    %p50 = por %p48, %p49
    %p51 = scmp.ne.s32.totalorder %s43, %s45
    %p52 = scmp.eq.s32.totalorder %s14, 1
    %p53 = por %p51, %p52
    %p54 = scmp.ne.s32.totalorder %s45, %s46
    %p55 = scmp.eq.s32.totalorder %s14, 0
    %p56 = por %p54, %p55
    %p57 = scmp.ne.s32.totalorder %s45, %s46
    %p58 = scmp.eq.s32.totalorder %s15, 1
    %p59 = por %p57, %p58
    %p61 = scmp.ne.s32.totalorder %s46, %s60
    %p62 = scmp.eq.s32.totalorder %s15, 0
    %p63 = por %p61, %p62
    %s65 = sadd.s32 %s64, 1
    %p68 = scmp.eq.s32.totalorder %s9, 1
    %p69 = scmp.ne.s32.totalorder %s64, %s66
    %p70 = scmp.eq.s32.totalorder %s9, 0
    %p71 = por %p69, %p70
    %p72 = scmp.ne.s32.totalorder %s64, %s66
    %p73 = scmp.eq.s32.totalorder %s14, 1
    %p74 = por %p72, %p73
    %p75 = scmp.ne.s32.totalorder %s66, %s67
    %p76 = scmp.eq.s32.totalorder %s14, 0
    %p77 = por %p75, %p76
    %p78 = scmp.ne.s32.totalorder %s66, %s67
    %p79 = scmp.eq.s32.totalorder %s15, 1
    %p80 = por %p78, %p79
    %p82 = scmp.ne.s32.totalorder %s67, %s81
    %p83 = scmp.eq.s32.totalorder %s15, 0
    %p84 = por %p82, %p83
    %s85 = ssub.s32 %s9, %s16
    %p86 = scmp.eq.s32.totalorder %s85, 0
    %s88 = sadd.s32 %s87, 1
    %s89 = scalar_select %p86, %s87, %s88
    %p92 = pneg %p86
    %p93 = scmp.eq.s32.totalorder %s9, 1
    %p94 = por %p92, %p93
    %p95 = scmp.ne.s32.totalorder %s87, %s90
    %p96 = scmp.eq.s32.totalorder %s9, 0
    %p97 = por %p95, %p96
    %p98 = scmp.ne.s32.totalorder %s87, %s90
    %p99 = scmp.eq.s32.totalorder %s14, 1
    %p100 = por %p98, %p99
    %p101 = scmp.ne.s32.totalorder %s90, %s91
    %p102 = scmp.eq.s32.totalorder %s14, 0
    %p103 = por %p101, %p102
    %p104 = scmp.ne.s32.totalorder %s90, %s91
    %p105 = scmp.eq.s32.totalorder %s15, 1
    %p106 = por %p104, %p105
    %p108 = scmp.ne.s32.totalorder %s91, %s107
    %p109 = scmp.eq.s32.totalorder %s15, 0
    %p110 = por %p108, %p109
    %p111 = scmp.le.s32.totalorder 1, %s9
    %p112 = scmp.lt.s32.totalorder %s9, 3
    %p113 = pnand %p111, %p112
    %p114 = pneg %p113
    // Predicated region
    $region9: #{vgg_forward.9} parent=5 // pred_check
      _
    $region10: #{vgg_forward.9} parent=5 // pred_check_branch
      %116 = sbr.rel (%p113) target = $region12
    $region11: #{vgg_forward.9} parent=5 // pred_region
      %s117 = ssub.s32 %s9, 1
      // Predicated region
      $region13: #{vgg_forward.9} parent=11 // pred_check
        %p118 = pneg %p56
      $region14: #{vgg_forward.9} parent=11 // pred_check_branch
        %120 = sbr.rel (%p118) target = $region16
      $region15: #{vgg_forward.9} parent=11 // pred_region
        _
      $region16: #{vgg_forward.9} parent=11 // pred_fallthru
        _
      // Predicated region
      $region17: #{vgg_forward.9} parent=11 // pred_check
        %p121 = pneg %p77
      $region18: #{vgg_forward.9} parent=11 // pred_check_branch
        %123 = sbr.rel (%p121) target = $region20
      $region19: #{vgg_forward.9} parent=11 // pred_region
        _
      $region20: #{vgg_forward.9} parent=11 // pred_fallthru
        _
    $region12: #{vgg_forward.9} parent=5 // pred_fallthru
      _
    %p124 = scmp.lt.s32.totalorder %s9, 2
    // Predicated region
    $region21: #{vgg_forward.9} parent=5 // pred_check
      %p125 = pneg %p124
    $region22: #{vgg_forward.9} parent=5 // pred_check_branch
      %127 = sbr.rel (%p125) target = $region24
    $region23: #{vgg_forward.9} parent=5 // pred_region
      // Predicated region
      $region25: #{vgg_forward.9} parent=23 // pred_check
        %p128 = pneg %p29
      $region26: #{vgg_forward.9} parent=23 // pred_check_branch
        %130 = sbr.rel (%p128) target = $region28
      $region27: #{vgg_forward.9} parent=23 // pred_region
        %s131 = smul.u32 8, %s9
        %p132 = scmp.lt.s32.totalorder %s131, 15
        %s133 = scalar_select %p132, %s131, 15
        %s134 = smul.addr %s133, 8
        %s135 = scalar_lea.vmem %s0, %s134
        %s136 = smul.u32 8, %s9
      $region28: #{vgg_forward.9} parent=23 // pred_fallthru
        _
    $region24: #{vgg_forward.9} parent=5 // pred_fallthru
      _
    %p137 = scmp.le.s32.totalorder 1, %s9
    %p138 = scmp.lt.s32.totalorder %s9, 3
    %p139 = pnand %p137, %p138
    %p140 = pneg %p139
    // Predicated region
    $region29: #{vgg_forward.9} parent=5 // pred_check
      _
    $region30: #{vgg_forward.9} parent=5 // pred_check_branch
      %142 = sbr.rel (%p139) target = $region32
    $region31: #{vgg_forward.9} parent=5 // pred_region
      %s143 = ssub.s32 %s9, 1
      %s144 = smul.u32 8, %s14
      %p145 = scmp.lt.s32.totalorder %s144, 15
      %s146 = scalar_select %p145, %s144, 15
      %s147 = smul.addr %s146, 8
      %s148 = scalar_lea.vmem %s0, %s147
      %p149 = pneg %p35
      %p150 = pneg %p32
      %p151 = pneg %p56
      %p152 = pneg %p53
      %p153 = pneg %p77
      %p154 = pneg %p74
      %p155 = pneg %p103
      %p156 = pneg %p100
      %s157 = smul.u32 8, %s14
      %p158 = scmp.lt.s32.totalorder %s157, 15
      %s159 = scalar_select %p158, %s157, 15
      %s160 = smul.addr %s159, 8
      %s161 = scalar_lea.vmem %s3, %s160
      %s162 = smul.u32 8, %s14
      %p163 = scmp.lt.s32.totalorder %s162, 15
      %s164 = scalar_select %p163, %s162, 15
      %s165 = smul.addr %s164, 8
      %s166 = scalar_lea.vmem %s0, %s165
      %s167 = smul.u32 8, %s14
      %s168 = smul.u32 8, %s14
      %p169 = scmp.lt.s32.totalorder %s168, 15
      %s170 = scalar_select %p169, %s168, 15
      %s171 = smul.addr %s170, 8
      %s172 = scalar_lea.vmem %s3, %s171
      %s173 = smul.u32 8, %s14
      %v174 = vld [vmem:[%s166] sm:$0xff]
      %v175 = vld [vmem:[%s166 + $0x8] sm:$0xff]
      %v176 = vld [vmem:[%s166 + $0x10] sm:$0xff]
      %v177 = vld [vmem:[%s166 + $0x18] sm:$0xff]
      %v178 = vld [vmem:[%s166 + $0x20] sm:$0xff]
      %v179 = vld [vmem:[%s166 + $0x28] sm:$0xff]
      %v180 = vld [vmem:[%s166 + $0x30] sm:$0xff]
      %v181 = vld [vmem:[%s166 + $0x38] sm:$0xff]
      %v182 = vld [vmem:[%s1] sm:$0x1]
      %v184 = vlaneseq
      %v185 = vshrl.u32 %v184, 7
      %v186 = vsub.s32 0, %v185
      %v187 = vrot.slane %v182, %v186
      %v189 = vmul.f32 %v174, %v187
      %v190 = vmul.f32 %v175, %v187
      %v191 = vmul.f32 %v176, %v187
      %v192 = vmul.f32 %v177, %v187
      %v193 = vmul.f32 %v178, %v187
      %v194 = vmul.f32 %v179, %v187
      %v195 = vmul.f32 %v180, %v187
      %v196 = vmul.f32 %v181, %v187
      %v197 = vld [vmem:[%s2] sm:$0x1]
      %v199 = vlaneseq
      %v200 = vshrl.u32 %v199, 7
      %v201 = vsub.s32 0, %v200
      %v202 = vrot.slane %v197, %v201
      %v204 = vadd.f32 %v189, %v202
      %v205 = vadd.f32 %v190, %v202
      %v206 = vadd.f32 %v191, %v202
      %v207 = vadd.f32 %v192, %v202
      %v208 = vadd.f32 %v193, %v202
      %v209 = vadd.f32 %v194, %v202
      %v210 = vadd.f32 %v195, %v202
      %v211 = vadd.f32 %v196, %v202
      %v212 = vtanh.pop %v204
      %v213 = vtanh.pop %v205
      %v214 = vtanh.pop %v206
      %v215 = vtanh.pop %v207
      %v216 = vtanh.pop %v208
      %v217 = vtanh.pop %v209
      %v218 = vtanh.pop %v210
      %v219 = vtanh.pop %v211
      %220 = vst [vmem:[%s172] sm:$0xff] %v212
      %221 = vst [vmem:[%s172 + $0x8] sm:$0xff] %v213
      %222 = vst [vmem:[%s172 + $0x10] sm:$0xff] %v214
      %223 = vst [vmem:[%s172 + $0x18] sm:$0xff] %v215
      %224 = vst [vmem:[%s172 + $0x20] sm:$0xff] %v216
      %225 = vst [vmem:[%s172 + $0x28] sm:$0xff] %v217
      %226 = vst [vmem:[%s172 + $0x30] sm:$0xff] %v218
      %227 = vst [vmem:[%s172 + $0x38] sm:$0xff] %v219
      %s228 = smul.u32 8, %s14
      %p229 = scmp.lt.s32.totalorder %s228, 15
      %s230 = scalar_select %p229, %s228, 15
      %s231 = smul.addr %s230, 8
      %s232 = scalar_lea.vmem %s3, %s231
      // Predicated region
      $region33: #{vgg_forward.9} parent=31 // pred_check
        %p233 = pneg %p100
      $region34: #{vgg_forward.9} parent=31 // pred_check_branch
        %235 = sbr.rel (%p233) target = $region36
      $region35: #{vgg_forward.9} parent=31 // pred_region
        %s236 = smul.u32 8, %s14
      $region36: #{vgg_forward.9} parent=31 // pred_fallthru
        _
    $region32: #{vgg_forward.9} parent=5 // pred_fallthru
      _
    %p237 = scmp.le.s32.totalorder 2, %s9
    // Predicated region
    $region37: #{vgg_forward.9} parent=5 // pred_check
      %p238 = pneg %p237
    $region38: #{vgg_forward.9} parent=5 // pred_check_branch
      %240 = sbr.rel (%p238) target = $region40
    $region39: #{vgg_forward.9} parent=5 // pred_region
      %s241 = ssub.s32 %s9, 2
      // Predicated region
      $region41: #{vgg_forward.9} parent=39 // pred_check
        %p242 = pneg %p106
      $region42: #{vgg_forward.9} parent=39 // pred_check_branch
        %244 = sbr.rel (%p242) target = $region44
      $region43: #{vgg_forward.9} parent=39 // pred_region
        %s245 = smul.u32 8, %s15
        %p246 = scmp.lt.s32.totalorder %s245, 15
        %s247 = scalar_select %p246, %s245, 15
        %s248 = smul.addr %s247, 8
        %s249 = scalar_lea.vmem %s3, %s248
      $region44: #{vgg_forward.9} parent=39 // pred_fallthru
        _
    $region40: #{vgg_forward.9} parent=5 // pred_fallthru
      _
  $region6: #{vgg_forward.9} parent=0 // loop_footer
    %s13 = sadd.s32 1, %s9
  $region7: #{vgg_forward.9} parent=0 // loop_footer_branch
    %8 = sbr.rel target = $region3
  $region8: #{vgg_forward.9} parent=0 // loop_exit
    _

// kernel: vgg_forward.8
$region0: #{vgg_forward.8}
  #allocation0 [shape = 'u32[]', space=smem, size = 0x4, offset = 0x4, fixed_abs, tag = 'smem constant byte address 0x4 - core index']
  #allocation1 [shape = 'u32[144,128]{1,0:T(1,128)}', space=vmem, size = 0x12000, scoped, tag = 'internal scratch']
  %s0 = inlined_call_operand.vmem [shape: f32[2,18,16,9], index: 0, kind: input, shape index: {}]
  %s1 = inlined_call_operand.vmem [shape: bf16[3,9,32], index: 1, kind: input, shape index: {}]
  %s2 = inlined_call_operand.vmem [shape: f32[1,32], index: 2, kind: input, shape index: {}]
  %s3 = inlined_call_operand.vmem [shape: f32[2,256,32], index: 3, kind: output, shape index: {0}]
  %s4 = inlined_call_operand.vmem [shape: f32[2,1,32], index: 4, kind: output, shape index: {1}]
  %s5 = inlined_call_operand.vmem [shape: f32[2,1,32], index: 5, kind: output, shape index: {2}]
  %6 = xla_tuple %s3, %s4, %s5
  %s7 = sld [smem:[#allocation0]]
  $region61: #{vgg_forward.8} parent=0
    _
  %s9 = ssub.s32 1, %s7
  %s10 = scalar_select 0, %s9, %s7
  loop: start=0, step=1, limit=4
  $region2: #{vgg_forward.8} parent=0 // loop_pre_header
    _
  $region3: #{vgg_forward.8} parent=0 // loop_header
    %s12 = sphi 0, %s16
    %p13 = scmp.ge.s32.totalorder %s12, 4
    %s22 = sphi 0, %s24
    %s25 = sphi 0, %s22
    %s26 = sphi 0, %s25
    %s42 = sphi 0, %s26
    %s46 = sphi 0, %s46
    %s48 = sphi 0, %s46
    %s49 = sphi 0, %s48
    %s63 = sphi 0, %s49
    %s67 = sphi 0, %s67
    %s69 = sphi 0, %s67
    %s70 = sphi 0, %s69
    %s84 = sphi 0, %s70
    %s90 = sphi 0, %s92
    %s93 = sphi 0, %s90
    %s94 = sphi 0, %s93
    %s110 = sphi 0, %s94
    %s116 = sphi 0, %s118
    %s119 = sphi 0, %s116
    %s120 = sphi 0, %s119
    %s136 = sphi 0, %s120
    %s142 = sphi 0, %s144
    %s145 = sphi 0, %s142
    %s146 = sphi 0, %s145
    %s162 = sphi 0, %s146
  $region4: #{vgg_forward.8} parent=0 // loop_header_branch
    %15 = sbr.rel (%p13) target = $region8
  $region5: #{vgg_forward.8} parent=0 // loop_body
    %s17 = ssub.s32 %s12, 1
    %s18 = ssub.s32 %s12, 2
    %s19 = sadd.s32 %s12, 1
    %s20 = ssub.s32 %s12, %s19
    %p21 = scmp.eq.s32.totalorder %s20, 0
    %s23 = sadd.s32 %s22, 1
    %s24 = scalar_select %p21, %s22, %s23
    %p27 = pneg %p21
    %p28 = scmp.eq.s32.totalorder %s12, 1
    %p29 = por %p27, %p28
    %p30 = scmp.ne.s32.totalorder %s22, %s25
    %p31 = scmp.eq.s32.totalorder %s12, 0
    %p32 = por %p30, %p31
    %p33 = scmp.ne.s32.totalorder %s22, %s25
    %p34 = scmp.eq.s32.totalorder %s17, 1
    %p35 = por %p33, %p34
    %p36 = scmp.ne.s32.totalorder %s25, %s26
    %p37 = scmp.eq.s32.totalorder %s17, 0
    %p38 = por %p36, %p37
    %p39 = scmp.ne.s32.totalorder %s25, %s26
    %p40 = scmp.eq.s32.totalorder %s18, 1
    %p41 = por %p39, %p40
    %p43 = scmp.ne.s32.totalorder %s26, %s42
    %p44 = scmp.eq.s32.totalorder %s18, 0
    %p45 = por %p43, %p44
    %s47 = sadd.s32 %s46, 1
    %p50 = scmp.eq.s32.totalorder %s12, 1
    %p51 = scmp.ne.s32.totalorder %s46, %s48
    %p52 = scmp.eq.s32.totalorder %s12, 0
    %p53 = por %p51, %p52
    %p54 = scmp.ne.s32.totalorder %s46, %s48
    %p55 = scmp.eq.s32.totalorder %s17, 1
    %p56 = por %p54, %p55
    %p57 = scmp.ne.s32.totalorder %s48, %s49
    %p58 = scmp.eq.s32.totalorder %s17, 0
    %p59 = por %p57, %p58
    %p60 = scmp.ne.s32.totalorder %s48, %s49
    %p61 = scmp.eq.s32.totalorder %s18, 1
    %p62 = por %p60, %p61
    %p64 = scmp.ne.s32.totalorder %s49, %s63
    %p65 = scmp.eq.s32.totalorder %s18, 0
    %p66 = por %p64, %p65
    %s68 = sadd.s32 %s67, 1
    %p71 = scmp.eq.s32.totalorder %s12, 1
    %p72 = scmp.ne.s32.totalorder %s67, %s69
    %p73 = scmp.eq.s32.totalorder %s12, 0
    %p74 = por %p72, %p73
    %p75 = scmp.ne.s32.totalorder %s67, %s69
    %p76 = scmp.eq.s32.totalorder %s17, 1
    %p77 = por %p75, %p76
    %p78 = scmp.ne.s32.totalorder %s69, %s70
    %p79 = scmp.eq.s32.totalorder %s17, 0
    %p80 = por %p78, %p79
    %p81 = scmp.ne.s32.totalorder %s69, %s70
    %p82 = scmp.eq.s32.totalorder %s18, 1
    %p83 = por %p81, %p82
    %p85 = scmp.ne.s32.totalorder %s70, %s84
    %p86 = scmp.eq.s32.totalorder %s18, 0
    %p87 = por %p85, %p86
    %s88 = ssub.s32 %s12, %s19
    %p89 = scmp.eq.s32.totalorder %s88, 0
    %s91 = sadd.s32 %s90, 1
    %s92 = scalar_select %p89, %s90, %s91
    %p95 = pneg %p89
    %p96 = scmp.eq.s32.totalorder %s12, 1
    %p97 = por %p95, %p96
    %p98 = scmp.ne.s32.totalorder %s90, %s93
    %p99 = scmp.eq.s32.totalorder %s12, 0
    %p100 = por %p98, %p99
    %p101 = scmp.ne.s32.totalorder %s90, %s93
    %p102 = scmp.eq.s32.totalorder %s17, 1
    %p103 = por %p101, %p102
    %p104 = scmp.ne.s32.totalorder %s93, %s94
    %p105 = scmp.eq.s32.totalorder %s17, 0
    %p106 = por %p104, %p105
    %p107 = scmp.ne.s32.totalorder %s93, %s94
    %p108 = scmp.eq.s32.totalorder %s18, 1
    %p109 = por %p107, %p108
    %p111 = scmp.ne.s32.totalorder %s94, %s110
    %p112 = scmp.eq.s32.totalorder %s18, 0
    %p113 = por %p111, %p112
    %s114 = ssub.s32 %s12, %s19
    %p115 = scmp.eq.s32.totalorder %s114, 0
    %s117 = sadd.s32 %s116, 1
    %s118 = scalar_select %p115, %s116, %s117
    %p121 = pneg %p115
    %p122 = scmp.eq.s32.totalorder %s12, 1
    %p123 = por %p121, %p122
    %p124 = scmp.ne.s32.totalorder %s116, %s119
    %p125 = scmp.eq.s32.totalorder %s12, 0
    %p126 = por %p124, %p125
    %p127 = scmp.ne.s32.totalorder %s116, %s119
    %p128 = scmp.eq.s32.totalorder %s17, 1
    %p129 = por %p127, %p128
    %p130 = scmp.ne.s32.totalorder %s119, %s120
    %p131 = scmp.eq.s32.totalorder %s17, 0
    %p132 = por %p130, %p131
    %p133 = scmp.ne.s32.totalorder %s119, %s120
    %p134 = scmp.eq.s32.totalorder %s18, 1
    %p135 = por %p133, %p134
    %p137 = scmp.ne.s32.totalorder %s120, %s136
    %p138 = scmp.eq.s32.totalorder %s18, 0
    %p139 = por %p137, %p138
    %s140 = ssub.s32 %s12, %s19
    %p141 = scmp.eq.s32.totalorder %s140, 0
    %s143 = sadd.s32 %s142, 1
    %s144 = scalar_select %p141, %s142, %s143
    %p147 = pneg %p141
    %p148 = scmp.eq.s32.totalorder %s12, 1
    %p149 = por %p147, %p148
    %p150 = scmp.ne.s32.totalorder %s142, %s145
    %p151 = scmp.eq.s32.totalorder %s12, 0
    %p152 = por %p150, %p151
    %p153 = scmp.ne.s32.totalorder %s142, %s145
    %p154 = scmp.eq.s32.totalorder %s17, 1
    %p155 = por %p153, %p154
    %p156 = scmp.ne.s32.totalorder %s145, %s146
    %p157 = scmp.eq.s32.totalorder %s17, 0
    %p158 = por %p156, %p157
    %p159 = scmp.ne.s32.totalorder %s145, %s146
    %p160 = scmp.eq.s32.totalorder %s18, 1
    %p161 = por %p159, %p160
    %p163 = scmp.ne.s32.totalorder %s146, %s162
    %p164 = scmp.eq.s32.totalorder %s18, 0
    %p165 = por %p163, %p164
    %p166 = scmp.le.s32.totalorder 1, %s12
    %p167 = scmp.lt.s32.totalorder %s12, 3
    %p168 = pnand %p166, %p167
    %p169 = pneg %p168
    // Predicated region
    $region9: #{vgg_forward.8} parent=5 // pred_check
      _
    $region10: #{vgg_forward.8} parent=5 // pred_check_branch
      %171 = sbr.rel (%p168) target = $region12
    $region11: #{vgg_forward.8} parent=5 // pred_region
      %s172 = ssub.s32 %s12, 1
      // Predicated region
      $region13: #{vgg_forward.8} parent=11 // pred_check
        %p173 = pneg %p59
      $region14: #{vgg_forward.8} parent=11 // pred_check_branch
        %175 = sbr.rel (%p173) target = $region16
      $region15: #{vgg_forward.8} parent=11 // pred_region
        _
      $region16: #{vgg_forward.8} parent=11 // pred_fallthru
        _
      // Predicated region
      $region17: #{vgg_forward.8} parent=11 // pred_check
        %p176 = pneg %p80
      $region18: #{vgg_forward.8} parent=11 // pred_check_branch
        %178 = sbr.rel (%p176) target = $region20
      $region19: #{vgg_forward.8} parent=11 // pred_region
        _
      $region20: #{vgg_forward.8} parent=11 // pred_fallthru
        _
    $region12: #{vgg_forward.8} parent=5 // pred_fallthru
      _
    %p179 = scmp.lt.s32.totalorder %s12, 2
    // Predicated region
    $region21: #{vgg_forward.8} parent=5 // pred_check
      %p180 = pneg %p179
    $region22: #{vgg_forward.8} parent=5 // pred_check_branch
      %182 = sbr.rel (%p180) target = $region24
    $region23: #{vgg_forward.8} parent=5 // pred_region
      // Predicated region
      $region25: #{vgg_forward.8} parent=23 // pred_check
        %p183 = pneg %p32
      $region26: #{vgg_forward.8} parent=23 // pred_check_branch
        %185 = sbr.rel (%p183) target = $region28
      $region27: #{vgg_forward.8} parent=23 // pred_region
        %p186 = scmp.lt.s32.totalorder %s12, 1
        %s187 = scalar_select %p186, %s12, 1
        %s188 = smul.addr %s187, 36
        %s189 = smul.addr %s188, 8
        %s190 = scalar_lea.vmem %s0, %s189
      $region28: #{vgg_forward.8} parent=23 // pred_fallthru
        _
    $region24: #{vgg_forward.8} parent=5 // pred_fallthru
      _
    %p191 = scmp.le.s32.totalorder 1, %s12
    %p192 = scmp.lt.s32.totalorder %s12, 3
    %p193 = pnand %p191, %p192
    %p194 = pneg %p193
    // Predicated region
    $region29: #{vgg_forward.8} parent=5 // pred_check
      _
    $region30: #{vgg_forward.8} parent=5 // pred_check_branch
      %196 = sbr.rel (%p193) target = $region32
    $region31: #{vgg_forward.8} parent=5 // pred_region
      %s197 = ssub.s32 %s12, 1
      %p198 = scmp.lt.s32.totalorder %s17, 1
      %s199 = scalar_select %p198, %s17, 1
      %s200 = smul.addr %s199, 36
      %s201 = smul.addr %s200, 8
      %s202 = scalar_lea.vmem %s0, %s201
      %p203 = pneg %p38
      %p204 = pneg %p35
      %p205 = pneg %p59
      %p206 = pneg %p56
      %p207 = pneg %p80
      %p208 = pneg %p77
      %p209 = pneg %p106
      %p210 = pneg %p103
      %p211 = scmp.lt.s32.totalorder %s17, 1
      %s212 = scalar_select %p211, %s17, 1
      %s213 = smul.addr %s212, 32
      %s214 = smul.addr %s213, 8
      %s215 = scalar_lea.vmem %s3, %s214
      %p216 = pneg %p132
      %p217 = pneg %p129
      %p218 = scmp.lt.s32.totalorder %s17, 1
      %s219 = scalar_select %p218, %s17, 1
      %s220 = scalar_lea.vmem %s4, %s219
      %p221 = pneg %p158
      %p222 = pneg %p155
      %p223 = scmp.lt.s32.totalorder %s17, 1
      %s224 = scalar_select %p223, %s17, 1
      %s225 = scalar_lea.vmem %s5, %s224
      %p226 = scmp.lt.s32.totalorder %s17, 1
      %s227 = scalar_select %p226, %s17, 1
      %s228 = smul.addr %s227, 36
      %s229 = smul.addr %s228, 8
      %s230 = scalar_lea.vmem %s0, %s229
      %p231 = scmp.lt.s32.totalorder %s17, 1
      %s232 = scalar_select %p231, %s17, 1
      %s233 = smul.addr %s232, 32
      %s234 = smul.addr %s233, 8
      %s235 = scalar_lea.vmem %s3, %s234
      %p236 = scmp.lt.s32.totalorder %s17, 1
      %s237 = scalar_select %p236, %s17, 1
      %s238 = scalar_lea.vmem %s4, %s237
      %p239 = scmp.lt.s32.totalorder %s17, 1
      %s240 = scalar_select %p239, %s17, 1
      %s241 = scalar_lea.vmem %s5, %s240
      %v243 = vld [vmem:[%s230] sm:$0xff]
      %v244 = vld [vmem:[%s230 + $0x8] sm:$0xff]
      %v245 = vld [vmem:[%s230 + $0x10] sm:$0xff]
      %v246 = vld [vmem:[%s230 + $0x18] sm:$0xff]
      %v247 = vld [vmem:[%s230 + $0x20] sm:$0xff]
      %v248 = vld [vmem:[%s230 + $0x28] sm:$0xff]
      %v249 = vld [vmem:[%s230 + $0x30] sm:$0xff]
      %v250 = vld [vmem:[%s230 + $0x38] sm:$0xff]
      %v251 = vld [vmem:[%s230 + $0x40] sm:$0xff]
      %v252 = vld [vmem:[%s230 + $0x48] sm:$0xff]
      %v253 = vld [vmem:[%s230 + $0x50] sm:$0xff]
      %v254 = vld [vmem:[%s230 + $0x58] sm:$0xff]
      %v255 = vld [vmem:[%s230 + $0x60] sm:$0xff]
      %v256 = vld [vmem:[%s230 + $0x68] sm:$0xff]
      %v257 = vld [vmem:[%s230 + $0x70] sm:$0xff]
      %v258 = vld [vmem:[%s230 + $0x78] sm:$0xff]
      %v259 = vld [vmem:[%s230 + $0x80] sm:$0xff]
      %v260 = vld [vmem:[%s230 + $0x88] sm:$0xff]
      %v261 = vld [vmem:[%s230 + $0x90] sm:$0xff]
      %v262 = vld [vmem:[%s230 + $0x98] sm:$0xff]
      %v263 = vld [vmem:[%s230 + $0xa0] sm:$0xff]
      %v264 = vld [vmem:[%s230 + $0xa8] sm:$0xff]
      %v265 = vld [vmem:[%s230 + $0xb0] sm:$0xff]
      %v266 = vld [vmem:[%s230 + $0xb8] sm:$0xff]
      %v267 = vld [vmem:[%s230 + $0xc0] sm:$0xff]
      %v268 = vld [vmem:[%s230 + $0xc8] sm:$0xff]
      %v269 = vld [vmem:[%s230 + $0xd0] sm:$0xff]
      %v270 = vld [vmem:[%s230 + $0xd8] sm:$0xff]
      %v271 = vld [vmem:[%s230 + $0xe0] sm:$0xff]
      %v272 = vld [vmem:[%s230 + $0xe8] sm:$0xff]
      %v273 = vld [vmem:[%s230 + $0xf0] sm:$0xff]
      %v274 = vld [vmem:[%s230 + $0xf8] sm:$0xff]
      %v275 = vld [vmem:[%s230 + $0x100] sm:$0xff]
      %v276 = vld [vmem:[%s230 + $0x108] sm:$0xff]
      %v277 = vld [vmem:[%s230 + $0x110] sm:$0xff]
      %v278 = vld [vmem:[%s230 + $0x118] sm:$0xff]
      %v279 = vpack.c.bf16 %v244, %v243
      %v280 = vpack.c.bf16 %v246, %v245
      %v281 = vpack.c.bf16 %v248, %v247
      %v282 = vpack.c.bf16 %v250, %v249
      %v283 = vpack.c.bf16 %v252, %v251
      %v284 = vpack.c.bf16 %v254, %v253
      %v285 = vpack.c.bf16 %v256, %v255
      %v286 = vpack.c.bf16 %v258, %v257
      %v287 = vpack.c.bf16 %v260, %v259
      %v288 = vpack.c.bf16 %v262, %v261
      %v289 = vpack.c.bf16 %v264, %v263
      %v290 = vpack.c.bf16 %v266, %v265
      %v291 = vpack.c.bf16 %v268, %v267
      %v292 = vpack.c.bf16 %v270, %v269
      %v293 = vpack.c.bf16 %v272, %v271
      %v294 = vpack.c.bf16 %v274, %v273
      %v295 = vld [vmem:[%s1] sm:$0xf]
      %v296 = vld [vmem:[%s1 + $0x4] sm:$0x1]
      %v297 = vpack.c.bf16 %v276, %v275
      %s298 = scalar_lea.vmem %s1, 8
      %v299 = vld [vmem:[%s298] sm:$0xf]
      %v300 = vld [vmem:[%s298 + $0x4] sm:$0x1]
      %v303 = vunpack.c.l.b16 %v299
      %v304 = vunpack.c.l.b16 %v300
      %v305 = vpack.c.b16 %v304, %v303
      %vm306 = vcmask 72704
      %v308 = vsel %vm306, %v280, 0
      %v311 = vsel %vm306, %v281, 0
      %v314 = vsel %vm306, %v282, 0
      %v317 = vsel %vm306, %v283, 0
      %v320 = vsel %vm306, %v284, 0
      %v323 = vsel %vm306, %v285, 0
      %v326 = vsel %vm306, %v286, 0
      %v329 = vsel %vm306, %v287, 0
      %v332 = vsel %vm306, %v288, 0
      %v335 = vsel %vm306, %v289, 0
      %v338 = vsel %vm306, %v290, 0
      %v341 = vsel %vm306, %v291, 0
      %v344 = vsel %vm306, %v292, 0
      %v347 = vsel %vm306, %v293, 0
      %v350 = vsel %vm306, %v294, 0
      %v353 = vsel %vm306, %v297, 0
      %vm355 = vcmask 1043456
      %vm356 = vcmask 1044480
      %v357 = vsel %vm355, 4294967295, 65535
      %v358 = vsel %vm356, %v357, 0
      %v360 = vand.u32 %v305, %v358
      %362 = vmatprep.subr.bf16.mxu0 0
      %363 = vmatpush1.bf16.msra.mxu0 %v360
      %364 = vmatprep.subr.bf16.mxu0 0
      %365 = vmatpush1.bf16.msra.mxu0 0
      %366 = vmatprep.subr.bf16.mxu0 0
      %367 = vmatpush1.bf16.msra.mxu0 0
      %368 = vmatprep.subr.bf16.mxu0 0
      %369 = vmatpush1.bf16.msra.mxu0 0
      %370 = vmatprep.subr.bf16.mxu0 0
      %371 = vmatpush1.bf16.msra.mxu0 0
      %372 = vmatprep.subr.bf16.mxu0 0
      %373 = vmatpush1.bf16.msra.mxu0 0
      %374 = vmatprep.subr.bf16.mxu0 0
      %375 = vmatpush1.bf16.msra.mxu0 0
      %376 = vmatprep.subr.bf16.mxu0 0
      %377 = vmatpush1.bf16.msra.mxu0 0
      %378 = vmatprep.subr.bf16.mxu0 0
      %379 = vmatpush1.bf16.msra.mxu0 0
      %380 = vmatprep.subr.bf16.mxu0 0
      %381 = vmatpush1.bf16.msra.mxu0 0
      %382 = vmatprep.subr.bf16.mxu0 0
      %383 = vmatpush1.bf16.msra.mxu0 0
      %384 = vmatprep.subr.bf16.mxu0 0
      %385 = vmatpush1.bf16.msra.mxu0 0
      %386 = vmatprep.subr.bf16.mxu0 0
      %387 = vmatpush1.bf16.msra.mxu0 0
      %388 = vmatprep.subr.bf16.mxu0 0
      %389 = vmatpush1.bf16.msra.mxu0 0
      %390 = vmatprep.subr.bf16.mxu0 0
      %391 = vmatpush1.bf16.msra.mxu0 0
      %392 = vmatprep.subr.bf16.mxu0 0
      %393 = vmatpush1.bf16.msra.mxu0 0
      %394 = vmatprep.mubr.bf16.mxu0 0
      %395 = vmatmul.mubr.bf16.gmra.mrb[0].mxu0 %v308
      %v396 = vpop.f32.mrb[0].mxu0
      %v397 = vadd.f32 0.0, %v396
      %v398 = vpop.f32.mrb[0].mxu0
      %v399 = vpop.f32.mrb[0].mxu0
      %v400 = vadd.f32 0.0, %v399
      %v401 = vpop.f32.mrb[0].mxu0
      %402 = vmatprep.mubr.bf16.mxu0 0
      %403 = vmatmul.mubr.bf16.gmra.mrb[0].mxu0 %v311
      %v404 = vpop.f32.mrb[0].mxu0
      %v405 = vadd.f32 0.0, %v404
      %v406 = vpop.f32.mrb[0].mxu0
      %v407 = vpop.f32.mrb[0].mxu0
      %v408 = vadd.f32 0.0, %v407
      %v409 = vpop.f32.mrb[0].mxu0
      %410 = vmatprep.mubr.bf16.mxu0 0
      %411 = vmatmul.mubr.bf16.gmra.mrb[0].mxu0 %v314
      %v412 = vpop.f32.mrb[0].mxu0
      %v413 = vadd.f32 0.0, %v412
      %v414 = vpop.f32.mrb[0].mxu0
      %v415 = vpop.f32.mrb[0].mxu0
      %v416 = vadd.f32 0.0, %v415
      %v417 = vpop.f32.mrb[0].mxu0
      %418 = vmatprep.mubr.bf16.mxu0 0
      %419 = vmatmul.mubr.bf16.gmra.mrb[0].mxu0 %v317
      %v420 = vpop.f32.mrb[0].mxu0
      %v421 = vadd.f32 0.0, %v420
      %v422 = vpop.f32.mrb[0].mxu0
      %v423 = vpop.f32.mrb[0].mxu0
      %v424 = vadd.f32 0.0, %v423
      %v425 = vpop.f32.mrb[0].mxu0
      %426 = vmatprep.mubr.bf16.mxu0 0
      %427 = vmatmul.mubr.bf16.gmra.mrb[0].mxu0 %v320
      %v428 = vpop.f32.mrb[0].mxu0
      %v429 = vadd.f32 0.0, %v428
      %v430 = vpop.f32.mrb[0].mxu0
      %v431 = vpop.f32.mrb[0].mxu0
      %v432 = vadd.f32 0.0, %v431
      %v433 = vpop.f32.mrb[0].mxu0
      %434 = vmatprep.mubr.bf16.mxu0 0
      %435 = vmatmul.mubr.bf16.gmra.mrb[0].mxu0 %v323
      %v436 = vpop.f32.mrb[0].mxu0
      %v437 = vadd.f32 0.0, %v436
      %v438 = vpop.f32.mrb[0].mxu0
      %v439 = vpop.f32.mrb[0].mxu0
      %v440 = vadd.f32 0.0, %v439
      %v441 = vpop.f32.mrb[0].mxu0
      %442 = vmatprep.mubr.bf16.mxu0 0
      %443 = vmatmul.mubr.bf16.gmra.mrb[0].mxu0 %v326
      %v444 = vpop.f32.mrb[0].mxu0
      %v445 = vadd.f32 0.0, %v444
      %v446 = vpop.f32.mrb[0].mxu0
      %v447 = vpop.f32.mrb[0].mxu0
      %v448 = vadd.f32 0.0, %v447
      %v449 = vpop.f32.mrb[0].mxu0
      %450 = vmatprep.mubr.bf16.mxu0 0
      %451 = vmatmul.mubr.bf16.gmra.mrb[0].mxu0 %v329
      %v452 = vpop.f32.mrb[0].mxu0
      %v453 = vadd.f32 0.0, %v452
      %v454 = vpop.f32.mrb[0].mxu0
      %v455 = vpop.f32.mrb[0].mxu0
      %v456 = vadd.f32 0.0, %v455
      %v457 = vpop.f32.mrb[0].mxu0
      %458 = vmatprep.mubr.bf16.mxu0 0
      %459 = vmatmul.mubr.bf16.gmra.mrb[0].mxu0 %v332
      %v460 = vpop.f32.mrb[0].mxu0
      %v461 = vadd.f32 0.0, %v460
      %v462 = vpop.f32.mrb[0].mxu0
      %v463 = vpop.f32.mrb[0].mxu0
      %v464 = vadd.f32 0.0, %v463
      %v465 = vpop.f32.mrb[0].mxu0
      %466 = vmatprep.mubr.bf16.mxu0 0
      %467 = vmatmul.mubr.bf16.gmra.mrb[0].mxu0 %v335
      %v468 = vpop.f32.mrb[0].mxu0
      %v469 = vadd.f32 0.0, %v468
      %v470 = vpop.f32.mrb[0].mxu0
      %v471 = vpop.f32.mrb[0].mxu0
      %v472 = vadd.f32 0.0, %v471
      %v473 = vpop.f32.mrb[0].mxu0
      %474 = vmatprep.mubr.bf16.mxu0 0
      %475 = vmatmul.mubr.bf16.gmra.mrb[0].mxu0 %v338
      %v476 = vpop.f32.mrb[0].mxu0
      %v477 = vadd.f32 0.0, %v476
      %v478 = vpop.f32.mrb[0].mxu0
      %v479 = vpop.f32.mrb[0].mxu0
      %v480 = vadd.f32 0.0, %v479
      %v481 = vpop.f32.mrb[0].mxu0
      %482 = vmatprep.mubr.bf16.mxu0 0
      %483 = vmatmul.mubr.bf16.gmra.mrb[0].mxu0 %v341
      %v484 = vpop.f32.mrb[0].mxu0
      %v485 = vadd.f32 0.0, %v484
      %v486 = vpop.f32.mrb[0].mxu0
      %v487 = vpop.f32.mrb[0].mxu0
      %v488 = vadd.f32 0.0, %v487
      %v489 = vpop.f32.mrb[0].mxu0
      %490 = vmatprep.mubr.bf16.mxu0 0
      %491 = vmatmul.mubr.bf16.gmra.mrb[0].mxu0 %v344
      %v492 = vpop.f32.mrb[0].mxu0
      %v493 = vadd.f32 0.0, %v492
      %v494 = vpop.f32.mrb[0].mxu0
      %v495 = vpop.f32.mrb[0].mxu0
      %v496 = vadd.f32 0.0, %v495
      %v497 = vpop.f32.mrb[0].mxu0
      %498 = vmatprep.mubr.bf16.mxu0 0
      %499 = vmatmul.mubr.bf16.gmra.mrb[0].mxu0 %v347
      %v500 = vpop.f32.mrb[0].mxu0
      %v501 = vadd.f32 0.0, %v500
      %v502 = vpop.f32.mrb[0].mxu0
      %v503 = vpop.f32.mrb[0].mxu0
      %v504 = vadd.f32 0.0, %v503
      %v505 = vpop.f32.mrb[0].mxu0
      %506 = vmatprep.mubr.bf16.mxu0 0
      %507 = vmatmul.mubr.bf16.gmra.mrb[0].mxu0 %v350
      %v508 = vpop.f32.mrb[0].mxu0
      %v509 = vadd.f32 0.0, %v508
      %v510 = vpop.f32.mrb[0].mxu0
      %v511 = vpop.f32.mrb[0].mxu0
      %v512 = vadd.f32 0.0, %v511
      %v513 = vpop.f32.mrb[0].mxu0
      %514 = vmatprep.mubr.bf16.mxu0 0
      %515 = vmatmul.mubr.bf16.gmra.mrb[0].mxu0 %v353
      %v516 = vpop.f32.mrb[0].mxu0
      %v517 = vadd.f32 0.0, %v516
      %v518 = vpop.f32.mrb[0].mxu0
      %v519 = vpop.f32.mrb[0].mxu0
      %v520 = vadd.f32 0.0, %v519
      %v521 = vpop.f32.mrb[0].mxu0
      %522 = vdwg.mxu0
      %v525 = vunpack.c.l.b16 %v295
      %v526 = vunpack.c.l.b16 %v296
      %v527 = vpack.c.b16 %v526, %v525
      %v529 = vsel %vm306, %v279, 0
      %v532 = vand.u32 %v527, %v358
      %534 = vmatprep.subr.bf16.mxu0 0
      %535 = vmatpush1.bf16.msra.mxu0 %v532
      %536 = vmatprep.subr.bf16.mxu0 0
      %537 = vmatpush1.bf16.msra.mxu0 0
      %538 = vmatprep.subr.bf16.mxu0 0
      %539 = vmatpush1.bf16.msra.mxu0 0
      %540 = vmatprep.subr.bf16.mxu0 0
      %541 = vmatpush1.bf16.msra.mxu0 0
      %542 = vmatprep.subr.bf16.mxu0 0
      %543 = vmatpush1.bf16.msra.mxu0 0
      %544 = vmatprep.subr.bf16.mxu0 0
      %545 = vmatpush1.bf16.msra.mxu0 0
      %546 = vmatprep.subr.bf16.mxu0 0
      %547 = vmatpush1.bf16.msra.mxu0 0
      %548 = vmatprep.subr.bf16.mxu0 0
      %549 = vmatpush1.bf16.msra.mxu0 0
      %550 = vmatprep.subr.bf16.mxu0 0
      %551 = vmatpush1.bf16.msra.mxu0 0
      %552 = vmatprep.subr.bf16.mxu0 0
      %553 = vmatpush1.bf16.msra.mxu0 0
      %554 = vmatprep.subr.bf16.mxu0 0
      %555 = vmatpush1.bf16.msra.mxu0 0
      %556 = vmatprep.subr.bf16.mxu0 0
      %557 = vmatpush1.bf16.msra.mxu0 0
      %558 = vmatprep.subr.bf16.mxu0 0
      %559 = vmatpush1.bf16.msra.mxu0 0
      %560 = vmatprep.subr.bf16.mxu0 0
      %561 = vmatpush1.bf16.msra.mxu0 0
      %562 = vmatprep.subr.bf16.mxu0 0
      %563 = vmatpush1.bf16.msra.mxu0 0
      %564 = vmatprep.subr.bf16.mxu0 0
      %565 = vmatpush1.bf16.msra.mxu0 0
      %566 = vmatprep.mubr.bf16.mxu0 0
      %567 = vmatmul.mubr.bf16.gmra.mrb[0].mxu0 %v529
      %v568 = vpop.f32.mrb[0].mxu0
      %v569 = vadd.f32 %v397, %v568
      %v570 = vpop.f32.mrb[0].mxu0
      %v571 = vpop.f32.mrb[0].mxu0
      %v572 = vadd.f32 %v400, %v571
      %v573 = vpop.f32.mrb[0].mxu0
      %574 = vmatprep.mubr.bf16.mxu0 0
      %575 = vmatmul.mubr.bf16.gmra.mrb[0].mxu0 %v308
      %v576 = vpop.f32.mrb[0].mxu0
      %v577 = vadd.f32 %v405, %v576
      %v578 = vpop.f32.mrb[0].mxu0
      %v579 = vpop.f32.mrb[0].mxu0
      %v580 = vadd.f32 %v408, %v579
      %v581 = vpop.f32.mrb[0].mxu0
      %582 = vmatprep.mubr.bf16.mxu0 0
      %583 = vmatmul.mubr.bf16.gmra.mrb[0].mxu0 %v311
      %v584 = vpop.f32.mrb[0].mxu0
      %v585 = vadd.f32 %v413, %v584
      %v586 = vpop.f32.mrb[0].mxu0
      %v587 = vpop.f32.mrb[0].mxu0
      %v588 = vadd.f32 %v416, %v587
      %v589 = vpop.f32.mrb[0].mxu0
      %590 = vmatprep.mubr.bf16.mxu0 0
      %591 = vmatmul.mubr.bf16.gmra.mrb[0].mxu0 %v314
      %v592 = vpop.f32.mrb[0].mxu0
      %v593 = vadd.f32 %v421, %v592
      %v594 = vpop.f32.mrb[0].mxu0
      %v595 = vpop.f32.mrb[0].mxu0
      %v596 = vadd.f32 %v424, %v595
      %v597 = vpop.f32.mrb[0].mxu0
      %598 = vmatprep.mubr.bf16.mxu0 0
      %599 = vmatmul.mubr.bf16.gmra.mrb[0].mxu0 %v317
      %v600 = vpop.f32.mrb[0].mxu0
      %v601 = vadd.f32 %v429, %v600
      %v602 = vpop.f32.mrb[0].mxu0
      %v603 = vpop.f32.mrb[0].mxu0
      %v604 = vadd.f32 %v432, %v603
      %v605 = vpop.f32.mrb[0].mxu0
      %606 = vmatprep.mubr.bf16.mxu0 0
      %607 = vmatmul.mubr.bf16.gmra.mrb[0].mxu0 %v320
      %v608 = vpop.f32.mrb[0].mxu0
      %v609 = vadd.f32 %v437, %v608
      %v610 = vpop.f32.mrb[0].mxu0
      %v611 = vpop.f32.mrb[0].mxu0
      %v612 = vadd.f32 %v440, %v611
      %v613 = vpop.f32.mrb[0].mxu0
      %614 = vmatprep.mubr.bf16.mxu0 0
      %615 = vmatmul.mubr.bf16.gmra.mrb[0].mxu0 %v323
      %v616 = vpop.f32.mrb[0].mxu0
      %v617 = vadd.f32 %v445, %v616
      %v618 = vpop.f32.mrb[0].mxu0
      %v619 = vpop.f32.mrb[0].mxu0
      %v620 = vadd.f32 %v448, %v619
      %v621 = vpop.f32.mrb[0].mxu0
      %622 = vmatprep.mubr.bf16.mxu0 0
      %623 = vmatmul.mubr.bf16.gmra.mrb[0].mxu0 %v326
      %v624 = vpop.f32.mrb[0].mxu0
      %v625 = vadd.f32 %v453, %v624
      %v626 = vpop.f32.mrb[0].mxu0
      %v627 = vpop.f32.mrb[0].mxu0
      %v628 = vadd.f32 %v456, %v627
      %v629 = vpop.f32.mrb[0].mxu0
      %630 = vmatprep.mubr.bf16.mxu0 0
      %631 = vmatmul.mubr.bf16.gmra.mrb[0].mxu0 %v329
      %v632 = vpop.f32.mrb[0].mxu0
      %v633 = vadd.f32 %v461, %v632
      %v634 = vpop.f32.mrb[0].mxu0
      %v635 = vpop.f32.mrb[0].mxu0
      %v636 = vadd.f32 %v464, %v635
      %v637 = vpop.f32.mrb[0].mxu0
      %638 = vmatprep.mubr.bf16.mxu0 0
      %639 = vmatmul.mubr.bf16.gmra.mrb[0].mxu0 %v332
      %v640 = vpop.f32.mrb[0].mxu0
      %v641 = vadd.f32 %v469, %v640
      %v642 = vpop.f32.mrb[0].mxu0
      %v643 = vpop.f32.mrb[0].mxu0
      %v644 = vadd.f32 %v472, %v643
      %v645 = vpop.f32.mrb[0].mxu0
      %646 = vmatprep.mubr.bf16.mxu0 0
      %647 = vmatmul.mubr.bf16.gmra.mrb[0].mxu0 %v335
      %v648 = vpop.f32.mrb[0].mxu0
      %v649 = vadd.f32 %v477, %v648
      %v650 = vpop.f32.mrb[0].mxu0
      %v651 = vpop.f32.mrb[0].mxu0
      %v652 = vadd.f32 %v480, %v651
      %v653 = vpop.f32.mrb[0].mxu0
      %654 = vmatprep.mubr.bf16.mxu0 0
      %655 = vmatmul.mubr.bf16.gmra.mrb[0].mxu0 %v338
      %v656 = vpop.f32.mrb[0].mxu0
      %v657 = vadd.f32 %v485, %v656
      %v658 = vpop.f32.mrb[0].mxu0
      %v659 = vpop.f32.mrb[0].mxu0
      %v660 = vadd.f32 %v488, %v659
      %v661 = vpop.f32.mrb[0].mxu0
      %662 = vmatprep.mubr.bf16.mxu0 0
      %663 = vmatmul.mubr.bf16.gmra.mrb[0].mxu0 %v341
      %v664 = vpop.f32.mrb[0].mxu0
      %v665 = vadd.f32 %v493, %v664
      %v666 = vpop.f32.mrb[0].mxu0
      %v667 = vpop.f32.mrb[0].mxu0
      %v668 = vadd.f32 %v496, %v667
      %v669 = vpop.f32.mrb[0].mxu0
      %670 = vmatprep.mubr.bf16.mxu0 0
      %671 = vmatmul.mubr.bf16.gmra.mrb[0].mxu0 %v344
      %v672 = vpop.f32.mrb[0].mxu0
      %v673 = vadd.f32 %v501, %v672
      %v674 = vpop.f32.mrb[0].mxu0
      %v675 = vpop.f32.mrb[0].mxu0
      %v676 = vadd.f32 %v504, %v675
      %v677 = vpop.f32.mrb[0].mxu0
      %678 = vmatprep.mubr.bf16.mxu0 0
      %679 = vmatmul.mubr.bf16.gmra.mrb[0].mxu0 %v347
      %v680 = vpop.f32.mrb[0].mxu0
      %v681 = vadd.f32 %v509, %v680
      %v682 = vpop.f32.mrb[0].mxu0
      %v683 = vpop.f32.mrb[0].mxu0
      %v684 = vadd.f32 %v512, %v683
      %v685 = vpop.f32.mrb[0].mxu0
      %686 = vmatprep.mubr.bf16.mxu0 0
      %687 = vmatmul.mubr.bf16.gmra.mrb[0].mxu0 %v350
      %v688 = vpop.f32.mrb[0].mxu0
      %v689 = vadd.f32 %v517, %v688
      %v690 = vpop.f32.mrb[0].mxu0
      %v691 = vpop.f32.mrb[0].mxu0
      %v692 = vadd.f32 %v520, %v691
      %v693 = vpop.f32.mrb[0].mxu0
      %694 = vdwg.mxu0
      %v695 = vpack.c.bf16 %v278, %v277
      %s696 = scalar_lea.vmem %s1, 16
      %v697 = vld [vmem:[%s696] sm:$0xf]
      %v698 = vld [vmem:[%s696 + $0x4] sm:$0x1]
      %v701 = vunpack.c.l.b16 %v697
      %v702 = vunpack.c.l.b16 %v698
      %v703 = vpack.c.b16 %v702, %v701
      %v705 = vsel %vm306, %v695, 0
      %v708 = vand.u32 %v703, %v358
      %710 = vmatprep.subr.bf16.mxu0 0
      %711 = vmatpush1.bf16.msra.mxu0 %v708
      %712 = vmatprep.subr.bf16.mxu0 0
      %713 = vmatpush1.bf16.msra.mxu0 0
      %714 = vmatprep.subr.bf16.mxu0 0
      %715 = vmatpush1.bf16.msra.mxu0 0
      %716 = vmatprep.subr.bf16.mxu0 0
      %717 = vmatpush1.bf16.msra.mxu0 0
      %718 = vmatprep.subr.bf16.mxu0 0
      %719 = vmatpush1.bf16.msra.mxu0 0
      %720 = vmatprep.subr.bf16.mxu0 0
      %721 = vmatpush1.bf16.msra.mxu0 0
      %722 = vmatprep.subr.bf16.mxu0 0
      %723 = vmatpush1.bf16.msra.mxu0 0
      %724 = vmatprep.subr.bf16.mxu0 0
      %725 = vmatpush1.bf16.msra.mxu0 0
      %726 = vmatprep.subr.bf16.mxu0 0
      %727 = vmatpush1.bf16.msra.mxu0 0
      %728 = vmatprep.subr.bf16.mxu0 0
      %729 = vmatpush1.bf16.msra.mxu0 0
      %730 = vmatprep.subr.bf16.mxu0 0
      %731 = vmatpush1.bf16.msra.mxu0 0
      %732 = vmatprep.subr.bf16.mxu0 0
      %733 = vmatpush1.bf16.msra.mxu0 0
      %734 = vmatprep.subr.bf16.mxu0 0
      %735 = vmatpush1.bf16.msra.mxu0 0
      %736 = vmatprep.subr.bf16.mxu0 0
      %737 = vmatpush1.bf16.msra.mxu0 0
      %738 = vmatprep.subr.bf16.mxu0 0
      %739 = vmatpush1.bf16.msra.mxu0 0
      %740 = vmatprep.subr.bf16.mxu0 0
      %741 = vmatpush1.bf16.msra.mxu0 0
      %742 = vmatprep.mubr.bf16.mxu0 0
      %743 = vmatmul.mubr.bf16.gmra.mrb[0].mxu0 %v311
      %v744 = vpop.f32.mrb[0].mxu0
      %v745 = vadd.f32 0.0, %v744
      %v746 = vpop.f32.mrb[0].mxu0
      %v747 = vpop.f32.mrb[0].mxu0
      %v748 = vadd.f32 0.0, %v747
      %v749 = vpop.f32.mrb[0].mxu0
      %750 = vmatprep.mubr.bf16.mxu0 0
      %751 = vmatmul.mubr.bf16.gmra.mrb[0].mxu0 %v314
      %v752 = vpop.f32.mrb[0].mxu0
      %v753 = vadd.f32 0.0, %v752
      %v754 = vpop.f32.mrb[0].mxu0
      %v755 = vpop.f32.mrb[0].mxu0
      %v756 = vadd.f32 0.0, %v755
      %v757 = vpop.f32.mrb[0].mxu0
      %758 = vmatprep.mubr.bf16.mxu0 0
      %759 = vmatmul.mubr.bf16.gmra.mrb[0].mxu0 %v317
      %v760 = vpop.f32.mrb[0].mxu0
      %v761 = vadd.f32 0.0, %v760
      %v762 = vpop.f32.mrb[0].mxu0
      %v763 = vpop.f32.mrb[0].mxu0
      %v764 = vadd.f32 0.0, %v763
      %v765 = vpop.f32.mrb[0].mxu0
      %766 = vmatprep.mubr.bf16.mxu0 0
      %767 = vmatmul.mubr.bf16.gmra.mrb[0].mxu0 %v320
      %v768 = vpop.f32.mrb[0].mxu0
      %v769 = vadd.f32 0.0, %v768
      %v770 = vpop.f32.mrb[0].mxu0
      %v771 = vpop.f32.mrb[0].mxu0
      %v772 = vadd.f32 0.0, %v771
      %v773 = vpop.f32.mrb[0].mxu0
      %774 = vmatprep.mubr.bf16.mxu0 0
      %775 = vmatmul.mubr.bf16.gmra.mrb[0].mxu0 %v323
      %v776 = vpop.f32.mrb[0].mxu0
      %v777 = vadd.f32 0.0, %v776
      %v778 = vpop.f32.mrb[0].mxu0
      %v779 = vpop.f32.mrb[0].mxu0
      %v780 = vadd.f32 0.0, %v779
      %v781 = vpop.f32.mrb[0].mxu0
      %782 = vmatprep.mubr.bf16.mxu0 0
      %783 = vmatmul.mubr.bf16.gmra.mrb[0].mxu0 %v326
      %v784 = vpop.f32.mrb[0].mxu0
      %v785 = vadd.f32 0.0, %v784
      %v786 = vpop.f32.mrb[0].mxu0
      %v787 = vpop.f32.mrb[0].mxu0
      %v788 = vadd.f32 0.0, %v787
      %v789 = vpop.f32.mrb[0].mxu0
      %790 = vmatprep.mubr.bf16.mxu0 0
      %791 = vmatmul.mubr.bf16.gmra.mrb[0].mxu0 %v329
      %v792 = vpop.f32.mrb[0].mxu0
      %v793 = vadd.f32 0.0, %v792
      %v794 = vpop.f32.mrb[0].mxu0
      %v795 = vpop.f32.mrb[0].mxu0
      %v796 = vadd.f32 0.0, %v795
      %v797 = vpop.f32.mrb[0].mxu0
      %798 = vmatprep.mubr.bf16.mxu0 0
      %799 = vmatmul.mubr.bf16.gmra.mrb[0].mxu0 %v332
      %v800 = vpop.f32.mrb[0].mxu0
      %v801 = vadd.f32 0.0, %v800
      %v802 = vpop.f32.mrb[0].mxu0
      %v803 = vpop.f32.mrb[0].mxu0
      %v804 = vadd.f32 0.0, %v803
      %v805 = vpop.f32.mrb[0].mxu0
      %806 = vmatprep.mubr.bf16.mxu0 0
      %807 = vmatmul.mubr.bf16.gmra.mrb[0].mxu0 %v335
      %v808 = vpop.f32.mrb[0].mxu0
      %v809 = vadd.f32 0.0, %v808
      %v810 = vpop.f32.mrb[0].mxu0
      %v811 = vpop.f32.mrb[0].mxu0
      %v812 = vadd.f32 0.0, %v811
      %v813 = vpop.f32.mrb[0].mxu0
      %814 = vmatprep.mubr.bf16.mxu0 0
      %815 = vmatmul.mubr.bf16.gmra.mrb[0].mxu0 %v338
      %v816 = vpop.f32.mrb[0].mxu0
      %v817 = vadd.f32 0.0, %v816
      %v818 = vpop.f32.mrb[0].mxu0
      %v819 = vpop.f32.mrb[0].mxu0
      %v820 = vadd.f32 0.0, %v819
      %v821 = vpop.f32.mrb[0].mxu0
      %822 = vmatprep.mubr.bf16.mxu0 0
      %823 = vmatmul.mubr.bf16.gmra.mrb[0].mxu0 %v341
      %v824 = vpop.f32.mrb[0].mxu0
      %v825 = vadd.f32 0.0, %v824
      %v826 = vpop.f32.mrb[0].mxu0
      %v827 = vpop.f32.mrb[0].mxu0
      %v828 = vadd.f32 0.0, %v827
      %v829 = vpop.f32.mrb[0].mxu0
      %830 = vmatprep.mubr.bf16.mxu0 0
      %831 = vmatmul.mubr.bf16.gmra.mrb[0].mxu0 %v344
      %v832 = vpop.f32.mrb[0].mxu0
      %v833 = vadd.f32 0.0, %v832
      %v834 = vpop.f32.mrb[0].mxu0
      %v835 = vpop.f32.mrb[0].mxu0
      %v836 = vadd.f32 0.0, %v835
      %v837 = vpop.f32.mrb[0].mxu0
      %838 = vmatprep.mubr.bf16.mxu0 0
      %839 = vmatmul.mubr.bf16.gmra.mrb[0].mxu0 %v347
      %v840 = vpop.f32.mrb[0].mxu0
      %v841 = vadd.f32 0.0, %v840
      %v842 = vpop.f32.mrb[0].mxu0
      %v843 = vpop.f32.mrb[0].mxu0
      %v844 = vadd.f32 0.0, %v843
      %v845 = vpop.f32.mrb[0].mxu0
      %846 = vmatprep.mubr.bf16.mxu0 0
      %847 = vmatmul.mubr.bf16.gmra.mrb[0].mxu0 %v350
      %v848 = vpop.f32.mrb[0].mxu0
      %v849 = vadd.f32 0.0, %v848
      %v850 = vpop.f32.mrb[0].mxu0
      %v851 = vpop.f32.mrb[0].mxu0
      %v852 = vadd.f32 0.0, %v851
      %v853 = vpop.f32.mrb[0].mxu0
      %854 = vmatprep.mubr.bf16.mxu0 0
      %855 = vmatmul.mubr.bf16.gmra.mrb[0].mxu0 %v353
      %v856 = vpop.f32.mrb[0].mxu0
      %v857 = vadd.f32 0.0, %v856
      %v858 = vpop.f32.mrb[0].mxu0
      %v859 = vpop.f32.mrb[0].mxu0
      %v860 = vadd.f32 0.0, %v859
      %v861 = vpop.f32.mrb[0].mxu0
      %862 = vmatprep.mubr.bf16.mxu0 0
      %863 = vmatmul.mubr.bf16.gmra.mrb[0].mxu0 %v705
      %v864 = vpop.f32.mrb[0].mxu0
      %v865 = vadd.f32 0.0, %v864
      %v866 = vpop.f32.mrb[0].mxu0
      %v867 = vpop.f32.mrb[0].mxu0
      %v868 = vadd.f32 0.0, %v867
      %v869 = vpop.f32.mrb[0].mxu0
      %870 = vdwg.mxu0
      %v871 = vadd.f32 %v569, %v745
      %v872 = vadd.f32 %v572, %v748
      %v873 = vadd.f32 %v577, %v753
      %v874 = vadd.f32 %v580, %v756
      %v875 = vadd.f32 %v585, %v761
      %v876 = vadd.f32 %v588, %v764
      %v877 = vadd.f32 %v593, %v769
      %v878 = vadd.f32 %v596, %v772
      %v879 = vadd.f32 %v601, %v777
      %v880 = vadd.f32 %v604, %v780
      %v881 = vadd.f32 %v609, %v785
      %v882 = vadd.f32 %v612, %v788
      %v883 = vadd.f32 %v617, %v793
      %v884 = vadd.f32 %v620, %v796
      %v885 = vadd.f32 %v625, %v801
      %v886 = vadd.f32 %v628, %v804
      %v887 = vadd.f32 %v633, %v809
      %v888 = vadd.f32 %v636, %v812
      %v889 = vadd.f32 %v641, %v817
      %v890 = vadd.f32 %v644, %v820
      %v891 = vadd.f32 %v649, %v825
      %v892 = vadd.f32 %v652, %v828
      %v893 = vadd.f32 %v657, %v833
      %v894 = vadd.f32 %v660, %v836
      %v895 = vadd.f32 %v665, %v841
      %v896 = vadd.f32 %v668, %v844
      %v897 = vadd.f32 %v673, %v849
      %v898 = vadd.f32 %v676, %v852
      %v899 = vadd.f32 %v681, %v857
      %v900 = vadd.f32 %v684, %v860
      %v901 = vadd.f32 %v689, %v865
      %v902 = vadd.f32 %v692, %v868
      %v903 = vld [vmem:[%s2] sm:$0x1]
      %v905 = vlaneseq
      %v906 = vshrl.u32 %v905, 7
      %v907 = vsub.s32 0, %v906
      %v908 = vrot.slane %v903, %v907
      %v910 = vadd.f32 %v871, %v908
      %v911 = vadd.f32 %v872, %v908
      %v912 = vadd.f32 %v873, %v908
      %v913 = vadd.f32 %v874, %v908
      %v914 = vadd.f32 %v875, %v908
      %v915 = vadd.f32 %v876, %v908
      %v916 = vadd.f32 %v877, %v908
      %v917 = vadd.f32 %v878, %v908
      %v918 = vadd.f32 %v879, %v908
      %v919 = vadd.f32 %v880, %v908
      %v920 = vadd.f32 %v881, %v908
      %v921 = vadd.f32 %v882, %v908
      %v922 = vadd.f32 %v883, %v908
      %v923 = vadd.f32 %v884, %v908
      %v924 = vadd.f32 %v885, %v908
      %v925 = vadd.f32 %v886, %v908
      %v926 = vadd.f32 %v887, %v908
      %v927 = vadd.f32 %v888, %v908
      %v928 = vadd.f32 %v889, %v908
      %v929 = vadd.f32 %v890, %v908
      %v930 = vadd.f32 %v891, %v908
      %v931 = vadd.f32 %v892, %v908
      %v932 = vadd.f32 %v893, %v908
      %v933 = vadd.f32 %v894, %v908
      %v934 = vadd.f32 %v895, %v908
      %v935 = vadd.f32 %v896, %v908
      %v936 = vadd.f32 %v897, %v908
      %v937 = vadd.f32 %v898, %v908
      %v938 = vadd.f32 %v899, %v908
      %v939 = vadd.f32 %v900, %v908
      %v940 = vadd.f32 %v901, %v908
      %v941 = vadd.f32 %v902, %v908
      %vm942 = vcmask 261120
      %943 = vst.msk [vmem:[%s235] sm:$0xff] %vm942, %v910
      %944 = vst.msk [vmem:[%s235 + $0x8] sm:$0xff] %vm942, %v911
      %945 = vst.msk [vmem:[%s235 + $0x10] sm:$0xff] %vm942, %v912
      %946 = vst.msk [vmem:[%s235 + $0x18] sm:$0xff] %vm942, %v913
      %947 = vst.msk [vmem:[%s235 + $0x20] sm:$0xff] %vm942, %v914
      %948 = vst.msk [vmem:[%s235 + $0x28] sm:$0xff] %vm942, %v915
      %949 = vst.msk [vmem:[%s235 + $0x30] sm:$0xff] %vm942, %v916
      %950 = vst.msk [vmem:[%s235 + $0x38] sm:$0xff] %vm942, %v917
      %951 = vst.msk [vmem:[%s235 + $0x40] sm:$0xff] %vm942, %v918
      %952 = vst.msk [vmem:[%s235 + $0x48] sm:$0xff] %vm942, %v919
      %953 = vst.msk [vmem:[%s235 + $0x50] sm:$0xff] %vm942, %v920
      %954 = vst.msk [vmem:[%s235 + $0x58] sm:$0xff] %vm942, %v921
      %955 = vst.msk [vmem:[%s235 + $0x60] sm:$0xff] %vm942, %v922
      %956 = vst.msk [vmem:[%s235 + $0x68] sm:$0xff] %vm942, %v923
      %957 = vst.msk [vmem:[%s235 + $0x70] sm:$0xff] %vm942, %v924
      %958 = vst.msk [vmem:[%s235 + $0x78] sm:$0xff] %vm942, %v925
      %959 = vst.msk [vmem:[%s235 + $0x80] sm:$0xff] %vm942, %v926
      %960 = vst.msk [vmem:[%s235 + $0x88] sm:$0xff] %vm942, %v927
      %961 = vst.msk [vmem:[%s235 + $0x90] sm:$0xff] %vm942, %v928
      %962 = vst.msk [vmem:[%s235 + $0x98] sm:$0xff] %vm942, %v929
      %963 = vst.msk [vmem:[%s235 + $0xa0] sm:$0xff] %vm942, %v930
      %964 = vst.msk [vmem:[%s235 + $0xa8] sm:$0xff] %vm942, %v931
      %965 = vst.msk [vmem:[%s235 + $0xb0] sm:$0xff] %vm942, %v932
      %966 = vst.msk [vmem:[%s235 + $0xb8] sm:$0xff] %vm942, %v933
      %967 = vst.msk [vmem:[%s235 + $0xc0] sm:$0xff] %vm942, %v934
      %968 = vst.msk [vmem:[%s235 + $0xc8] sm:$0xff] %vm942, %v935
      %969 = vst.msk [vmem:[%s235 + $0xd0] sm:$0xff] %vm942, %v936
      %970 = vst.msk [vmem:[%s235 + $0xd8] sm:$0xff] %vm942, %v937
      %971 = vst.msk [vmem:[%s235 + $0xe0] sm:$0xff] %vm942, %v938
      %972 = vst.msk [vmem:[%s235 + $0xe8] sm:$0xff] %vm942, %v939
      %973 = vst.msk [vmem:[%s235 + $0xf0] sm:$0xff] %vm942, %v940
      %974 = vst.msk [vmem:[%s235 + $0xf8] sm:$0xff] %vm942, %v941
      %v975 = vsel %vm942, %v910, 0.0
      %v976 = vsel %vm942, %v911, 0.0
      %v977 = vadd.f32 %v975, %v976
      %v978 = vsel %vm942, %v912, 0.0
      %v979 = vadd.f32 %v977, %v978
      %v980 = vsel %vm942, %v913, 0.0
      %v981 = vadd.f32 %v979, %v980
      %v982 = vsel %vm942, %v914, 0.0
      %v983 = vadd.f32 %v981, %v982
      %v984 = vsel %vm942, %v915, 0.0
      %v985 = vadd.f32 %v983, %v984
      %v986 = vsel %vm942, %v916, 0.0
      %v987 = vadd.f32 %v985, %v986
      %v988 = vsel %vm942, %v917, 0.0
      %v989 = vadd.f32 %v987, %v988
      %v990 = vsel %vm942, %v918, 0.0
      %v991 = vadd.f32 %v989, %v990
      %v992 = vsel %vm942, %v919, 0.0
      %v993 = vadd.f32 %v991, %v992
      %v994 = vsel %vm942, %v920, 0.0
      %v995 = vadd.f32 %v993, %v994
      %v996 = vsel %vm942, %v921, 0.0
      %v997 = vadd.f32 %v995, %v996
      %v998 = vsel %vm942, %v922, 0.0
      %v999 = vadd.f32 %v997, %v998
      %v1000 = vsel %vm942, %v923, 0.0
      %v1001 = vadd.f32 %v999, %v1000
      %v1002 = vsel %vm942, %v924, 0.0
      %v1003 = vadd.f32 %v1001, %v1002
      %v1004 = vsel %vm942, %v925, 0.0
      %v1005 = vadd.f32 %v1003, %v1004
      %v1006 = vsel %vm942, %v926, 0.0
      %v1007 = vadd.f32 %v1005, %v1006
      %v1008 = vsel %vm942, %v927, 0.0
      %v1009 = vadd.f32 %v1007, %v1008
      %v1010 = vsel %vm942, %v928, 0.0
      %v1011 = vadd.f32 %v1009, %v1010
      %v1012 = vsel %vm942, %v929, 0.0
      %v1013 = vadd.f32 %v1011, %v1012
      %v1014 = vsel %vm942, %v930, 0.0
      %v1015 = vadd.f32 %v1013, %v1014
      %v1016 = vsel %vm942, %v931, 0.0
      %v1017 = vadd.f32 %v1015, %v1016
      %v1018 = vsel %vm942, %v932, 0.0
      %v1019 = vadd.f32 %v1017, %v1018
      %v1020 = vsel %vm942, %v933, 0.0
      %v1021 = vadd.f32 %v1019, %v1020
      %v1022 = vsel %vm942, %v934, 0.0
      %v1023 = vadd.f32 %v1021, %v1022
      %v1024 = vsel %vm942, %v935, 0.0
      %v1025 = vadd.f32 %v1023, %v1024
      %v1026 = vsel %vm942, %v936, 0.0
      %v1027 = vadd.f32 %v1025, %v1026
      %v1028 = vsel %vm942, %v937, 0.0
      %v1029 = vadd.f32 %v1027, %v1028
      %v1030 = vsel %vm942, %v938, 0.0
      %v1031 = vadd.f32 %v1029, %v1030
      %v1032 = vsel %vm942, %v939, 0.0
      %v1033 = vadd.f32 %v1031, %v1032
      %v1034 = vsel %vm942, %v940, 0.0
      %v1035 = vadd.f32 %v1033, %v1034
      %v1036 = vsel %vm942, %v941, 0.0
      %v1037 = vadd.f32 %v1035, %v1036
      %v1038 = vrot.slane %v1037, 4
      %v1039 = vadd.f32 %v1037, %v1038
      %v1040 = vrot.slane %v1039, 2
      %v1041 = vadd.f32 %v1039, %v1040
      %v1042 = vrot.slane %v1041, 1
      %v1043 = vadd.f32 %v1041, %v1042
      %vm1044 = vcmask 253952
      %1045 = vst.msk [vmem:[%s238] sm:$0x1] %vm1044, %v1043
      %v1046 = vmul.f32 %v910, %v910
      %v1047 = vmul.f32 %v911, %v911
      %v1048 = vmul.f32 %v912, %v912
      %v1049 = vmul.f32 %v913, %v913
      %v1050 = vmul.f32 %v914, %v914
      %v1051 = vmul.f32 %v915, %v915
      %v1052 = vmul.f32 %v916, %v916
      %v1053 = vmul.f32 %v917, %v917
      %v1054 = vmul.f32 %v918, %v918
      %v1055 = vmul.f32 %v919, %v919
      %v1056 = vmul.f32 %v920, %v920
      %v1057 = vmul.f32 %v921, %v921
      %v1058 = vmul.f32 %v922, %v922
      %v1059 = vmul.f32 %v923, %v923
      %v1060 = vmul.f32 %v924, %v924
      %v1061 = vmul.f32 %v925, %v925
      %v1062 = vmul.f32 %v926, %v926
      %v1063 = vmul.f32 %v927, %v927
      %v1064 = vmul.f32 %v928, %v928
      %v1065 = vmul.f32 %v929, %v929
      %v1066 = vmul.f32 %v930, %v930
      %v1067 = vmul.f32 %v931, %v931
      %v1068 = vmul.f32 %v932, %v932
      %v1069 = vmul.f32 %v933, %v933
      %v1070 = vmul.f32 %v934, %v934
      %v1071 = vmul.f32 %v935, %v935
      %v1072 = vmul.f32 %v936, %v936
      %v1073 = vmul.f32 %v937, %v937
      %v1074 = vmul.f32 %v938, %v938
      %v1075 = vmul.f32 %v939, %v939
      %v1076 = vmul.f32 %v940, %v940
      %v1077 = vmul.f32 %v941, %v941
      %v1078 = vsel %vm942, %v1046, 0.0
      %v1079 = vsel %vm942, %v1047, 0.0
      %v1080 = vadd.f32 %v1078, %v1079
      %v1081 = vsel %vm942, %v1048, 0.0
      %v1082 = vadd.f32 %v1080, %v1081
      %v1083 = vsel %vm942, %v1049, 0.0
      %v1084 = vadd.f32 %v1082, %v1083
      %v1085 = vsel %vm942, %v1050, 0.0
      %v1086 = vadd.f32 %v1084, %v1085
      %v1087 = vsel %vm942, %v1051, 0.0
      %v1088 = vadd.f32 %v1086, %v1087
      %v1089 = vsel %vm942, %v1052, 0.0
      %v1090 = vadd.f32 %v1088, %v1089
      %v1091 = vsel %vm942, %v1053, 0.0
      %v1092 = vadd.f32 %v1090, %v1091
      %v1093 = vsel %vm942, %v1054, 0.0
      %v1094 = vadd.f32 %v1092, %v1093
      %v1095 = vsel %vm942, %v1055, 0.0
      %v1096 = vadd.f32 %v1094, %v1095
      %v1097 = vsel %vm942, %v1056, 0.0
      %v1098 = vadd.f32 %v1096, %v1097
      %v1099 = vsel %vm942, %v1057, 0.0
      %v1100 = vadd.f32 %v1098, %v1099
      %v1101 = vsel %vm942, %v1058, 0.0
      %v1102 = vadd.f32 %v1100, %v1101
      %v1103 = vsel %vm942, %v1059, 0.0
      %v1104 = vadd.f32 %v1102, %v1103
      %v1105 = vsel %vm942, %v1060, 0.0
      %v1106 = vadd.f32 %v1104, %v1105
      %v1107 = vsel %vm942, %v1061, 0.0
      %v1108 = vadd.f32 %v1106, %v1107
      %v1109 = vsel %vm942, %v1062, 0.0
      %v1110 = vadd.f32 %v1108, %v1109
      %v1111 = vsel %vm942, %v1063, 0.0
      %v1112 = vadd.f32 %v1110, %v1111
      %v1113 = vsel %vm942, %v1064, 0.0
      %v1114 = vadd.f32 %v1112, %v1113
      %v1115 = vsel %vm942, %v1065, 0.0
      %v1116 = vadd.f32 %v1114, %v1115
      %v1117 = vsel %vm942, %v1066, 0.0
      %v1118 = vadd.f32 %v1116, %v1117
      %v1119 = vsel %vm942, %v1067, 0.0
      %v1120 = vadd.f32 %v1118, %v1119
      %v1121 = vsel %vm942, %v1068, 0.0
      %v1122 = vadd.f32 %v1120, %v1121
      %v1123 = vsel %vm942, %v1069, 0.0
      %v1124 = vadd.f32 %v1122, %v1123
      %v1125 = vsel %vm942, %v1070, 0.0
      %v1126 = vadd.f32 %v1124, %v1125
      %v1127 = vsel %vm942, %v1071, 0.0
      %v1128 = vadd.f32 %v1126, %v1127
      %v1129 = vsel %vm942, %v1072, 0.0
      %v1130 = vadd.f32 %v1128, %v1129
      %v1131 = vsel %vm942, %v1073, 0.0
      %v1132 = vadd.f32 %v1130, %v1131
      %v1133 = vsel %vm942, %v1074, 0.0
      %v1134 = vadd.f32 %v1132, %v1133
      %v1135 = vsel %vm942, %v1075, 0.0
      %v1136 = vadd.f32 %v1134, %v1135
      %v1137 = vsel %vm942, %v1076, 0.0
      %v1138 = vadd.f32 %v1136, %v1137
      %v1139 = vsel %vm942, %v1077, 0.0
      %v1140 = vadd.f32 %v1138, %v1139
      %v1141 = vrot.slane %v1140, 4
      %v1142 = vadd.f32 %v1140, %v1141
      %v1143 = vrot.slane %v1142, 2
      %v1144 = vadd.f32 %v1142, %v1143
      %v1145 = vrot.slane %v1144, 1
      %v1146 = vadd.f32 %v1144, %v1145
      %1147 = vst.msk [vmem:[%s241] sm:$0x1] %vm1044, %v1146
      %p1148 = scmp.lt.s32.totalorder %s17, 1
      %s1149 = scalar_select %p1148, %s17, 1
      %s1150 = smul.addr %s1149, 32
      %s1151 = smul.addr %s1150, 8
      %s1152 = scalar_lea.vmem %s3, %s1151
      %p1153 = scmp.lt.s32.totalorder %s17, 1
      %s1154 = scalar_select %p1153, %s17, 1
      %s1155 = scalar_lea.vmem %s4, %s1154
      %p1156 = scmp.lt.s32.totalorder %s17, 1
      %s1157 = scalar_select %p1156, %s17, 1
      %s1158 = scalar_lea.vmem %s5, %s1157
      // Predicated region
      $region33: #{vgg_forward.8} parent=31 // pred_check
        %p1159 = pneg %p103
      $region34: #{vgg_forward.8} parent=31 // pred_check_branch
        %1161 = sbr.rel (%p1159) target = $region36
      $region35: #{vgg_forward.8} parent=31 // pred_region
        _
      $region36: #{vgg_forward.8} parent=31 // pred_fallthru
        _
      // Predicated region
      $region37: #{vgg_forward.8} parent=31 // pred_check
        %p1162 = pneg %p129
      $region38: #{vgg_forward.8} parent=31 // pred_check_branch
        %1164 = sbr.rel (%p1162) target = $region40
      $region39: #{vgg_forward.8} parent=31 // pred_region
        _
      $region40: #{vgg_forward.8} parent=31 // pred_fallthru
        _
      // Predicated region
      $region41: #{vgg_forward.8} parent=31 // pred_check
        %p1165 = pneg %p155
      $region42: #{vgg_forward.8} parent=31 // pred_check_branch
        %1167 = sbr.rel (%p1165) target = $region44
      $region43: #{vgg_forward.8} parent=31 // pred_region
        _
      $region44: #{vgg_forward.8} parent=31 // pred_fallthru
        _
    $region32: #{vgg_forward.8} parent=5 // pred_fallthru
      _
    %p1168 = scmp.le.s32.totalorder 2, %s12
    // Predicated region
    $region45: #{vgg_forward.8} parent=5 // pred_check
      %p1169 = pneg %p1168
    $region46: #{vgg_forward.8} parent=5 // pred_check_branch
      %1171 = sbr.rel (%p1169) target = $region48
    $region47: #{vgg_forward.8} parent=5 // pred_region
      %s1172 = ssub.s32 %s12, 2
      // Predicated region
      $region49: #{vgg_forward.8} parent=47 // pred_check
        %p1173 = pneg %p109
      $region50: #{vgg_forward.8} parent=47 // pred_check_branch
        %1175 = sbr.rel (%p1173) target = $region52
      $region51: #{vgg_forward.8} parent=47 // pred_region
        %p1176 = scmp.lt.s32.totalorder %s18, 1
        %s1177 = scalar_select %p1176, %s18, 1
        %s1178 = smul.addr %s1177, 32
        %s1179 = smul.addr %s1178, 8
        %s1180 = scalar_lea.vmem %s3, %s1179
      $region52: #{vgg_forward.8} parent=47 // pred_fallthru
        _
      // Predicated region
      $region53: #{vgg_forward.8} parent=47 // pred_check
        %p1181 = pneg %p135
      $region54: #{vgg_forward.8} parent=47 // pred_check_branch
        %1183 = sbr.rel (%p1181) target = $region56
      $region55: #{vgg_forward.8} parent=47 // pred_region
        %p1184 = scmp.lt.s32.totalorder %s18, 1
        %s1185 = scalar_select %p1184, %s18, 1
        %s1186 = scalar_lea.vmem %s4, %s1185
      $region56: #{vgg_forward.8} parent=47 // pred_fallthru
        _
      // Predicated region
      $region57: #{vgg_forward.8} parent=47 // pred_check
        %p1187 = pneg %p161
      $region58: #{vgg_forward.8} parent=47 // pred_check_branch
        %1189 = sbr.rel (%p1187) target = $region60
      $region59: #{vgg_forward.8} parent=47 // pred_region
        %p1190 = scmp.lt.s32.totalorder %s18, 1
        %s1191 = scalar_select %p1190, %s18, 1
        %s1192 = scalar_lea.vmem %s5, %s1191
      $region60: #{vgg_forward.8} parent=47 // pred_fallthru
        _
    $region48: #{vgg_forward.8} parent=5 // pred_fallthru
      _
  $region6: #{vgg_forward.8} parent=0 // loop_footer
    %s16 = sadd.s32 1, %s12
  $region7: #{vgg_forward.8} parent=0 // loop_footer_branch
    %11 = sbr.rel target = $region3
  $region8: #{vgg_forward.8} parent=0 // loop_exit
    _

// kernel: vgg_forward.11
$region0: #{vgg_forward.11}
  #allocation0 [shape = 'u32[]', space=smem, size = 0x4, offset = 0x4, fixed_abs, tag = 'smem constant byte address 0x4 - core index']
  #allocation1 [shape = 'u32[144,128]{1,0:T(1,128)}', space=vmem, size = 0x12000, scoped, tag = 'internal scratch']
  %s0 = inlined_call_operand.vmem [shape: f32[4,32,128], index: 0, kind: input, shape index: {}]
  %s1 = inlined_call_operand.vmem [shape: f32[1,128], index: 1, kind: input, shape index: {}]
  %s2 = inlined_call_operand.vmem [shape: f32[1,128], index: 2, kind: input, shape index: {}]
  %s3 = inlined_call_operand.vmem [shape: f32[32,128], index: 3, kind: output, shape index: {}]
  %s4 = sld [smem:[#allocation0]]
  $region83: #{vgg_forward.11} parent=0
    _
  %s6 = ssub.s32 1, %s4
  %s7 = scalar_select 0, %s6, %s4
  $region1: #{vgg_forward.11} parent=0
    #allocation2 [shape = 'u8[65536]{0}', space=vmem, size = 0x10000, scoped, tag = 'input window, operand 0']
    loop: start=0, step=1, limit=4
    $region2: #{vgg_forward.11} parent=1 // loop_pre_header
      _
    $region3: #{vgg_forward.11} parent=1 // loop_header
      %s9 = sphi 0, %s13
      %p10 = scmp.ge.s32.totalorder %s9, 4
      %s19 = sphi 0, %s21
      %s22 = sphi 0, %s19
      %s23 = sphi 0, %s22
      %s39 = sphi 0, %s23
      %s43 = sphi 0, %s43
      %s45 = sphi 0, %s43
      %s46 = sphi 0, %s45
      %s60 = sphi 0, %s46
      %s64 = sphi 0, %s64
      %s66 = sphi 0, %s64
      %s67 = sphi 0, %s66
      %s81 = sphi 0, %s67
      %s87 = sphi 0, %s89
      %s90 = sphi 0, %s87
      %s91 = sphi 0, %s90
      %s107 = sphi 0, %s91
    $region4: #{vgg_forward.11} parent=1 // loop_header_branch
      %12 = sbr.rel (%p10) target = $region8
    $region5: #{vgg_forward.11} parent=1 // loop_body
      %s14 = ssub.s32 %s9, 1
      %s15 = ssub.s32 %s9, 2
      %s16 = sadd.s32 %s9, 1
      %s17 = ssub.s32 %s9, %s16
      %p18 = scmp.eq.s32.totalorder %s17, 0
      %s20 = sadd.s32 %s19, 1
      %s21 = scalar_select %p18, %s19, %s20
      %p24 = pneg %p18
      %p25 = scmp.eq.s32.totalorder %s9, 1
      %p26 = por %p24, %p25
      %p27 = scmp.ne.s32.totalorder %s19, %s22
      %p28 = scmp.eq.s32.totalorder %s9, 0
      %p29 = por %p27, %p28
      %p30 = scmp.ne.s32.totalorder %s19, %s22
      %p31 = scmp.eq.s32.totalorder %s14, 1
      %p32 = por %p30, %p31
      %p33 = scmp.ne.s32.totalorder %s22, %s23
      %p34 = scmp.eq.s32.totalorder %s14, 0
      %p35 = por %p33, %p34
      %p36 = scmp.ne.s32.totalorder %s22, %s23
      %p37 = scmp.eq.s32.totalorder %s15, 1
      %p38 = por %p36, %p37
      %p40 = scmp.ne.s32.totalorder %s23, %s39
      %p41 = scmp.eq.s32.totalorder %s15, 0
      %p42 = por %p40, %p41
      %s44 = sadd.s32 %s43, 1
      %p47 = scmp.eq.s32.totalorder %s9, 1
      %p48 = scmp.ne.s32.totalorder %s43, %s45
      %p49 = scmp.eq.s32.totalorder %s9, 0
      %p50 = por %p48, %p49
      %p51 = scmp.ne.s32.totalorder %s43, %s45
      %p52 = scmp.eq.s32.totalorder %s14, 1
      %p53 = por %p51, %p52
      %p54 = scmp.ne.s32.totalorder %s45, %s46
      %p55 = scmp.eq.s32.totalorder %s14, 0
      %p56 = por %p54, %p55
      %p57 = scmp.ne.s32.totalorder %s45, %s46
      %p58 = scmp.eq.s32.totalorder %s15, 1
      %p59 = por %p57, %p58
      %p61 = scmp.ne.s32.totalorder %s46, %s60
      %p62 = scmp.eq.s32.totalorder %s15, 0
      %p63 = por %p61, %p62
      %s65 = sadd.s32 %s64, 1
      %p68 = scmp.eq.s32.totalorder %s9, 1
      %p69 = scmp.ne.s32.totalorder %s64, %s66
      %p70 = scmp.eq.s32.totalorder %s9, 0
      %p71 = por %p69, %p70
      %p72 = scmp.ne.s32.totalorder %s64, %s66
      %p73 = scmp.eq.s32.totalorder %s14, 1
      %p74 = por %p72, %p73
      %p75 = scmp.ne.s32.totalorder %s66, %s67
      %p76 = scmp.eq.s32.totalorder %s14, 0
      %p77 = por %p75, %p76
      %p78 = scmp.ne.s32.totalorder %s66, %s67
      %p79 = scmp.eq.s32.totalorder %s15, 1
      %p80 = por %p78, %p79
      %p82 = scmp.ne.s32.totalorder %s67, %s81
      %p83 = scmp.eq.s32.totalorder %s15, 0
      %p84 = por %p82, %p83
      %s85 = ssub.s32 %s9, %s16
      %p86 = scmp.eq.s32.totalorder %s85, 0
      %s88 = sadd.s32 %s87, 1
      %s89 = scalar_select %p86, %s87, %s88
      %p92 = pneg %p86
      %p93 = scmp.eq.s32.totalorder %s9, 1
      %p94 = por %p92, %p93
      %p95 = scmp.ne.s32.totalorder %s87, %s90
      %p96 = scmp.eq.s32.totalorder %s9, 0
      %p97 = por %p95, %p96
      %p98 = scmp.ne.s32.totalorder %s87, %s90
      %p99 = scmp.eq.s32.totalorder %s14, 1
      %p100 = por %p98, %p99
      %p101 = scmp.ne.s32.totalorder %s90, %s91
      %p102 = scmp.eq.s32.totalorder %s14, 0
      %p103 = por %p101, %p102
      %p104 = scmp.ne.s32.totalorder %s90, %s91
      %p105 = scmp.eq.s32.totalorder %s15, 1
      %p106 = por %p104, %p105
      %p108 = scmp.ne.s32.totalorder %s91, %s107
      %p109 = scmp.eq.s32.totalorder %s15, 0
      %p110 = por %p108, %p109
      %p111 = scmp.le.s32.totalorder 1, %s9
      %p112 = scmp.lt.s32.totalorder %s9, 3
      %p113 = pnand %p111, %p112
      %p114 = pneg %p113
      // Predicated region
      $region9: #{vgg_forward.11} parent=5 // pred_check
        _
      $region10: #{vgg_forward.11} parent=5 // pred_check_branch
        %116 = sbr.rel (%p113) target = $region12
      $region11: #{vgg_forward.11} parent=5 // pred_region
        %s117 = ssub.s32 %s9, 1
        // Predicated region
        $region13: #{vgg_forward.11} parent=11 // pred_check
          %p118 = pneg %p56
        $region14: #{vgg_forward.11} parent=11 // pred_check_branch
          %120 = sbr.rel (%p118) target = $region16
        $region15: #{vgg_forward.11} parent=11 // pred_region
          _
        $region16: #{vgg_forward.11} parent=11 // pred_fallthru
          _
        // Predicated region
        $region17: #{vgg_forward.11} parent=11 // pred_check
          %p121 = pneg %p77
        $region18: #{vgg_forward.11} parent=11 // pred_check_branch
          %123 = sbr.rel (%p121) target = $region20
        $region19: #{vgg_forward.11} parent=11 // pred_region
          _
        $region20: #{vgg_forward.11} parent=11 // pred_fallthru
          _
      $region12: #{vgg_forward.11} parent=5 // pred_fallthru
        _
      %p124 = scmp.lt.s32.totalorder %s9, 2
      // Predicated region
      $region21: #{vgg_forward.11} parent=5 // pred_check
        %p125 = pneg %p124
      $region22: #{vgg_forward.11} parent=5 // pred_check_branch
        %127 = sbr.rel (%p125) target = $region24
      $region23: #{vgg_forward.11} parent=5 // pred_region
        // Predicated region
        $region25: #{vgg_forward.11} parent=23 // pred_check
          %p128 = pneg %p29
        $region26: #{vgg_forward.11} parent=23 // pred_check_branch
          %130 = sbr.rel (%p128) target = $region28
        $region27: #{vgg_forward.11} parent=23 // pred_region
          %s131 = sand.u32 %s19, 1
          %s132 = sand.u32 %s19, 1
          %s133 = smul.addr %s132, 64
          %s134 = scalar_lea.vmem [#allocation2], %s133
          %s135 = smul.u32 2, %s9
          %s136 = smul.addr %s135, 8
          %s137 = scalar_lea.vmem %s0, %s136
          // Predicated region
          $region29: #{vgg_forward.11} parent=27 // pred_check
            _
          $region30: #{vgg_forward.11} parent=27 // pred_check_branch
            %139 = sbr.rel (0) target = $region32
          $region31: #{vgg_forward.11} parent=27 // pred_region
            // Predicated region
            $region33: #{vgg_forward.11} parent=31 // pred_check
              _
            $region34: #{vgg_forward.11} parent=31 // pred_check_branch
              %141 = sbr.rel (0) target = $region36
            $region35: #{vgg_forward.11} parent=31 // pred_region
              // Predicated region
              $region48: #{vgg_forward.11} parent=35 // pred_check
                _
              $region49: #{vgg_forward.11} parent=35 // pred_check_branch
                %170 = sbr.rel (0) target = $region51
              $region50: #{vgg_forward.11} parent=35 // pred_region
                loop: start=0, step=1, limit=1
                $region52: #{vgg_forward.11} parent=50 // loop_pre_header
                  _
                $region53: #{vgg_forward.11} parent=50 // loop_header
                  %s172 = sphi 0, %s176
                  %p173 = scmp.ge.s32.totalorder %s172, 1
                  %s177 = sphi %s137, %s137
                  %s178 = sphi %s134, %s134
                $region54: #{vgg_forward.11} parent=50 // loop_header_branch
                  %175 = sbr.rel (%p173) target = $region58
                $region55: #{vgg_forward.11} parent=50 // loop_body
                  %v179 = vld [vmem:[%s177] sm:$0xff]
                  %180 = vst [vmem:[%s178] sm:$0xff] %v179
                  %v181 = vld [vmem:[%s177 + $0x8] sm:$0xff]
                  %182 = vst [vmem:[%s178 + $0x8] sm:$0xff] %v181
                  %v183 = vld [vmem:[%s177 + $0x20] sm:$0xff]
                  %184 = vst [vmem:[%s178 + $0x10] sm:$0xff] %v183
                  %v185 = vld [vmem:[%s177 + $0x28] sm:$0xff]
                  %186 = vst [vmem:[%s178 + $0x18] sm:$0xff] %v185
                  %v187 = vld [vmem:[%s177 + $0x40] sm:$0xff]
                  %188 = vst [vmem:[%s178 + $0x20] sm:$0xff] %v187
                  %v189 = vld [vmem:[%s177 + $0x48] sm:$0xff]
                  %190 = vst [vmem:[%s178 + $0x28] sm:$0xff] %v189
                  %v191 = vld [vmem:[%s177 + $0x60] sm:$0xff]
                  %192 = vst [vmem:[%s178 + $0x30] sm:$0xff] %v191
                  %v193 = vld [vmem:[%s177 + $0x68] sm:$0xff]
                  %194 = vst [vmem:[%s178 + $0x38] sm:$0xff] %v193
                $region56: #{vgg_forward.11} parent=50 // loop_footer
                  %s176 = sadd.s32 1, %s172
                $region57: #{vgg_forward.11} parent=50 // loop_footer_branch
                  %171 = sbr.rel target = $region53
                $region58: #{vgg_forward.11} parent=50 // loop_exit
                  _
              $region51: #{vgg_forward.11} parent=35 // pred_fallthru
                _
              // Predicated region
              $region59: #{vgg_forward.11} parent=35 // pred_check
                _
              $region60: #{vgg_forward.11} parent=35 // pred_check_branch
                %196 = sbr.rel target = $region62
              $region61: #{vgg_forward.11} parent=35 // pred_region
                _
              $region62: #{vgg_forward.11} parent=35 // pred_fallthru
                _
            $region36: #{vgg_forward.11} parent=31 // pred_fallthru
              _
            // Predicated region
            $region37: #{vgg_forward.11} parent=31 // pred_check
              _
            $region38: #{vgg_forward.11} parent=31 // pred_check_branch
              %143 = sbr.rel target = $region40
            $region39: #{vgg_forward.11} parent=31 // pred_region
              loop: start=0, step=1, limit=1
              $region41: #{vgg_forward.11} parent=39 // loop_pre_header
                _
              $region42: #{vgg_forward.11} parent=39 // loop_header
                %s146 = sphi 0, %s150
                %p147 = scmp.ge.s32.totalorder %s146, 1
                %s151 = sphi %s137, %s137
                %s152 = sphi %s134, %s134
              $region43: #{vgg_forward.11} parent=39 // loop_header_branch
                %149 = sbr.rel (%p147) target = $region47
              $region44: #{vgg_forward.11} parent=39 // loop_body
                %v153 = vld [vmem:[%s151] sm:$0xff]
                %154 = vst [vmem:[%s152] sm:$0xff] %v153
                %v155 = vld [vmem:[%s151 + $0x8] sm:$0xff]
                %156 = vst [vmem:[%s152 + $0x8] sm:$0xff] %v155
                %v157 = vld [vmem:[%s151 + $0x20] sm:$0xff]
                %158 = vst [vmem:[%s152 + $0x10] sm:$0xff] %v157
                %v159 = vld [vmem:[%s151 + $0x28] sm:$0xff]
                %160 = vst [vmem:[%s152 + $0x18] sm:$0xff] %v159
                %v161 = vld [vmem:[%s151 + $0x40] sm:$0xff]
                %162 = vst [vmem:[%s152 + $0x20] sm:$0xff] %v161
                %v163 = vld [vmem:[%s151 + $0x48] sm:$0xff]
                %164 = vst [vmem:[%s152 + $0x28] sm:$0xff] %v163
                %v165 = vld [vmem:[%s151 + $0x60] sm:$0xff]
                %166 = vst [vmem:[%s152 + $0x30] sm:$0xff] %v165
                %v167 = vld [vmem:[%s151 + $0x68] sm:$0xff]
                %168 = vst [vmem:[%s152 + $0x38] sm:$0xff] %v167
              $region45: #{vgg_forward.11} parent=39 // loop_footer
                %s150 = sadd.s32 1, %s146
              $region46: #{vgg_forward.11} parent=39 // loop_footer_branch
                %145 = sbr.rel target = $region42
              $region47: #{vgg_forward.11} parent=39 // loop_exit
                _
            $region40: #{vgg_forward.11} parent=31 // pred_fallthru
              _
          $region32: #{vgg_forward.11} parent=27 // pred_fallthru
            _
          %197 = vnop
        $region28: #{vgg_forward.11} parent=23 // pred_fallthru
          _
      $region24: #{vgg_forward.11} parent=5 // pred_fallthru
        _
      %p198 = scmp.le.s32.totalorder 1, %s9
      %p199 = scmp.lt.s32.totalorder %s9, 3
      %p200 = pnand %p198, %p199
      %p201 = pneg %p200
      // Predicated region
      $region63: #{vgg_forward.11} parent=5 // pred_check
        _
      $region64: #{vgg_forward.11} parent=5 // pred_check_branch
        %203 = sbr.rel (%p200) target = $region66
      $region65: #{vgg_forward.11} parent=5 // pred_region
        %s204 = ssub.s32 %s9, 1
        %s205 = sand.u32 %s22, 1
        %s206 = sand.u32 %s22, 1
        %s207 = smul.addr %s206, 64
        %s208 = scalar_lea.vmem [#allocation2], %s207
        // Predicated region
        $region67: #{vgg_forward.11} parent=65 // pred_check
          %p209 = pneg %p35
        $region68: #{vgg_forward.11} parent=65 // pred_check_branch
          %211 = sbr.rel (%p209) target = $region70
        $region69: #{vgg_forward.11} parent=65 // pred_region
          _
        $region70: #{vgg_forward.11} parent=65 // pred_fallthru
          _
        %s212 = sand.u32 %s22, 1
        %s213 = sand.u32 %s22, 1
        %s214 = smul.addr %s213, 64
        %s215 = scalar_lea.vmem [#allocation2], %s214
        %p216 = pneg %p35
        %p217 = pneg %p32
        %p218 = pneg %p56
        %p219 = pneg %p53
        %p220 = pneg %p77
        %p221 = pneg %p74
        %p222 = pneg %p103
        %p223 = pneg %p100
        %s224 = smul.u32 2, %s14
        %p225 = scmp.lt.s32.totalorder %s224, 3
        %s226 = scalar_select %p225, %s224, 3
        %s227 = smul.addr %s226, 8
        %s228 = scalar_lea.vmem %s3, %s227
        %s229 = smul.u32 2, %s14
        %s230 = smul.u32 2, %s14
        %p231 = scmp.lt.s32.totalorder %s230, 3
        %s232 = scalar_select %p231, %s230, 3
        %s233 = smul.addr %s232, 8
        %s234 = scalar_lea.vmem %s3, %s233
        %s235 = smul.u32 2, %s14
        %v236 = vld [vmem:[%s208] sm:$0xff]
        %v237 = vld [vmem:[%s208 + $0x8] sm:$0xff]
        %v238 = vld [vmem:[%s208 + $0x10] sm:$0xff]
        %v239 = vld [vmem:[%s208 + $0x18] sm:$0xff]
        %v240 = vld [vmem:[%s208 + $0x20] sm:$0xff]
        %v241 = vld [vmem:[%s208 + $0x28] sm:$0xff]
        %v242 = vld [vmem:[%s208 + $0x30] sm:$0xff]
        %v243 = vld [vmem:[%s208 + $0x38] sm:$0xff]
        %v244 = vld [vmem:[%s1] sm:$0x1]
        %v246 = vlaneseq
        %v247 = vshrl.u32 %v246, 7
        %v248 = vsub.s32 0, %v247
        %v249 = vrot.slane %v244, %v248
        %v251 = vmul.f32 %v236, %v249
        %v252 = vmul.f32 %v237, %v249
        %v253 = vmul.f32 %v238, %v249
        %v254 = vmul.f32 %v239, %v249
        %v255 = vmul.f32 %v240, %v249
        %v256 = vmul.f32 %v241, %v249
        %v257 = vmul.f32 %v242, %v249
        %v258 = vmul.f32 %v243, %v249
        %v259 = vld [vmem:[%s2] sm:$0x1]
        %v261 = vlaneseq
        %v262 = vshrl.u32 %v261, 7
        %v263 = vsub.s32 0, %v262
        %v264 = vrot.slane %v259, %v263
        %v266 = vadd.f32 %v251, %v264
        %v267 = vadd.f32 %v252, %v264
        %v268 = vadd.f32 %v253, %v264
        %v269 = vadd.f32 %v254, %v264
        %v270 = vadd.f32 %v255, %v264
        %v271 = vadd.f32 %v256, %v264
        %v272 = vadd.f32 %v257, %v264
        %v273 = vadd.f32 %v258, %v264
        %v274 = vmax.f32 %v266, %v270
        %v275 = vmax.f32 %v268, %v272
        %v276 = vmax.f32 %v274, %v275
        %v277 = vmax.f32 %v267, %v271
        %v278 = vmax.f32 %v269, %v273
        %v279 = vmax.f32 %v277, %v278
        %v280 = vtanh.pop %v276
        %v281 = vtanh.pop %v279
        %282 = vst [vmem:[%s234] sm:$0xff] %v280
        %283 = vst [vmem:[%s234 + $0x8] sm:$0xff] %v281
        %s284 = smul.u32 2, %s14
        %p285 = scmp.lt.s32.totalorder %s284, 3
        %s286 = scalar_select %p285, %s284, 3
        %s287 = smul.addr %s286, 8
        %s288 = scalar_lea.vmem %s3, %s287
        // Predicated region
        $region71: #{vgg_forward.11} parent=65 // pred_check
          %p289 = pneg %p100
        $region72: #{vgg_forward.11} parent=65 // pred_check_branch
          %291 = sbr.rel (%p289) target = $region74
        $region73: #{vgg_forward.11} parent=65 // pred_region
          %s292 = smul.u32 2, %s14
        $region74: #{vgg_forward.11} parent=65 // pred_fallthru
          _
      $region66: #{vgg_forward.11} parent=5 // pred_fallthru
        _
      %p293 = scmp.le.s32.totalorder 2, %s9
      // Predicated region
      $region75: #{vgg_forward.11} parent=5 // pred_check
        %p294 = pneg %p293
      $region76: #{vgg_forward.11} parent=5 // pred_check_branch
        %296 = sbr.rel (%p294) target = $region78
      $region77: #{vgg_forward.11} parent=5 // pred_region
        %s297 = ssub.s32 %s9, 2
        // Predicated region
        $region79: #{vgg_forward.11} parent=77 // pred_check
          %p298 = pneg %p106
        $region80: #{vgg_forward.11} parent=77 // pred_check_branch
          %300 = sbr.rel (%p298) target = $region82
        $region81: #{vgg_forward.11} parent=77 // pred_region
          %s301 = smul.u32 2, %s15
          %p302 = scmp.lt.s32.totalorder %s301, 3
          %s303 = scalar_select %p302, %s301, 3
          %s304 = smul.addr %s303, 8
          %s305 = scalar_lea.vmem %s3, %s304
        $region82: #{vgg_forward.11} parent=77 // pred_fallthru
          _
      $region78: #{vgg_forward.11} parent=5 // pred_fallthru
        _
    $region6: #{vgg_forward.11} parent=1 // loop_footer
      %s13 = sadd.s32 1, %s9
    $region7: #{vgg_forward.11} parent=1 // loop_footer_branch
      %8 = sbr.rel target = $region3
    $region8: #{vgg_forward.11} parent=1 // loop_exit
      _

// kernel: vgg_forward.10
$region0: #{vgg_forward.10}
  #allocation0 [shape = 'u32[]', space=smem, size = 0x4, offset = 0x4, fixed_abs, tag = 'smem constant byte address 0x4 - core index']
  #allocation1 [shape = 'u32[144,128]{1,0:T(1,128)}', space=vmem, size = 0x12000, scoped, tag = 'internal scratch']
  %s0 = inlined_call_operand.vmem [shape: f32[2,18,16,96], index: 0, kind: input, shape index: {}]
  %s1 = inlined_call_operand.vmem [shape: bf16[3,96,32], index: 1, kind: input, shape index: {}]
  %s2 = inlined_call_operand.vmem [shape: f32[1,32], index: 2, kind: input, shape index: {}]
  %s3 = inlined_call_operand.vmem [shape: f32[2,256,32], index: 3, kind: output, shape index: {0}]
  %s4 = inlined_call_operand.vmem [shape: f32[2,1,32], index: 4, kind: output, shape index: {1}]
  %s5 = inlined_call_operand.vmem [shape: f32[2,1,32], index: 5, kind: output, shape index: {2}]
  %6 = xla_tuple %s3, %s4, %s5
  %s7 = sld [smem:[#allocation0]]
  $region61: #{vgg_forward.10} parent=0
    _
  %s9 = ssub.s32 1, %s7
  %s10 = scalar_select 0, %s9, %s7
  loop: start=0, step=1, limit=4
  $region2: #{vgg_forward.10} parent=0 // loop_pre_header
    _
  $region3: #{vgg_forward.10} parent=0 // loop_header
    %s12 = sphi 0, %s16
    %p13 = scmp.ge.s32.totalorder %s12, 4
    %s22 = sphi 0, %s24
    %s25 = sphi 0, %s22
    %s26 = sphi 0, %s25
    %s42 = sphi 0, %s26
    %s46 = sphi 0, %s46
    %s48 = sphi 0, %s46
    %s49 = sphi 0, %s48
    %s63 = sphi 0, %s49
    %s67 = sphi 0, %s67
    %s69 = sphi 0, %s67
    %s70 = sphi 0, %s69
    %s84 = sphi 0, %s70
    %s90 = sphi 0, %s92
    %s93 = sphi 0, %s90
    %s94 = sphi 0, %s93
    %s110 = sphi 0, %s94
    %s116 = sphi 0, %s118
    %s119 = sphi 0, %s116
    %s120 = sphi 0, %s119
    %s136 = sphi 0, %s120
    %s142 = sphi 0, %s144
    %s145 = sphi 0, %s142
    %s146 = sphi 0, %s145
    %s162 = sphi 0, %s146
  $region4: #{vgg_forward.10} parent=0 // loop_header_branch
    %15 = sbr.rel (%p13) target = $region8
  $region5: #{vgg_forward.10} parent=0 // loop_body
    %s17 = ssub.s32 %s12, 1
    %s18 = ssub.s32 %s12, 2
    %s19 = sadd.s32 %s12, 1
    %s20 = ssub.s32 %s12, %s19
    %p21 = scmp.eq.s32.totalorder %s20, 0
    %s23 = sadd.s32 %s22, 1
    %s24 = scalar_select %p21, %s22, %s23
    %p27 = pneg %p21
    %p28 = scmp.eq.s32.totalorder %s12, 1
    %p29 = por %p27, %p28
    %p30 = scmp.ne.s32.totalorder %s22, %s25
    %p31 = scmp.eq.s32.totalorder %s12, 0
    %p32 = por %p30, %p31
    %p33 = scmp.ne.s32.totalorder %s22, %s25
    %p34 = scmp.eq.s32.totalorder %s17, 1
    %p35 = por %p33, %p34
    %p36 = scmp.ne.s32.totalorder %s25, %s26
    %p37 = scmp.eq.s32.totalorder %s17, 0
    %p38 = por %p36, %p37
    %p39 = scmp.ne.s32.totalorder %s25, %s26
    %p40 = scmp.eq.s32.totalorder %s18, 1
    %p41 = por %p39, %p40
    %p43 = scmp.ne.s32.totalorder %s26, %s42
    %p44 = scmp.eq.s32.totalorder %s18, 0
    %p45 = por %p43, %p44
    %s47 = sadd.s32 %s46, 1
    %p50 = scmp.eq.s32.totalorder %s12, 1
    %p51 = scmp.ne.s32.totalorder %s46, %s48
    %p52 = scmp.eq.s32.totalorder %s12, 0
    %p53 = por %p51, %p52
    %p54 = scmp.ne.s32.totalorder %s46, %s48
    %p55 = scmp.eq.s32.totalorder %s17, 1
    %p56 = por %p54, %p55
    %p57 = scmp.ne.s32.totalorder %s48, %s49
    %p58 = scmp.eq.s32.totalorder %s17, 0
    %p59 = por %p57, %p58
    %p60 = scmp.ne.s32.totalorder %s48, %s49
    %p61 = scmp.eq.s32.totalorder %s18, 1
    %p62 = por %p60, %p61
    %p64 = scmp.ne.s32.totalorder %s49, %s63
    %p65 = scmp.eq.s32.totalorder %s18, 0
    %p66 = por %p64, %p65
    %s68 = sadd.s32 %s67, 1
    %p71 = scmp.eq.s32.totalorder %s12, 1
    %p72 = scmp.ne.s32.totalorder %s67, %s69
    %p73 = scmp.eq.s32.totalorder %s12, 0
    %p74 = por %p72, %p73
    %p75 = scmp.ne.s32.totalorder %s67, %s69
    %p76 = scmp.eq.s32.totalorder %s17, 1
    %p77 = por %p75, %p76
    %p78 = scmp.ne.s32.totalorder %s69, %s70
    %p79 = scmp.eq.s32.totalorder %s17, 0
    %p80 = por %p78, %p79
    %p81 = scmp.ne.s32.totalorder %s69, %s70
    %p82 = scmp.eq.s32.totalorder %s18, 1
    %p83 = por %p81, %p82
    %p85 = scmp.ne.s32.totalorder %s70, %s84
    %p86 = scmp.eq.s32.totalorder %s18, 0
    %p87 = por %p85, %p86
    %s88 = ssub.s32 %s12, %s19
    %p89 = scmp.eq.s32.totalorder %s88, 0
    %s91 = sadd.s32 %s90, 1
    %s92 = scalar_select %p89, %s90, %s91
    %p95 = pneg %p89
    %p96 = scmp.eq.s32.totalorder %s12, 1
    %p97 = por %p95, %p96
    %p98 = scmp.ne.s32.totalorder %s90, %s93
    %p99 = scmp.eq.s32.totalorder %s12, 0
    %p100 = por %p98, %p99
    %p101 = scmp.ne.s32.totalorder %s90, %s93
    %p102 = scmp.eq.s32.totalorder %s17, 1
    %p103 = por %p101, %p102
    %p104 = scmp.ne.s32.totalorder %s93, %s94
    %p105 = scmp.eq.s32.totalorder %s17, 0
    %p106 = por %p104, %p105
    %p107 = scmp.ne.s32.totalorder %s93, %s94
    %p108 = scmp.eq.s32.totalorder %s18, 1
    %p109 = por %p107, %p108
    %p111 = scmp.ne.s32.totalorder %s94, %s110
    %p112 = scmp.eq.s32.totalorder %s18, 0
    %p113 = por %p111, %p112
    %s114 = ssub.s32 %s12, %s19
    %p115 = scmp.eq.s32.totalorder %s114, 0
    %s117 = sadd.s32 %s116, 1
    %s118 = scalar_select %p115, %s116, %s117
    %p121 = pneg %p115
    %p122 = scmp.eq.s32.totalorder %s12, 1
    %p123 = por %p121, %p122
    %p124 = scmp.ne.s32.totalorder %s116, %s119
    %p125 = scmp.eq.s32.totalorder %s12, 0
    %p126 = por %p124, %p125
    %p127 = scmp.ne.s32.totalorder %s116, %s119
    %p128 = scmp.eq.s32.totalorder %s17, 1
    %p129 = por %p127, %p128
    %p130 = scmp.ne.s32.totalorder %s119, %s120
    %p131 = scmp.eq.s32.totalorder %s17, 0
    %p132 = por %p130, %p131
    %p133 = scmp.ne.s32.totalorder %s119, %s120
    %p134 = scmp.eq.s32.totalorder %s18, 1
    %p135 = por %p133, %p134
    %p137 = scmp.ne.s32.totalorder %s120, %s136
    %p138 = scmp.eq.s32.totalorder %s18, 0
    %p139 = por %p137, %p138
    %s140 = ssub.s32 %s12, %s19
    %p141 = scmp.eq.s32.totalorder %s140, 0
    %s143 = sadd.s32 %s142, 1
    %s144 = scalar_select %p141, %s142, %s143
    %p147 = pneg %p141
    %p148 = scmp.eq.s32.totalorder %s12, 1
    %p149 = por %p147, %p148
    %p150 = scmp.ne.s32.totalorder %s142, %s145
    %p151 = scmp.eq.s32.totalorder %s12, 0
    %p152 = por %p150, %p151
    %p153 = scmp.ne.s32.totalorder %s142, %s145
    %p154 = scmp.eq.s32.totalorder %s17, 1
    %p155 = por %p153, %p154
    %p156 = scmp.ne.s32.totalorder %s145, %s146
    %p157 = scmp.eq.s32.totalorder %s17, 0
    %p158 = por %p156, %p157
    %p159 = scmp.ne.s32.totalorder %s145, %s146
    %p160 = scmp.eq.s32.totalorder %s18, 1
    %p161 = por %p159, %p160
    %p163 = scmp.ne.s32.totalorder %s146, %s162
    %p164 = scmp.eq.s32.totalorder %s18, 0
    %p165 = por %p163, %p164
    %p166 = scmp.le.s32.totalorder 1, %s12
    %p167 = scmp.lt.s32.totalorder %s12, 3
    %p168 = pnand %p166, %p167
    %p169 = pneg %p168
    // Predicated region
    $region9: #{vgg_forward.10} parent=5 // pred_check
      _
    $region10: #{vgg_forward.10} parent=5 // pred_check_branch
      %171 = sbr.rel (%p168) target = $region12
    $region11: #{vgg_forward.10} parent=5 // pred_region
      %s172 = ssub.s32 %s12, 1
      // Predicated region
      $region13: #{vgg_forward.10} parent=11 // pred_check
        %p173 = pneg %p59
      $region14: #{vgg_forward.10} parent=11 // pred_check_branch
        %175 = sbr.rel (%p173) target = $region16
      $region15: #{vgg_forward.10} parent=11 // pred_region
        _
      $region16: #{vgg_forward.10} parent=11 // pred_fallthru
        _
      // Predicated region
      $region17: #{vgg_forward.10} parent=11 // pred_check
        %p176 = pneg %p80
      $region18: #{vgg_forward.10} parent=11 // pred_check_branch
        %178 = sbr.rel (%p176) target = $region20
      $region19: #{vgg_forward.10} parent=11 // pred_region
        _
      $region20: #{vgg_forward.10} parent=11 // pred_fallthru
        _
    $region12: #{vgg_forward.10} parent=5 // pred_fallthru
      _
    %p179 = scmp.lt.s32.totalorder %s12, 2
    // Predicated region
    $region21: #{vgg_forward.10} parent=5 // pred_check
      %p180 = pneg %p179
    $region22: #{vgg_forward.10} parent=5 // pred_check_branch
      %182 = sbr.rel (%p180) target = $region24
    $region23: #{vgg_forward.10} parent=5 // pred_region
      // Predicated region
      $region25: #{vgg_forward.10} parent=23 // pred_check
        %p183 = pneg %p32
      $region26: #{vgg_forward.10} parent=23 // pred_check_branch
        %185 = sbr.rel (%p183) target = $region28
      $region27: #{vgg_forward.10} parent=23 // pred_region
        %p186 = scmp.lt.s32.totalorder %s12, 1
        %s187 = scalar_select %p186, %s12, 1
        %s188 = smul.addr %s187, 36
        %s189 = smul.addr %s188, 8
        %s190 = scalar_lea.vmem %s0, %s189
      $region28: #{vgg_forward.10} parent=23 // pred_fallthru
        _
    $region24: #{vgg_forward.10} parent=5 // pred_fallthru
      _
    %p191 = scmp.le.s32.totalorder 1, %s12
    %p192 = scmp.lt.s32.totalorder %s12, 3
    %p193 = pnand %p191, %p192
    %p194 = pneg %p193
    // Predicated region
    $region29: #{vgg_forward.10} parent=5 // pred_check
      _
    $region30: #{vgg_forward.10} parent=5 // pred_check_branch
      %196 = sbr.rel (%p193) target = $region32
    $region31: #{vgg_forward.10} parent=5 // pred_region
      %s197 = ssub.s32 %s12, 1
      %p198 = scmp.lt.s32.totalorder %s17, 1
      %s199 = scalar_select %p198, %s17, 1
      %s200 = smul.addr %s199, 36
      %s201 = smul.addr %s200, 8
      %s202 = scalar_lea.vmem %s0, %s201
      %p203 = pneg %p38
      %p204 = pneg %p35
      %p205 = pneg %p59
      %p206 = pneg %p56
      %p207 = pneg %p80
      %p208 = pneg %p77
      %p209 = pneg %p106
      %p210 = pneg %p103
      %p211 = scmp.lt.s32.totalorder %s17, 1
      %s212 = scalar_select %p211, %s17, 1
      %s213 = smul.addr %s212, 32
      %s214 = smul.addr %s213, 8
      %s215 = scalar_lea.vmem %s3, %s214
      %p216 = pneg %p132
      %p217 = pneg %p129
      %p218 = scmp.lt.s32.totalorder %s17, 1
      %s219 = scalar_select %p218, %s17, 1
      %s220 = scalar_lea.vmem %s4, %s219
      %p221 = pneg %p158
      %p222 = pneg %p155
      %p223 = scmp.lt.s32.totalorder %s17, 1
      %s224 = scalar_select %p223, %s17, 1
      %s225 = scalar_lea.vmem %s5, %s224
      %p226 = scmp.lt.s32.totalorder %s17, 1
      %s227 = scalar_select %p226, %s17, 1
      %s228 = smul.addr %s227, 36
      %s229 = smul.addr %s228, 8
      %s230 = scalar_lea.vmem %s0, %s229
      %p231 = scmp.lt.s32.totalorder %s17, 1
      %s232 = scalar_select %p231, %s17, 1
      %s233 = smul.addr %s232, 32
      %s234 = smul.addr %s233, 8
      %s235 = scalar_lea.vmem %s3, %s234
      %p236 = scmp.lt.s32.totalorder %s17, 1
      %s237 = scalar_select %p236, %s17, 1
      %s238 = scalar_lea.vmem %s4, %s237
      %p239 = scmp.lt.s32.totalorder %s17, 1
      %s240 = scalar_select %p239, %s17, 1
      %s241 = scalar_lea.vmem %s5, %s240
      %v243 = vld [vmem:[%s230] sm:$0xff]
      %v244 = vld [vmem:[%s230 + $0x8] sm:$0xff]
      %v245 = vld [vmem:[%s230 + $0x10] sm:$0xff]
      %v246 = vld [vmem:[%s230 + $0x18] sm:$0xff]
      %v247 = vld [vmem:[%s230 + $0x20] sm:$0xff]
      %v248 = vld [vmem:[%s230 + $0x28] sm:$0xff]
      %v249 = vld [vmem:[%s230 + $0x30] sm:$0xff]
      %v250 = vld [vmem:[%s230 + $0x38] sm:$0xff]
      %v251 = vld [vmem:[%s230 + $0x40] sm:$0xff]
      %v252 = vld [vmem:[%s230 + $0x48] sm:$0xff]
      %v253 = vld [vmem:[%s230 + $0x50] sm:$0xff]
      %v254 = vld [vmem:[%s230 + $0x58] sm:$0xff]
      %v255 = vld [vmem:[%s230 + $0x60] sm:$0xff]
      %v256 = vld [vmem:[%s230 + $0x68] sm:$0xff]
      %v257 = vld [vmem:[%s230 + $0x70] sm:$0xff]
      %v258 = vld [vmem:[%s230 + $0x78] sm:$0xff]
      %v259 = vld [vmem:[%s230 + $0x80] sm:$0xff]
      %v260 = vld [vmem:[%s230 + $0x88] sm:$0xff]
      %v261 = vld [vmem:[%s230 + $0x90] sm:$0xff]
      %v262 = vld [vmem:[%s230 + $0x98] sm:$0xff]
      %v263 = vld [vmem:[%s230 + $0xa0] sm:$0xff]
      %v264 = vld [vmem:[%s230 + $0xa8] sm:$0xff]
      %v265 = vld [vmem:[%s230 + $0xb0] sm:$0xff]
      %v266 = vld [vmem:[%s230 + $0xb8] sm:$0xff]
      %v267 = vld [vmem:[%s230 + $0xc0] sm:$0xff]
      %v268 = vld [vmem:[%s230 + $0xc8] sm:$0xff]
      %v269 = vld [vmem:[%s230 + $0xd0] sm:$0xff]
      %v270 = vld [vmem:[%s230 + $0xd8] sm:$0xff]
      %v271 = vld [vmem:[%s230 + $0xe0] sm:$0xff]
      %v272 = vld [vmem:[%s230 + $0xe8] sm:$0xff]
      %v273 = vld [vmem:[%s230 + $0xf0] sm:$0xff]
      %v274 = vld [vmem:[%s230 + $0xf8] sm:$0xff]
      %v275 = vld [vmem:[%s230 + $0x100] sm:$0xff]
      %v276 = vld [vmem:[%s230 + $0x108] sm:$0xff]
      %v277 = vld [vmem:[%s230 + $0x110] sm:$0xff]
      %v278 = vld [vmem:[%s230 + $0x118] sm:$0xff]
      %v279 = vpack.c.bf16 %v244, %v243
      %v280 = vpack.c.bf16 %v246, %v245
      %v281 = vpack.c.bf16 %v248, %v247
      %v282 = vpack.c.bf16 %v250, %v249
      %v283 = vpack.c.bf16 %v252, %v251
      %v284 = vpack.c.bf16 %v254, %v253
      %v285 = vpack.c.bf16 %v256, %v255
      %v286 = vpack.c.bf16 %v258, %v257
      %v287 = vpack.c.bf16 %v260, %v259
      %v288 = vpack.c.bf16 %v262, %v261
      %v289 = vpack.c.bf16 %v264, %v263
      %v290 = vpack.c.bf16 %v266, %v265
      %v291 = vpack.c.bf16 %v268, %v267
      %v292 = vpack.c.bf16 %v270, %v269
      %v293 = vpack.c.bf16 %v272, %v271
      %v294 = vpack.c.bf16 %v274, %v273
      %v295 = vld [vmem:[%s1] sm:$0xf]
      %v296 = vld [vmem:[%s1 + $0x4] sm:$0xf]
      %v297 = vld [vmem:[%s1 + $0x8] sm:$0xf]
      %v298 = vld [vmem:[%s1 + $0xc] sm:$0xf]
      %v299 = vld [vmem:[%s1 + $0x10] sm:$0xf]
      %v300 = vld [vmem:[%s1 + $0x14] sm:$0xf]
      %v301 = vld [vmem:[%s1 + $0x18] sm:$0xf]
      %v302 = vld [vmem:[%s1 + $0x1c] sm:$0xf]
      %v303 = vld [vmem:[%s1 + $0x20] sm:$0xf]
      %v304 = vld [vmem:[%s1 + $0x24] sm:$0xf]
      %v305 = vld [vmem:[%s1 + $0x28] sm:$0xf]
      %v306 = vld [vmem:[%s1 + $0x2c] sm:$0xf]
      %v307 = vpack.c.bf16 %v276, %v275
      %s308 = scalar_lea.vmem %s1, 48
      %v309 = vld [vmem:[%s308] sm:$0xf]
      %v310 = vld [vmem:[%s308 + $0x4] sm:$0xf]
      %v311 = vld [vmem:[%s308 + $0x8] sm:$0xf]
      %v312 = vld [vmem:[%s308 + $0xc] sm:$0xf]
      %v313 = vld [vmem:[%s308 + $0x10] sm:$0xf]
      %v314 = vld [vmem:[%s308 + $0x14] sm:$0xf]
      %v315 = vld [vmem:[%s308 + $0x18] sm:$0xf]
      %v316 = vld [vmem:[%s308 + $0x1c] sm:$0xf]
      %v317 = vld [vmem:[%s308 + $0x20] sm:$0xf]
      %v318 = vld [vmem:[%s308 + $0x24] sm:$0xf]
      %v319 = vld [vmem:[%s308 + $0x28] sm:$0xf]
      %v320 = vld [vmem:[%s308 + $0x2c] sm:$0xf]
      %v333 = vunpack.c.l.b16 %v309
      %v334 = vunpack.c.l.b16 %v310
      %v335 = vunpack.c.l.b16 %v311
      %v336 = vunpack.c.l.b16 %v312
      %v337 = vunpack.c.l.b16 %v313
      %v338 = vunpack.c.l.b16 %v314
      %v339 = vunpack.c.l.b16 %v315
      %v340 = vunpack.c.l.b16 %v316
      %v341 = vunpack.c.l.b16 %v317
      %v342 = vunpack.c.l.b16 %v318
      %v343 = vunpack.c.l.b16 %v319
      %v344 = vunpack.c.l.b16 %v320
      %v345 = vpack.c.b16 %v334, %v333
      %v346 = vpack.c.b16 %v336, %v335
      %v347 = vpack.c.b16 %v338, %v337
      %v348 = vpack.c.b16 %v340, %v339
      %v349 = vpack.c.b16 %v342, %v341
      %v350 = vpack.c.b16 %v344, %v343
      %vm357 = vcmask 785408
      %v359 = vsel %vm357, %v280, 0
      %v362 = vsel %vm357, %v281, 0
      %v365 = vsel %vm357, %v282, 0
      %v368 = vsel %vm357, %v283, 0
      %v371 = vsel %vm357, %v284, 0
      %v374 = vsel %vm357, %v285, 0
      %v377 = vsel %vm357, %v286, 0
      %v380 = vsel %vm357, %v287, 0
      %v383 = vsel %vm357, %v288, 0
      %v386 = vsel %vm357, %v289, 0
      %v389 = vsel %vm357, %v290, 0
      %v392 = vsel %vm357, %v291, 0
      %v395 = vsel %vm357, %v292, 0
      %v398 = vsel %vm357, %v293, 0
      %v401 = vsel %vm357, %v294, 0
      %v404 = vsel %vm357, %v307, 0
      %406 = vmatprep.subr.bf16.mxu0 0
      %407 = vmatpush1.bf16.msra.mxu0 %v345
      %408 = vmatprep.subr.bf16.mxu0 0
      %409 = vmatpush1.bf16.msra.mxu0 %v346
      %410 = vmatprep.subr.bf16.mxu0 0
      %411 = vmatpush1.bf16.msra.mxu0 %v347
      %412 = vmatprep.subr.bf16.mxu0 0
      %413 = vmatpush1.bf16.msra.mxu0 %v348
      %414 = vmatprep.subr.bf16.mxu0 0
      %415 = vmatpush1.bf16.msra.mxu0 %v349
      %416 = vmatprep.subr.bf16.mxu0 0
      %417 = vmatpush1.bf16.msra.mxu0 %v350
      %418 = vmatprep.subr.bf16.mxu0 0
      %419 = vmatpush1.bf16.msra.mxu0 0
      %420 = vmatprep.subr.bf16.mxu0 0
      %421 = vmatpush1.bf16.msra.mxu0 0
      %422 = vmatprep.subr.bf16.mxu0 0
      %423 = vmatpush1.bf16.msra.mxu0 0
      %424 = vmatprep.subr.bf16.mxu0 0
      %425 = vmatpush1.bf16.msra.mxu0 0
      %426 = vmatprep.subr.bf16.mxu0 0
      %427 = vmatpush1.bf16.msra.mxu0 0
      %428 = vmatprep.subr.bf16.mxu0 0
      %429 = vmatpush1.bf16.msra.mxu0 0
      %430 = vmatprep.subr.bf16.mxu0 0
      %431 = vmatpush1.bf16.msra.mxu0 0
      %432 = vmatprep.subr.bf16.mxu0 0
      %433 = vmatpush1.bf16.msra.mxu0 0
      %434 = vmatprep.subr.bf16.mxu0 0
      %435 = vmatpush1.bf16.msra.mxu0 0
      %436 = vmatprep.subr.bf16.mxu0 0
      %437 = vmatpush1.bf16.msra.mxu0 0
      %438 = vmatprep.mubr.bf16.mxu0 0
      %439 = vmatmul.mubr.bf16.gmra.mrb[0].mxu0 %v359
      %v440 = vpop.f32.mrb[0].mxu0
      %v441 = vadd.f32 0.0, %v440
      %v442 = vpop.f32.mrb[0].mxu0
      %v443 = vpop.f32.mrb[0].mxu0
      %v444 = vadd.f32 0.0, %v443
      %v445 = vpop.f32.mrb[0].mxu0
      %446 = vmatprep.mubr.bf16.mxu0 0
      %447 = vmatmul.mubr.bf16.gmra.mrb[0].mxu0 %v362
      %v448 = vpop.f32.mrb[0].mxu0
      %v449 = vadd.f32 0.0, %v448
      %v450 = vpop.f32.mrb[0].mxu0
      %v451 = vpop.f32.mrb[0].mxu0
      %v452 = vadd.f32 0.0, %v451
      %v453 = vpop.f32.mrb[0].mxu0
      %454 = vmatprep.mubr.bf16.mxu0 0
      %455 = vmatmul.mubr.bf16.gmra.mrb[0].mxu0 %v365
      %v456 = vpop.f32.mrb[0].mxu0
      %v457 = vadd.f32 0.0, %v456
      %v458 = vpop.f32.mrb[0].mxu0
      %v459 = vpop.f32.mrb[0].mxu0
      %v460 = vadd.f32 0.0, %v459
      %v461 = vpop.f32.mrb[0].mxu0
      %462 = vmatprep.mubr.bf16.mxu0 0
      %463 = vmatmul.mubr.bf16.gmra.mrb[0].mxu0 %v368
      %v464 = vpop.f32.mrb[0].mxu0
      %v465 = vadd.f32 0.0, %v464
      %v466 = vpop.f32.mrb[0].mxu0
      %v467 = vpop.f32.mrb[0].mxu0
      %v468 = vadd.f32 0.0, %v467
      %v469 = vpop.f32.mrb[0].mxu0
      %470 = vmatprep.mubr.bf16.mxu0 0
      %471 = vmatmul.mubr.bf16.gmra.mrb[0].mxu0 %v371
      %v472 = vpop.f32.mrb[0].mxu0
      %v473 = vadd.f32 0.0, %v472
      %v474 = vpop.f32.mrb[0].mxu0
      %v475 = vpop.f32.mrb[0].mxu0
      %v476 = vadd.f32 0.0, %v475
      %v477 = vpop.f32.mrb[0].mxu0
      %478 = vmatprep.mubr.bf16.mxu0 0
      %479 = vmatmul.mubr.bf16.gmra.mrb[0].mxu0 %v374
      %v480 = vpop.f32.mrb[0].mxu0
      %v481 = vadd.f32 0.0, %v480
      %v482 = vpop.f32.mrb[0].mxu0
      %v483 = vpop.f32.mrb[0].mxu0
      %v484 = vadd.f32 0.0, %v483
      %v485 = vpop.f32.mrb[0].mxu0
      %486 = vmatprep.mubr.bf16.mxu0 0
      %487 = vmatmul.mubr.bf16.gmra.mrb[0].mxu0 %v377
      %v488 = vpop.f32.mrb[0].mxu0
      %v489 = vadd.f32 0.0, %v488
      %v490 = vpop.f32.mrb[0].mxu0
      %v491 = vpop.f32.mrb[0].mxu0
      %v492 = vadd.f32 0.0, %v491
      %v493 = vpop.f32.mrb[0].mxu0
      %494 = vmatprep.mubr.bf16.mxu0 0
      %495 = vmatmul.mubr.bf16.gmra.mrb[0].mxu0 %v380
      %v496 = vpop.f32.mrb[0].mxu0
      %v497 = vadd.f32 0.0, %v496
      %v498 = vpop.f32.mrb[0].mxu0
      %v499 = vpop.f32.mrb[0].mxu0
      %v500 = vadd.f32 0.0, %v499
      %v501 = vpop.f32.mrb[0].mxu0
      %502 = vmatprep.mubr.bf16.mxu0 0
      %503 = vmatmul.mubr.bf16.gmra.mrb[0].mxu0 %v383
      %v504 = vpop.f32.mrb[0].mxu0
      %v505 = vadd.f32 0.0, %v504
      %v506 = vpop.f32.mrb[0].mxu0
      %v507 = vpop.f32.mrb[0].mxu0
      %v508 = vadd.f32 0.0, %v507
      %v509 = vpop.f32.mrb[0].mxu0
      %510 = vmatprep.mubr.bf16.mxu0 0
      %511 = vmatmul.mubr.bf16.gmra.mrb[0].mxu0 %v386
      %v512 = vpop.f32.mrb[0].mxu0
      %v513 = vadd.f32 0.0, %v512
      %v514 = vpop.f32.mrb[0].mxu0
      %v515 = vpop.f32.mrb[0].mxu0
      %v516 = vadd.f32 0.0, %v515
      %v517 = vpop.f32.mrb[0].mxu0
      %518 = vmatprep.mubr.bf16.mxu0 0
      %519 = vmatmul.mubr.bf16.gmra.mrb[0].mxu0 %v389
      %v520 = vpop.f32.mrb[0].mxu0
      %v521 = vadd.f32 0.0, %v520
      %v522 = vpop.f32.mrb[0].mxu0
      %v523 = vpop.f32.mrb[0].mxu0
      %v524 = vadd.f32 0.0, %v523
      %v525 = vpop.f32.mrb[0].mxu0
      %526 = vmatprep.mubr.bf16.mxu0 0
      %527 = vmatmul.mubr.bf16.gmra.mrb[0].mxu0 %v392
      %v528 = vpop.f32.mrb[0].mxu0
      %v529 = vadd.f32 0.0, %v528
      %v530 = vpop.f32.mrb[0].mxu0
      %v531 = vpop.f32.mrb[0].mxu0
      %v532 = vadd.f32 0.0, %v531
      %v533 = vpop.f32.mrb[0].mxu0
      %534 = vmatprep.mubr.bf16.mxu0 0
      %535 = vmatmul.mubr.bf16.gmra.mrb[0].mxu0 %v395
      %v536 = vpop.f32.mrb[0].mxu0
      %v537 = vadd.f32 0.0, %v536
      %v538 = vpop.f32.mrb[0].mxu0
      %v539 = vpop.f32.mrb[0].mxu0
      %v540 = vadd.f32 0.0, %v539
      %v541 = vpop.f32.mrb[0].mxu0
      %542 = vmatprep.mubr.bf16.mxu0 0
      %543 = vmatmul.mubr.bf16.gmra.mrb[0].mxu0 %v398
      %v544 = vpop.f32.mrb[0].mxu0
      %v545 = vadd.f32 0.0, %v544
      %v546 = vpop.f32.mrb[0].mxu0
      %v547 = vpop.f32.mrb[0].mxu0
      %v548 = vadd.f32 0.0, %v547
      %v549 = vpop.f32.mrb[0].mxu0
      %550 = vmatprep.mubr.bf16.mxu0 0
      %551 = vmatmul.mubr.bf16.gmra.mrb[0].mxu0 %v401
      %v552 = vpop.f32.mrb[0].mxu0
      %v553 = vadd.f32 0.0, %v552
      %v554 = vpop.f32.mrb[0].mxu0
      %v555 = vpop.f32.mrb[0].mxu0
      %v556 = vadd.f32 0.0, %v555
      %v557 = vpop.f32.mrb[0].mxu0
      %558 = vmatprep.mubr.bf16.mxu0 0
      %559 = vmatmul.mubr.bf16.gmra.mrb[0].mxu0 %v404
      %v560 = vpop.f32.mrb[0].mxu0
      %v561 = vadd.f32 0.0, %v560
      %v562 = vpop.f32.mrb[0].mxu0
      %v563 = vpop.f32.mrb[0].mxu0
      %v564 = vadd.f32 0.0, %v563
      %v565 = vpop.f32.mrb[0].mxu0
      %566 = vdwg.mxu0
      %v579 = vunpack.c.l.b16 %v295
      %v580 = vunpack.c.l.b16 %v296
      %v581 = vunpack.c.l.b16 %v297
      %v582 = vunpack.c.l.b16 %v298
      %v583 = vunpack.c.l.b16 %v299
      %v584 = vunpack.c.l.b16 %v300
      %v585 = vunpack.c.l.b16 %v301
      %v586 = vunpack.c.l.b16 %v302
      %v587 = vunpack.c.l.b16 %v303
      %v588 = vunpack.c.l.b16 %v304
      %v589 = vunpack.c.l.b16 %v305
      %v590 = vunpack.c.l.b16 %v306
      %v591 = vpack.c.b16 %v580, %v579
      %v592 = vpack.c.b16 %v582, %v581
      %v593 = vpack.c.b16 %v584, %v583
      %v594 = vpack.c.b16 %v586, %v585
      %v595 = vpack.c.b16 %v588, %v587
      %v596 = vpack.c.b16 %v590, %v589
      %v604 = vsel %vm357, %v279, 0
      %606 = vmatprep.subr.bf16.mxu0 0
      %607 = vmatpush1.bf16.msra.mxu0 %v591
      %608 = vmatprep.subr.bf16.mxu0 0
      %609 = vmatpush1.bf16.msra.mxu0 %v592
      %610 = vmatprep.subr.bf16.mxu0 0
      %611 = vmatpush1.bf16.msra.mxu0 %v593
      %612 = vmatprep.subr.bf16.mxu0 0
      %613 = vmatpush1.bf16.msra.mxu0 %v594
      %614 = vmatprep.subr.bf16.mxu0 0
      %615 = vmatpush1.bf16.msra.mxu0 %v595
      %616 = vmatprep.subr.bf16.mxu0 0
      %617 = vmatpush1.bf16.msra.mxu0 %v596
      %618 = vmatprep.subr.bf16.mxu0 0
      %619 = vmatpush1.bf16.msra.mxu0 0
      %620 = vmatprep.subr.bf16.mxu0 0
      %621 = vmatpush1.bf16.msra.mxu0 0
      %622 = vmatprep.subr.bf16.mxu0 0
      %623 = vmatpush1.bf16.msra.mxu0 0
      %624 = vmatprep.subr.bf16.mxu0 0
      %625 = vmatpush1.bf16.msra.mxu0 0
      %626 = vmatprep.subr.bf16.mxu0 0
      %627 = vmatpush1.bf16.msra.mxu0 0
      %628 = vmatprep.subr.bf16.mxu0 0
      %629 = vmatpush1.bf16.msra.mxu0 0
      %630 = vmatprep.subr.bf16.mxu0 0
      %631 = vmatpush1.bf16.msra.mxu0 0
      %632 = vmatprep.subr.bf16.mxu0 0
      %633 = vmatpush1.bf16.msra.mxu0 0
      %634 = vmatprep.subr.bf16.mxu0 0
      %635 = vmatpush1.bf16.msra.mxu0 0
      %636 = vmatprep.subr.bf16.mxu0 0
      %637 = vmatpush1.bf16.msra.mxu0 0
      %638 = vmatprep.mubr.bf16.mxu0 0
      %639 = vmatmul.mubr.bf16.gmra.mrb[0].mxu0 %v604
      %v640 = vpop.f32.mrb[0].mxu0
      %v641 = vadd.f32 %v441, %v640
      %v642 = vpop.f32.mrb[0].mxu0
      %v643 = vpop.f32.mrb[0].mxu0
      %v644 = vadd.f32 %v444, %v643
      %v645 = vpop.f32.mrb[0].mxu0
      %646 = vmatprep.mubr.bf16.mxu0 0
      %647 = vmatmul.mubr.bf16.gmra.mrb[0].mxu0 %v359
      %v648 = vpop.f32.mrb[0].mxu0
      %v649 = vadd.f32 %v449, %v648
      %v650 = vpop.f32.mrb[0].mxu0
      %v651 = vpop.f32.mrb[0].mxu0
      %v652 = vadd.f32 %v452, %v651
      %v653 = vpop.f32.mrb[0].mxu0
      %654 = vmatprep.mubr.bf16.mxu0 0
      %655 = vmatmul.mubr.bf16.gmra.mrb[0].mxu0 %v362
      %v656 = vpop.f32.mrb[0].mxu0
      %v657 = vadd.f32 %v457, %v656
      %v658 = vpop.f32.mrb[0].mxu0
      %v659 = vpop.f32.mrb[0].mxu0
      %v660 = vadd.f32 %v460, %v659
      %v661 = vpop.f32.mrb[0].mxu0
      %662 = vmatprep.mubr.bf16.mxu0 0
      %663 = vmatmul.mubr.bf16.gmra.mrb[0].mxu0 %v365
      %v664 = vpop.f32.mrb[0].mxu0
      %v665 = vadd.f32 %v465, %v664
      %v666 = vpop.f32.mrb[0].mxu0
      %v667 = vpop.f32.mrb[0].mxu0
      %v668 = vadd.f32 %v468, %v667
      %v669 = vpop.f32.mrb[0].mxu0
      %670 = vmatprep.mubr.bf16.mxu0 0
      %671 = vmatmul.mubr.bf16.gmra.mrb[0].mxu0 %v368
      %v672 = vpop.f32.mrb[0].mxu0
      %v673 = vadd.f32 %v473, %v672
      %v674 = vpop.f32.mrb[0].mxu0
      %v675 = vpop.f32.mrb[0].mxu0
      %v676 = vadd.f32 %v476, %v675
      %v677 = vpop.f32.mrb[0].mxu0
      %678 = vmatprep.mubr.bf16.mxu0 0
      %679 = vmatmul.mubr.bf16.gmra.mrb[0].mxu0 %v371
      %v680 = vpop.f32.mrb[0].mxu0
      %v681 = vadd.f32 %v481, %v680
      %v682 = vpop.f32.mrb[0].mxu0
      %v683 = vpop.f32.mrb[0].mxu0
      %v684 = vadd.f32 %v484, %v683
      %v685 = vpop.f32.mrb[0].mxu0
      %686 = vmatprep.mubr.bf16.mxu0 0
      %687 = vmatmul.mubr.bf16.gmra.mrb[0].mxu0 %v374
      %v688 = vpop.f32.mrb[0].mxu0
      %v689 = vadd.f32 %v489, %v688
      %v690 = vpop.f32.mrb[0].mxu0
      %v691 = vpop.f32.mrb[0].mxu0
      %v692 = vadd.f32 %v492, %v691
      %v693 = vpop.f32.mrb[0].mxu0
      %694 = vmatprep.mubr.bf16.mxu0 0
      %695 = vmatmul.mubr.bf16.gmra.mrb[0].mxu0 %v377
      %v696 = vpop.f32.mrb[0].mxu0
      %v697 = vadd.f32 %v497, %v696
      %v698 = vpop.f32.mrb[0].mxu0
      %v699 = vpop.f32.mrb[0].mxu0
      %v700 = vadd.f32 %v500, %v699
      %v701 = vpop.f32.mrb[0].mxu0
      %702 = vmatprep.mubr.bf16.mxu0 0
      %703 = vmatmul.mubr.bf16.gmra.mrb[0].mxu0 %v380
      %v704 = vpop.f32.mrb[0].mxu0
      %v705 = vadd.f32 %v505, %v704
      %v706 = vpop.f32.mrb[0].mxu0
      %v707 = vpop.f32.mrb[0].mxu0
      %v708 = vadd.f32 %v508, %v707
      %v709 = vpop.f32.mrb[0].mxu0
      %710 = vmatprep.mubr.bf16.mxu0 0
      %711 = vmatmul.mubr.bf16.gmra.mrb[0].mxu0 %v383
      %v712 = vpop.f32.mrb[0].mxu0
      %v713 = vadd.f32 %v513, %v712
      %v714 = vpop.f32.mrb[0].mxu0
      %v715 = vpop.f32.mrb[0].mxu0
      %v716 = vadd.f32 %v516, %v715
      %v717 = vpop.f32.mrb[0].mxu0
      %718 = vmatprep.mubr.bf16.mxu0 0
      %719 = vmatmul.mubr.bf16.gmra.mrb[0].mxu0 %v386
      %v720 = vpop.f32.mrb[0].mxu0
      %v721 = vadd.f32 %v521, %v720
      %v722 = vpop.f32.mrb[0].mxu0
      %v723 = vpop.f32.mrb[0].mxu0
      %v724 = vadd.f32 %v524, %v723
      %v725 = vpop.f32.mrb[0].mxu0
      %726 = vmatprep.mubr.bf16.mxu0 0
      %727 = vmatmul.mubr.bf16.gmra.mrb[0].mxu0 %v389
      %v728 = vpop.f32.mrb[0].mxu0
      %v729 = vadd.f32 %v529, %v728
      %v730 = vpop.f32.mrb[0].mxu0
      %v731 = vpop.f32.mrb[0].mxu0
      %v732 = vadd.f32 %v532, %v731
      %v733 = vpop.f32.mrb[0].mxu0
      %734 = vmatprep.mubr.bf16.mxu0 0
      %735 = vmatmul.mubr.bf16.gmra.mrb[0].mxu0 %v392
      %v736 = vpop.f32.mrb[0].mxu0
      %v737 = vadd.f32 %v537, %v736
      %v738 = vpop.f32.mrb[0].mxu0
      %v739 = vpop.f32.mrb[0].mxu0
      %v740 = vadd.f32 %v540, %v739
      %v741 = vpop.f32.mrb[0].mxu0
      %742 = vmatprep.mubr.bf16.mxu0 0
      %743 = vmatmul.mubr.bf16.gmra.mrb[0].mxu0 %v395
      %v744 = vpop.f32.mrb[0].mxu0
      %v745 = vadd.f32 %v545, %v744
      %v746 = vpop.f32.mrb[0].mxu0
      %v747 = vpop.f32.mrb[0].mxu0
      %v748 = vadd.f32 %v548, %v747
      %v749 = vpop.f32.mrb[0].mxu0
      %750 = vmatprep.mubr.bf16.mxu0 0
      %751 = vmatmul.mubr.bf16.gmra.mrb[0].mxu0 %v398
      %v752 = vpop.f32.mrb[0].mxu0
      %v753 = vadd.f32 %v553, %v752
      %v754 = vpop.f32.mrb[0].mxu0
      %v755 = vpop.f32.mrb[0].mxu0
      %v756 = vadd.f32 %v556, %v755
      %v757 = vpop.f32.mrb[0].mxu0
      %758 = vmatprep.mubr.bf16.mxu0 0
      %759 = vmatmul.mubr.bf16.gmra.mrb[0].mxu0 %v401
      %v760 = vpop.f32.mrb[0].mxu0
      %v761 = vadd.f32 %v561, %v760
      %v762 = vpop.f32.mrb[0].mxu0
      %v763 = vpop.f32.mrb[0].mxu0
      %v764 = vadd.f32 %v564, %v763
      %v765 = vpop.f32.mrb[0].mxu0
      %766 = vdwg.mxu0
      %v767 = vpack.c.bf16 %v278, %v277
      %s768 = scalar_lea.vmem %s1, 96
      %v769 = vld [vmem:[%s768] sm:$0xf]
      %v770 = vld [vmem:[%s768 + $0x4] sm:$0xf]
      %v771 = vld [vmem:[%s768 + $0x8] sm:$0xf]
      %v772 = vld [vmem:[%s768 + $0xc] sm:$0xf]
      %v773 = vld [vmem:[%s768 + $0x10] sm:$0xf]
      %v774 = vld [vmem:[%s768 + $0x14] sm:$0xf]
      %v775 = vld [vmem:[%s768 + $0x18] sm:$0xf]
      %v776 = vld [vmem:[%s768 + $0x1c] sm:$0xf]
      %v777 = vld [vmem:[%s768 + $0x20] sm:$0xf]
      %v778 = vld [vmem:[%s768 + $0x24] sm:$0xf]
      %v779 = vld [vmem:[%s768 + $0x28] sm:$0xf]
      %v780 = vld [vmem:[%s768 + $0x2c] sm:$0xf]
      %v793 = vunpack.c.l.b16 %v769
      %v794 = vunpack.c.l.b16 %v770
      %v795 = vunpack.c.l.b16 %v771
      %v796 = vunpack.c.l.b16 %v772
      %v797 = vunpack.c.l.b16 %v773
      %v798 = vunpack.c.l.b16 %v774
      %v799 = vunpack.c.l.b16 %v775
      %v800 = vunpack.c.l.b16 %v776
      %v801 = vunpack.c.l.b16 %v777
      %v802 = vunpack.c.l.b16 %v778
      %v803 = vunpack.c.l.b16 %v779
      %v804 = vunpack.c.l.b16 %v780
      %v805 = vpack.c.b16 %v794, %v793
      %v806 = vpack.c.b16 %v796, %v795
      %v807 = vpack.c.b16 %v798, %v797
      %v808 = vpack.c.b16 %v800, %v799
      %v809 = vpack.c.b16 %v802, %v801
      %v810 = vpack.c.b16 %v804, %v803
      %v818 = vsel %vm357, %v767, 0
      %820 = vmatprep.subr.bf16.mxu0 0
      %821 = vmatpush1.bf16.msra.mxu0 %v805
      %822 = vmatprep.subr.bf16.mxu0 0
      %823 = vmatpush1.bf16.msra.mxu0 %v806
      %824 = vmatprep.subr.bf16.mxu0 0
      %825 = vmatpush1.bf16.msra.mxu0 %v807
      %826 = vmatprep.subr.bf16.mxu0 0
      %827 = vmatpush1.bf16.msra.mxu0 %v808
      %828 = vmatprep.subr.bf16.mxu0 0
      %829 = vmatpush1.bf16.msra.mxu0 %v809
      %830 = vmatprep.subr.bf16.mxu0 0
      %831 = vmatpush1.bf16.msra.mxu0 %v810
      %832 = vmatprep.subr.bf16.mxu0 0
      %833 = vmatpush1.bf16.msra.mxu0 0
      %834 = vmatprep.subr.bf16.mxu0 0
      %835 = vmatpush1.bf16.msra.mxu0 0
      %836 = vmatprep.subr.bf16.mxu0 0
      %837 = vmatpush1.bf16.msra.mxu0 0
      %838 = vmatprep.subr.bf16.mxu0 0
      %839 = vmatpush1.bf16.msra.mxu0 0
      %840 = vmatprep.subr.bf16.mxu0 0
      %841 = vmatpush1.bf16.msra.mxu0 0
      %842 = vmatprep.subr.bf16.mxu0 0
      %843 = vmatpush1.bf16.msra.mxu0 0
      %844 = vmatprep.subr.bf16.mxu0 0
      %845 = vmatpush1.bf16.msra.mxu0 0
      %846 = vmatprep.subr.bf16.mxu0 0
      %847 = vmatpush1.bf16.msra.mxu0 0
      %848 = vmatprep.subr.bf16.mxu0 0
      %849 = vmatpush1.bf16.msra.mxu0 0
      %850 = vmatprep.subr.bf16.mxu0 0
      %851 = vmatpush1.bf16.msra.mxu0 0
      %852 = vmatprep.mubr.bf16.mxu0 0
      %853 = vmatmul.mubr.bf16.gmra.mrb[0].mxu0 %v362
      %v854 = vpop.f32.mrb[0].mxu0
      %v855 = vadd.f32 0.0, %v854
      %v856 = vpop.f32.mrb[0].mxu0
      %v857 = vpop.f32.mrb[0].mxu0
      %v858 = vadd.f32 0.0, %v857
      %v859 = vpop.f32.mrb[0].mxu0
      %860 = vmatprep.mubr.bf16.mxu0 0
      %861 = vmatmul.mubr.bf16.gmra.mrb[0].mxu0 %v365
      %v862 = vpop.f32.mrb[0].mxu0
      %v863 = vadd.f32 0.0, %v862
      %v864 = vpop.f32.mrb[0].mxu0
      %v865 = vpop.f32.mrb[0].mxu0
      %v866 = vadd.f32 0.0, %v865
      %v867 = vpop.f32.mrb[0].mxu0
      %868 = vmatprep.mubr.bf16.mxu0 0
      %869 = vmatmul.mubr.bf16.gmra.mrb[0].mxu0 %v368
      %v870 = vpop.f32.mrb[0].mxu0
      %v871 = vadd.f32 0.0, %v870
      %v872 = vpop.f32.mrb[0].mxu0
      %v873 = vpop.f32.mrb[0].mxu0
      %v874 = vadd.f32 0.0, %v873
      %v875 = vpop.f32.mrb[0].mxu0
      %876 = vmatprep.mubr.bf16.mxu0 0
      %877 = vmatmul.mubr.bf16.gmra.mrb[0].mxu0 %v371
      %v878 = vpop.f32.mrb[0].mxu0
      %v879 = vadd.f32 0.0, %v878
      %v880 = vpop.f32.mrb[0].mxu0
      %v881 = vpop.f32.mrb[0].mxu0
      %v882 = vadd.f32 0.0, %v881
      %v883 = vpop.f32.mrb[0].mxu0
      %884 = vmatprep.mubr.bf16.mxu0 0
      %885 = vmatmul.mubr.bf16.gmra.mrb[0].mxu0 %v374
      %v886 = vpop.f32.mrb[0].mxu0
      %v887 = vadd.f32 0.0, %v886
      %v888 = vpop.f32.mrb[0].mxu0
      %v889 = vpop.f32.mrb[0].mxu0
      %v890 = vadd.f32 0.0, %v889
      %v891 = vpop.f32.mrb[0].mxu0
      %892 = vmatprep.mubr.bf16.mxu0 0
      %893 = vmatmul.mubr.bf16.gmra.mrb[0].mxu0 %v377
      %v894 = vpop.f32.mrb[0].mxu0
      %v895 = vadd.f32 0.0, %v894
      %v896 = vpop.f32.mrb[0].mxu0
      %v897 = vpop.f32.mrb[0].mxu0
      %v898 = vadd.f32 0.0, %v897
      %v899 = vpop.f32.mrb[0].mxu0
      %900 = vmatprep.mubr.bf16.mxu0 0
      %901 = vmatmul.mubr.bf16.gmra.mrb[0].mxu0 %v380
      %v902 = vpop.f32.mrb[0].mxu0
      %v903 = vadd.f32 0.0, %v902
      %v904 = vpop.f32.mrb[0].mxu0
      %v905 = vpop.f32.mrb[0].mxu0
      %v906 = vadd.f32 0.0, %v905
      %v907 = vpop.f32.mrb[0].mxu0
      %908 = vmatprep.mubr.bf16.mxu0 0
      %909 = vmatmul.mubr.bf16.gmra.mrb[0].mxu0 %v383
      %v910 = vpop.f32.mrb[0].mxu0
      %v911 = vadd.f32 0.0, %v910
      %v912 = vpop.f32.mrb[0].mxu0
      %v913 = vpop.f32.mrb[0].mxu0
      %v914 = vadd.f32 0.0, %v913
      %v915 = vpop.f32.mrb[0].mxu0
      %916 = vmatprep.mubr.bf16.mxu0 0
      %917 = vmatmul.mubr.bf16.gmra.mrb[0].mxu0 %v386
      %v918 = vpop.f32.mrb[0].mxu0
      %v919 = vadd.f32 0.0, %v918
      %v920 = vpop.f32.mrb[0].mxu0
      %v921 = vpop.f32.mrb[0].mxu0
      %v922 = vadd.f32 0.0, %v921
      %v923 = vpop.f32.mrb[0].mxu0
      %924 = vmatprep.mubr.bf16.mxu0 0
      %925 = vmatmul.mubr.bf16.gmra.mrb[0].mxu0 %v389
      %v926 = vpop.f32.mrb[0].mxu0
      %v927 = vadd.f32 0.0, %v926
      %v928 = vpop.f32.mrb[0].mxu0
      %v929 = vpop.f32.mrb[0].mxu0
      %v930 = vadd.f32 0.0, %v929
      %v931 = vpop.f32.mrb[0].mxu0
      %932 = vmatprep.mubr.bf16.mxu0 0
      %933 = vmatmul.mubr.bf16.gmra.mrb[0].mxu0 %v392
      %v934 = vpop.f32.mrb[0].mxu0
      %v935 = vadd.f32 0.0, %v934
      %v936 = vpop.f32.mrb[0].mxu0
      %v937 = vpop.f32.mrb[0].mxu0
      %v938 = vadd.f32 0.0, %v937
      %v939 = vpop.f32.mrb[0].mxu0
      %940 = vmatprep.mubr.bf16.mxu0 0
      %941 = vmatmul.mubr.bf16.gmra.mrb[0].mxu0 %v395
      %v942 = vpop.f32.mrb[0].mxu0
      %v943 = vadd.f32 0.0, %v942
      %v944 = vpop.f32.mrb[0].mxu0
      %v945 = vpop.f32.mrb[0].mxu0
      %v946 = vadd.f32 0.0, %v945
      %v947 = vpop.f32.mrb[0].mxu0
      %948 = vmatprep.mubr.bf16.mxu0 0
      %949 = vmatmul.mubr.bf16.gmra.mrb[0].mxu0 %v398
      %v950 = vpop.f32.mrb[0].mxu0
      %v951 = vadd.f32 0.0, %v950
      %v952 = vpop.f32.mrb[0].mxu0
      %v953 = vpop.f32.mrb[0].mxu0
      %v954 = vadd.f32 0.0, %v953
      %v955 = vpop.f32.mrb[0].mxu0
      %956 = vmatprep.mubr.bf16.mxu0 0
      %957 = vmatmul.mubr.bf16.gmra.mrb[0].mxu0 %v401
      %v958 = vpop.f32.mrb[0].mxu0
      %v959 = vadd.f32 0.0, %v958
      %v960 = vpop.f32.mrb[0].mxu0
      %v961 = vpop.f32.mrb[0].mxu0
      %v962 = vadd.f32 0.0, %v961
      %v963 = vpop.f32.mrb[0].mxu0
      %964 = vmatprep.mubr.bf16.mxu0 0
      %965 = vmatmul.mubr.bf16.gmra.mrb[0].mxu0 %v404
      %v966 = vpop.f32.mrb[0].mxu0
      %v967 = vadd.f32 0.0, %v966
      %v968 = vpop.f32.mrb[0].mxu0
      %v969 = vpop.f32.mrb[0].mxu0
      %v970 = vadd.f32 0.0, %v969
      %v971 = vpop.f32.mrb[0].mxu0
      %972 = vmatprep.mubr.bf16.mxu0 0
      %973 = vmatmul.mubr.bf16.gmra.mrb[0].mxu0 %v818
      %v974 = vpop.f32.mrb[0].mxu0
      %v975 = vadd.f32 0.0, %v974
      %v976 = vpop.f32.mrb[0].mxu0
      %v977 = vpop.f32.mrb[0].mxu0
      %v978 = vadd.f32 0.0, %v977
      %v979 = vpop.f32.mrb[0].mxu0
      %980 = vdwg.mxu0
      %v981 = vadd.f32 %v641, %v855
      %v982 = vadd.f32 %v644, %v858
      %v983 = vadd.f32 %v649, %v863
      %v984 = vadd.f32 %v652, %v866
      %v985 = vadd.f32 %v657, %v871
      %v986 = vadd.f32 %v660, %v874
      %v987 = vadd.f32 %v665, %v879
      %v988 = vadd.f32 %v668, %v882
      %v989 = vadd.f32 %v673, %v887
      %v990 = vadd.f32 %v676, %v890
      %v991 = vadd.f32 %v681, %v895
      %v992 = vadd.f32 %v684, %v898
      %v993 = vadd.f32 %v689, %v903
      %v994 = vadd.f32 %v692, %v906
      %v995 = vadd.f32 %v697, %v911
      %v996 = vadd.f32 %v700, %v914
      %v997 = vadd.f32 %v705, %v919
      %v998 = vadd.f32 %v708, %v922
      %v999 = vadd.f32 %v713, %v927
      %v1000 = vadd.f32 %v716, %v930
      %v1001 = vadd.f32 %v721, %v935
      %v1002 = vadd.f32 %v724, %v938
      %v1003 = vadd.f32 %v729, %v943
      %v1004 = vadd.f32 %v732, %v946
      %v1005 = vadd.f32 %v737, %v951
      %v1006 = vadd.f32 %v740, %v954
      %v1007 = vadd.f32 %v745, %v959
      %v1008 = vadd.f32 %v748, %v962
      %v1009 = vadd.f32 %v753, %v967
      %v1010 = vadd.f32 %v756, %v970
      %v1011 = vadd.f32 %v761, %v975
      %v1012 = vadd.f32 %v764, %v978
      %v1013 = vld [vmem:[%s2] sm:$0x1]
      %v1015 = vlaneseq
      %v1016 = vshrl.u32 %v1015, 7
      %v1017 = vsub.s32 0, %v1016
      %v1018 = vrot.slane %v1013, %v1017
      %v1020 = vadd.f32 %v981, %v1018
      %v1021 = vadd.f32 %v982, %v1018
      %v1022 = vadd.f32 %v983, %v1018
      %v1023 = vadd.f32 %v984, %v1018
      %v1024 = vadd.f32 %v985, %v1018
      %v1025 = vadd.f32 %v986, %v1018
      %v1026 = vadd.f32 %v987, %v1018
      %v1027 = vadd.f32 %v988, %v1018
      %v1028 = vadd.f32 %v989, %v1018
      %v1029 = vadd.f32 %v990, %v1018
      %v1030 = vadd.f32 %v991, %v1018
      %v1031 = vadd.f32 %v992, %v1018
      %v1032 = vadd.f32 %v993, %v1018
      %v1033 = vadd.f32 %v994, %v1018
      %v1034 = vadd.f32 %v995, %v1018
      %v1035 = vadd.f32 %v996, %v1018
      %v1036 = vadd.f32 %v997, %v1018
      %v1037 = vadd.f32 %v998, %v1018
      %v1038 = vadd.f32 %v999, %v1018
      %v1039 = vadd.f32 %v1000, %v1018
      %v1040 = vadd.f32 %v1001, %v1018
      %v1041 = vadd.f32 %v1002, %v1018
      %v1042 = vadd.f32 %v1003, %v1018
      %v1043 = vadd.f32 %v1004, %v1018
      %v1044 = vadd.f32 %v1005, %v1018
      %v1045 = vadd.f32 %v1006, %v1018
      %v1046 = vadd.f32 %v1007, %v1018
      %v1047 = vadd.f32 %v1008, %v1018
      %v1048 = vadd.f32 %v1009, %v1018
      %v1049 = vadd.f32 %v1010, %v1018
      %v1050 = vadd.f32 %v1011, %v1018
      %v1051 = vadd.f32 %v1012, %v1018
      %vm1052 = vcmask 261120
      %1053 = vst.msk [vmem:[%s235] sm:$0xff] %vm1052, %v1020
      %1054 = vst.msk [vmem:[%s235 + $0x8] sm:$0xff] %vm1052, %v1021
      %1055 = vst.msk [vmem:[%s235 + $0x10] sm:$0xff] %vm1052, %v1022
      %1056 = vst.msk [vmem:[%s235 + $0x18] sm:$0xff] %vm1052, %v1023
      %1057 = vst.msk [vmem:[%s235 + $0x20] sm:$0xff] %vm1052, %v1024
      %1058 = vst.msk [vmem:[%s235 + $0x28] sm:$0xff] %vm1052, %v1025
      %1059 = vst.msk [vmem:[%s235 + $0x30] sm:$0xff] %vm1052, %v1026
      %1060 = vst.msk [vmem:[%s235 + $0x38] sm:$0xff] %vm1052, %v1027
      %1061 = vst.msk [vmem:[%s235 + $0x40] sm:$0xff] %vm1052, %v1028
      %1062 = vst.msk [vmem:[%s235 + $0x48] sm:$0xff] %vm1052, %v1029
      %1063 = vst.msk [vmem:[%s235 + $0x50] sm:$0xff] %vm1052, %v1030
      %1064 = vst.msk [vmem:[%s235 + $0x58] sm:$0xff] %vm1052, %v1031
      %1065 = vst.msk [vmem:[%s235 + $0x60] sm:$0xff] %vm1052, %v1032
      %1066 = vst.msk [vmem:[%s235 + $0x68] sm:$0xff] %vm1052, %v1033
      %1067 = vst.msk [vmem:[%s235 + $0x70] sm:$0xff] %vm1052, %v1034
      %1068 = vst.msk [vmem:[%s235 + $0x78] sm:$0xff] %vm1052, %v1035
      %1069 = vst.msk [vmem:[%s235 + $0x80] sm:$0xff] %vm1052, %v1036
      %1070 = vst.msk [vmem:[%s235 + $0x88] sm:$0xff] %vm1052, %v1037
      %1071 = vst.msk [vmem:[%s235 + $0x90] sm:$0xff] %vm1052, %v1038
      %1072 = vst.msk [vmem:[%s235 + $0x98] sm:$0xff] %vm1052, %v1039
      %1073 = vst.msk [vmem:[%s235 + $0xa0] sm:$0xff] %vm1052, %v1040
      %1074 = vst.msk [vmem:[%s235 + $0xa8] sm:$0xff] %vm1052, %v1041
      %1075 = vst.msk [vmem:[%s235 + $0xb0] sm:$0xff] %vm1052, %v1042
      %1076 = vst.msk [vmem:[%s235 + $0xb8] sm:$0xff] %vm1052, %v1043
      %1077 = vst.msk [vmem:[%s235 + $0xc0] sm:$0xff] %vm1052, %v1044
      %1078 = vst.msk [vmem:[%s235 + $0xc8] sm:$0xff] %vm1052, %v1045
      %1079 = vst.msk [vmem:[%s235 + $0xd0] sm:$0xff] %vm1052, %v1046
      %1080 = vst.msk [vmem:[%s235 + $0xd8] sm:$0xff] %vm1052, %v1047
      %1081 = vst.msk [vmem:[%s235 + $0xe0] sm:$0xff] %vm1052, %v1048
      %1082 = vst.msk [vmem:[%s235 + $0xe8] sm:$0xff] %vm1052, %v1049
      %1083 = vst.msk [vmem:[%s235 + $0xf0] sm:$0xff] %vm1052, %v1050
      %1084 = vst.msk [vmem:[%s235 + $0xf8] sm:$0xff] %vm1052, %v1051
      %v1085 = vsel %vm1052, %v1020, 0.0
      %v1086 = vsel %vm1052, %v1021, 0.0
      %v1087 = vadd.f32 %v1085, %v1086
      %v1088 = vsel %vm1052, %v1022, 0.0
      %v1089 = vadd.f32 %v1087, %v1088
      %v1090 = vsel %vm1052, %v1023, 0.0
      %v1091 = vadd.f32 %v1089, %v1090
      %v1092 = vsel %vm1052, %v1024, 0.0
      %v1093 = vadd.f32 %v1091, %v1092
      %v1094 = vsel %vm1052, %v1025, 0.0
      %v1095 = vadd.f32 %v1093, %v1094
      %v1096 = vsel %vm1052, %v1026, 0.0
      %v1097 = vadd.f32 %v1095, %v1096
      %v1098 = vsel %vm1052, %v1027, 0.0
      %v1099 = vadd.f32 %v1097, %v1098
      %v1100 = vsel %vm1052, %v1028, 0.0
      %v1101 = vadd.f32 %v1099, %v1100
      %v1102 = vsel %vm1052, %v1029, 0.0
      %v1103 = vadd.f32 %v1101, %v1102
      %v1104 = vsel %vm1052, %v1030, 0.0
      %v1105 = vadd.f32 %v1103, %v1104
      %v1106 = vsel %vm1052, %v1031, 0.0
      %v1107 = vadd.f32 %v1105, %v1106
      %v1108 = vsel %vm1052, %v1032, 0.0
      %v1109 = vadd.f32 %v1107, %v1108
      %v1110 = vsel %vm1052, %v1033, 0.0
      %v1111 = vadd.f32 %v1109, %v1110
      %v1112 = vsel %vm1052, %v1034, 0.0
      %v1113 = vadd.f32 %v1111, %v1112
      %v1114 = vsel %vm1052, %v1035, 0.0
      %v1115 = vadd.f32 %v1113, %v1114
      %v1116 = vsel %vm1052, %v1036, 0.0
      %v1117 = vadd.f32 %v1115, %v1116
      %v1118 = vsel %vm1052, %v1037, 0.0
      %v1119 = vadd.f32 %v1117, %v1118
      %v1120 = vsel %vm1052, %v1038, 0.0
      %v1121 = vadd.f32 %v1119, %v1120
      %v1122 = vsel %vm1052, %v1039, 0.0
      %v1123 = vadd.f32 %v1121, %v1122
      %v1124 = vsel %vm1052, %v1040, 0.0
      %v1125 = vadd.f32 %v1123, %v1124
      %v1126 = vsel %vm1052, %v1041, 0.0
      %v1127 = vadd.f32 %v1125, %v1126
      %v1128 = vsel %vm1052, %v1042, 0.0
      %v1129 = vadd.f32 %v1127, %v1128
      %v1130 = vsel %vm1052, %v1043, 0.0
      %v1131 = vadd.f32 %v1129, %v1130
      %v1132 = vsel %vm1052, %v1044, 0.0
      %v1133 = vadd.f32 %v1131, %v1132
      %v1134 = vsel %vm1052, %v1045, 0.0
      %v1135 = vadd.f32 %v1133, %v1134
      %v1136 = vsel %vm1052, %v1046, 0.0
      %v1137 = vadd.f32 %v1135, %v1136
      %v1138 = vsel %vm1052, %v1047, 0.0
      %v1139 = vadd.f32 %v1137, %v1138
      %v1140 = vsel %vm1052, %v1048, 0.0
      %v1141 = vadd.f32 %v1139, %v1140
      %v1142 = vsel %vm1052, %v1049, 0.0
      %v1143 = vadd.f32 %v1141, %v1142
      %v1144 = vsel %vm1052, %v1050, 0.0
      %v1145 = vadd.f32 %v1143, %v1144
      %v1146 = vsel %vm1052, %v1051, 0.0
      %v1147 = vadd.f32 %v1145, %v1146
      %v1148 = vrot.slane %v1147, 4
      %v1149 = vadd.f32 %v1147, %v1148
      %v1150 = vrot.slane %v1149, 2
      %v1151 = vadd.f32 %v1149, %v1150
      %v1152 = vrot.slane %v1151, 1
      %v1153 = vadd.f32 %v1151, %v1152
      %vm1154 = vcmask 253952
      %1155 = vst.msk [vmem:[%s238] sm:$0x1] %vm1154, %v1153
      %v1156 = vmul.f32 %v1020, %v1020
      %v1157 = vmul.f32 %v1021, %v1021
      %v1158 = vmul.f32 %v1022, %v1022
      %v1159 = vmul.f32 %v1023, %v1023
      %v1160 = vmul.f32 %v1024, %v1024
      %v1161 = vmul.f32 %v1025, %v1025
      %v1162 = vmul.f32 %v1026, %v1026
      %v1163 = vmul.f32 %v1027, %v1027
      %v1164 = vmul.f32 %v1028, %v1028
      %v1165 = vmul.f32 %v1029, %v1029
      %v1166 = vmul.f32 %v1030, %v1030
      %v1167 = vmul.f32 %v1031, %v1031
      %v1168 = vmul.f32 %v1032, %v1032
      %v1169 = vmul.f32 %v1033, %v1033
      %v1170 = vmul.f32 %v1034, %v1034
      %v1171 = vmul.f32 %v1035, %v1035
      %v1172 = vmul.f32 %v1036, %v1036
      %v1173 = vmul.f32 %v1037, %v1037
      %v1174 = vmul.f32 %v1038, %v1038
      %v1175 = vmul.f32 %v1039, %v1039
      %v1176 = vmul.f32 %v1040, %v1040
      %v1177 = vmul.f32 %v1041, %v1041
      %v1178 = vmul.f32 %v1042, %v1042
      %v1179 = vmul.f32 %v1043, %v1043
      %v1180 = vmul.f32 %v1044, %v1044
      %v1181 = vmul.f32 %v1045, %v1045
      %v1182 = vmul.f32 %v1046, %v1046
      %v1183 = vmul.f32 %v1047, %v1047
      %v1184 = vmul.f32 %v1048, %v1048
      %v1185 = vmul.f32 %v1049, %v1049
      %v1186 = vmul.f32 %v1050, %v1050
      %v1187 = vmul.f32 %v1051, %v1051
      %v1188 = vsel %vm1052, %v1156, 0.0
      %v1189 = vsel %vm1052, %v1157, 0.0
      %v1190 = vadd.f32 %v1188, %v1189
      %v1191 = vsel %vm1052, %v1158, 0.0
      %v1192 = vadd.f32 %v1190, %v1191
      %v1193 = vsel %vm1052, %v1159, 0.0
      %v1194 = vadd.f32 %v1192, %v1193
      %v1195 = vsel %vm1052, %v1160, 0.0
      %v1196 = vadd.f32 %v1194, %v1195
      %v1197 = vsel %vm1052, %v1161, 0.0
      %v1198 = vadd.f32 %v1196, %v1197
      %v1199 = vsel %vm1052, %v1162, 0.0
      %v1200 = vadd.f32 %v1198, %v1199
      %v1201 = vsel %vm1052, %v1163, 0.0
      %v1202 = vadd.f32 %v1200, %v1201
      %v1203 = vsel %vm1052, %v1164, 0.0
      %v1204 = vadd.f32 %v1202, %v1203
      %v1205 = vsel %vm1052, %v1165, 0.0
      %v1206 = vadd.f32 %v1204, %v1205
      %v1207 = vsel %vm1052, %v1166, 0.0
      %v1208 = vadd.f32 %v1206, %v1207
      %v1209 = vsel %vm1052, %v1167, 0.0
      %v1210 = vadd.f32 %v1208, %v1209
      %v1211 = vsel %vm1052, %v1168, 0.0
      %v1212 = vadd.f32 %v1210, %v1211
      %v1213 = vsel %vm1052, %v1169, 0.0
      %v1214 = vadd.f32 %v1212, %v1213
      %v1215 = vsel %vm1052, %v1170, 0.0
      %v1216 = vadd.f32 %v1214, %v1215
      %v1217 = vsel %vm1052, %v1171, 0.0
      %v1218 = vadd.f32 %v1216, %v1217
      %v1219 = vsel %vm1052, %v1172, 0.0
      %v1220 = vadd.f32 %v1218, %v1219
      %v1221 = vsel %vm1052, %v1173, 0.0
      %v1222 = vadd.f32 %v1220, %v1221
      %v1223 = vsel %vm1052, %v1174, 0.0
      %v1224 = vadd.f32 %v1222, %v1223
      %v1225 = vsel %vm1052, %v1175, 0.0
      %v1226 = vadd.f32 %v1224, %v1225
      %v1227 = vsel %vm1052, %v1176, 0.0
      %v1228 = vadd.f32 %v1226, %v1227
      %v1229 = vsel %vm1052, %v1177, 0.0
      %v1230 = vadd.f32 %v1228, %v1229
      %v1231 = vsel %vm1052, %v1178, 0.0
      %v1232 = vadd.f32 %v1230, %v1231
      %v1233 = vsel %vm1052, %v1179, 0.0
      %v1234 = vadd.f32 %v1232, %v1233
      %v1235 = vsel %vm1052, %v1180, 0.0
      %v1236 = vadd.f32 %v1234, %v1235
      %v1237 = vsel %vm1052, %v1181, 0.0
      %v1238 = vadd.f32 %v1236, %v1237
      %v1239 = vsel %vm1052, %v1182, 0.0
      %v1240 = vadd.f32 %v1238, %v1239
      %v1241 = vsel %vm1052, %v1183, 0.0
      %v1242 = vadd.f32 %v1240, %v1241
      %v1243 = vsel %vm1052, %v1184, 0.0
      %v1244 = vadd.f32 %v1242, %v1243
      %v1245 = vsel %vm1052, %v1185, 0.0
      %v1246 = vadd.f32 %v1244, %v1245
      %v1247 = vsel %vm1052, %v1186, 0.0
      %v1248 = vadd.f32 %v1246, %v1247
      %v1249 = vsel %vm1052, %v1187, 0.0
      %v1250 = vadd.f32 %v1248, %v1249
      %v1251 = vrot.slane %v1250, 4
      %v1252 = vadd.f32 %v1250, %v1251
      %v1253 = vrot.slane %v1252, 2
      %v1254 = vadd.f32 %v1252, %v1253
      %v1255 = vrot.slane %v1254, 1
      %v1256 = vadd.f32 %v1254, %v1255
      %1257 = vst.msk [vmem:[%s241] sm:$0x1] %vm1154, %v1256
      %p1258 = scmp.lt.s32.totalorder %s17, 1
      %s1259 = scalar_select %p1258, %s17, 1
      %s1260 = smul.addr %s1259, 32
      %s1261 = smul.addr %s1260, 8
      %s1262 = scalar_lea.vmem %s3, %s1261
      %p1263 = scmp.lt.s32.totalorder %s17, 1
      %s1264 = scalar_select %p1263, %s17, 1
      %s1265 = scalar_lea.vmem %s4, %s1264
      %p1266 = scmp.lt.s32.totalorder %s17, 1
      %s1267 = scalar_select %p1266, %s17, 1
      %s1268 = scalar_lea.vmem %s5, %s1267
      // Predicated region
      $region33: #{vgg_forward.10} parent=31 // pred_check
        %p1269 = pneg %p103
      $region34: #{vgg_forward.10} parent=31 // pred_check_branch
        %1271 = sbr.rel (%p1269) target = $region36
      $region35: #{vgg_forward.10} parent=31 // pred_region
        _
      $region36: #{vgg_forward.10} parent=31 // pred_fallthru
        _
      // Predicated region
      $region37: #{vgg_forward.10} parent=31 // pred_check
        %p1272 = pneg %p129
      $region38: #{vgg_forward.10} parent=31 // pred_check_branch
        %1274 = sbr.rel (%p1272) target = $region40
      $region39: #{vgg_forward.10} parent=31 // pred_region
        _
      $region40: #{vgg_forward.10} parent=31 // pred_fallthru
        _
      // Predicated region
      $region41: #{vgg_forward.10} parent=31 // pred_check
        %p1275 = pneg %p155
      $region42: #{vgg_forward.10} parent=31 // pred_check_branch
        %1277 = sbr.rel (%p1275) target = $region44
      $region43: #{vgg_forward.10} parent=31 // pred_region
        _
      $region44: #{vgg_forward.10} parent=31 // pred_fallthru
        _
    $region32: #{vgg_forward.10} parent=5 // pred_fallthru
      _
    %p1278 = scmp.le.s32.totalorder 2, %s12
    // Predicated region
    $region45: #{vgg_forward.10} parent=5 // pred_check
      %p1279 = pneg %p1278
    $region46: #{vgg_forward.10} parent=5 // pred_check_branch
      %1281 = sbr.rel (%p1279) target = $region48
    $region47: #{vgg_forward.10} parent=5 // pred_region
      %s1282 = ssub.s32 %s12, 2
      // Predicated region
      $region49: #{vgg_forward.10} parent=47 // pred_check
        %p1283 = pneg %p109
      $region50: #{vgg_forward.10} parent=47 // pred_check_branch
        %1285 = sbr.rel (%p1283) target = $region52
      $region51: #{vgg_forward.10} parent=47 // pred_region
        %p1286 = scmp.lt.s32.totalorder %s18, 1
        %s1287 = scalar_select %p1286, %s18, 1
        %s1288 = smul.addr %s1287, 32
        %s1289 = smul.addr %s1288, 8
        %s1290 = scalar_lea.vmem %s3, %s1289
      $region52: #{vgg_forward.10} parent=47 // pred_fallthru
        _
      // Predicated region
      $region53: #{vgg_forward.10} parent=47 // pred_check
        %p1291 = pneg %p135
      $region54: #{vgg_forward.10} parent=47 // pred_check_branch
        %1293 = sbr.rel (%p1291) target = $region56
      $region55: #{vgg_forward.10} parent=47 // pred_region
        %p1294 = scmp.lt.s32.totalorder %s18, 1
        %s1295 = scalar_select %p1294, %s18, 1
        %s1296 = scalar_lea.vmem %s4, %s1295
      $region56: #{vgg_forward.10} parent=47 // pred_fallthru
        _
      // Predicated region
      $region57: #{vgg_forward.10} parent=47 // pred_check
        %p1297 = pneg %p161
      $region58: #{vgg_forward.10} parent=47 // pred_check_branch
        %1299 = sbr.rel (%p1297) target = $region60
      $region59: #{vgg_forward.10} parent=47 // pred_region
        %p1300 = scmp.lt.s32.totalorder %s18, 1
        %s1301 = scalar_select %p1300, %s18, 1
        %s1302 = scalar_lea.vmem %s5, %s1301
      $region60: #{vgg_forward.10} parent=47 // pred_fallthru
        _
    $region48: #{vgg_forward.10} parent=5 // pred_fallthru
      _
  $region6: #{vgg_forward.10} parent=0 // loop_footer
    %s16 = sadd.s32 1, %s12
  $region7: #{vgg_forward.10} parent=0 // loop_footer_branch
    %11 = sbr.rel target = $region3
  $region8: #{vgg_forward.10} parent=0 // loop_exit
    _

// kernel: vgg_forward.12
$region0: #{vgg_forward.12}
  #allocation0 [shape = 'u32[]', space=smem, size = 0x4, offset = 0x4, fixed_abs, tag = 'smem constant byte address 0x4 - core index']
  #allocation1 [shape = 'u32[144,128]{1,0:T(1,128)}', space=vmem, size = 0x12000, scoped, tag = 'internal scratch']
  %s0 = inlined_call_operand.vmem [shape: f32[2,10,8,96], index: 0, kind: input, shape index: {}]
  %s1 = inlined_call_operand.vmem [shape: bf16[3,96,64], index: 1, kind: input, shape index: {}]
  %s2 = inlined_call_operand.vmem [shape: f32[1,64], index: 2, kind: input, shape index: {}]
  %s3 = inlined_call_operand.vmem [shape: f32[2,64,64], index: 3, kind: output, shape index: {0}]
  %s4 = inlined_call_operand.vmem [shape: f32[2,1,64], index: 4, kind: output, shape index: {1}]
  %s5 = inlined_call_operand.vmem [shape: f32[2,1,64], index: 5, kind: output, shape index: {2}]
  %6 = xla_tuple %s3, %s4, %s5
  %s7 = sld [smem:[#allocation0]]
  $region61: #{vgg_forward.12} parent=0
    _
  %s9 = ssub.s32 1, %s7
  %s10 = scalar_select 0, %s9, %s7
  loop: start=0, step=1, limit=4
  $region2: #{vgg_forward.12} parent=0 // loop_pre_header
    _
  $region3: #{vgg_forward.12} parent=0 // loop_header
    %s12 = sphi 0, %s16
    %p13 = scmp.ge.s32.totalorder %s12, 4
    %s22 = sphi 0, %s24
    %s25 = sphi 0, %s22
    %s26 = sphi 0, %s25
    %s42 = sphi 0, %s26
    %s46 = sphi 0, %s46
    %s48 = sphi 0, %s46
    %s49 = sphi 0, %s48
    %s63 = sphi 0, %s49
    %s67 = sphi 0, %s67
    %s69 = sphi 0, %s67
    %s70 = sphi 0, %s69
    %s84 = sphi 0, %s70
    %s90 = sphi 0, %s92
    %s93 = sphi 0, %s90
    %s94 = sphi 0, %s93
    %s110 = sphi 0, %s94
    %s116 = sphi 0, %s118
    %s119 = sphi 0, %s116
    %s120 = sphi 0, %s119
    %s136 = sphi 0, %s120
    %s142 = sphi 0, %s144
    %s145 = sphi 0, %s142
    %s146 = sphi 0, %s145
    %s162 = sphi 0, %s146
  $region4: #{vgg_forward.12} parent=0 // loop_header_branch
    %15 = sbr.rel (%p13) target = $region8
  $region5: #{vgg_forward.12} parent=0 // loop_body
    %s17 = ssub.s32 %s12, 1
    %s18 = ssub.s32 %s12, 2
    %s19 = sadd.s32 %s12, 1
    %s20 = ssub.s32 %s12, %s19
    %p21 = scmp.eq.s32.totalorder %s20, 0
    %s23 = sadd.s32 %s22, 1
    %s24 = scalar_select %p21, %s22, %s23
    %p27 = pneg %p21
    %p28 = scmp.eq.s32.totalorder %s12, 1
    %p29 = por %p27, %p28
    %p30 = scmp.ne.s32.totalorder %s22, %s25
    %p31 = scmp.eq.s32.totalorder %s12, 0
    %p32 = por %p30, %p31
    %p33 = scmp.ne.s32.totalorder %s22, %s25
    %p34 = scmp.eq.s32.totalorder %s17, 1
    %p35 = por %p33, %p34
    %p36 = scmp.ne.s32.totalorder %s25, %s26
    %p37 = scmp.eq.s32.totalorder %s17, 0
    %p38 = por %p36, %p37
    %p39 = scmp.ne.s32.totalorder %s25, %s26
    %p40 = scmp.eq.s32.totalorder %s18, 1
    %p41 = por %p39, %p40
    %p43 = scmp.ne.s32.totalorder %s26, %s42
    %p44 = scmp.eq.s32.totalorder %s18, 0
    %p45 = por %p43, %p44
    %s47 = sadd.s32 %s46, 1
    %p50 = scmp.eq.s32.totalorder %s12, 1
    %p51 = scmp.ne.s32.totalorder %s46, %s48
    %p52 = scmp.eq.s32.totalorder %s12, 0
    %p53 = por %p51, %p52
    %p54 = scmp.ne.s32.totalorder %s46, %s48
    %p55 = scmp.eq.s32.totalorder %s17, 1
    %p56 = por %p54, %p55
    %p57 = scmp.ne.s32.totalorder %s48, %s49
    %p58 = scmp.eq.s32.totalorder %s17, 0
    %p59 = por %p57, %p58
    %p60 = scmp.ne.s32.totalorder %s48, %s49
    %p61 = scmp.eq.s32.totalorder %s18, 1
    %p62 = por %p60, %p61
    %p64 = scmp.ne.s32.totalorder %s49, %s63
    %p65 = scmp.eq.s32.totalorder %s18, 0
    %p66 = por %p64, %p65
    %s68 = sadd.s32 %s67, 1
    %p71 = scmp.eq.s32.totalorder %s12, 1
    %p72 = scmp.ne.s32.totalorder %s67, %s69
    %p73 = scmp.eq.s32.totalorder %s12, 0
    %p74 = por %p72, %p73
    %p75 = scmp.ne.s32.totalorder %s67, %s69
    %p76 = scmp.eq.s32.totalorder %s17, 1
    %p77 = por %p75, %p76
    %p78 = scmp.ne.s32.totalorder %s69, %s70
    %p79 = scmp.eq.s32.totalorder %s17, 0
    %p80 = por %p78, %p79
    %p81 = scmp.ne.s32.totalorder %s69, %s70
    %p82 = scmp.eq.s32.totalorder %s18, 1
    %p83 = por %p81, %p82
    %p85 = scmp.ne.s32.totalorder %s70, %s84
    %p86 = scmp.eq.s32.totalorder %s18, 0
    %p87 = por %p85, %p86
    %s88 = ssub.s32 %s12, %s19
    %p89 = scmp.eq.s32.totalorder %s88, 0
    %s91 = sadd.s32 %s90, 1
    %s92 = scalar_select %p89, %s90, %s91
    %p95 = pneg %p89
    %p96 = scmp.eq.s32.totalorder %s12, 1
    %p97 = por %p95, %p96
    %p98 = scmp.ne.s32.totalorder %s90, %s93
    %p99 = scmp.eq.s32.totalorder %s12, 0
    %p100 = por %p98, %p99
    %p101 = scmp.ne.s32.totalorder %s90, %s93
    %p102 = scmp.eq.s32.totalorder %s17, 1
    %p103 = por %p101, %p102
    %p104 = scmp.ne.s32.totalorder %s93, %s94
    %p105 = scmp.eq.s32.totalorder %s17, 0
    %p106 = por %p104, %p105
    %p107 = scmp.ne.s32.totalorder %s93, %s94
    %p108 = scmp.eq.s32.totalorder %s18, 1
    %p109 = por %p107, %p108
    %p111 = scmp.ne.s32.totalorder %s94, %s110
    %p112 = scmp.eq.s32.totalorder %s18, 0
    %p113 = por %p111, %p112
    %s114 = ssub.s32 %s12, %s19
    %p115 = scmp.eq.s32.totalorder %s114, 0
    %s117 = sadd.s32 %s116, 1
    %s118 = scalar_select %p115, %s116, %s117
    %p121 = pneg %p115
    %p122 = scmp.eq.s32.totalorder %s12, 1
    %p123 = por %p121, %p122
    %p124 = scmp.ne.s32.totalorder %s116, %s119
    %p125 = scmp.eq.s32.totalorder %s12, 0
    %p126 = por %p124, %p125
    %p127 = scmp.ne.s32.totalorder %s116, %s119
    %p128 = scmp.eq.s32.totalorder %s17, 1
    %p129 = por %p127, %p128
    %p130 = scmp.ne.s32.totalorder %s119, %s120
    %p131 = scmp.eq.s32.totalorder %s17, 0
    %p132 = por %p130, %p131
    %p133 = scmp.ne.s32.totalorder %s119, %s120
    %p134 = scmp.eq.s32.totalorder %s18, 1
    %p135 = por %p133, %p134
    %p137 = scmp.ne.s32.totalorder %s120, %s136
    %p138 = scmp.eq.s32.totalorder %s18, 0
    %p139 = por %p137, %p138
    %s140 = ssub.s32 %s12, %s19
    %p141 = scmp.eq.s32.totalorder %s140, 0
    %s143 = sadd.s32 %s142, 1
    %s144 = scalar_select %p141, %s142, %s143
    %p147 = pneg %p141
    %p148 = scmp.eq.s32.totalorder %s12, 1
    %p149 = por %p147, %p148
    %p150 = scmp.ne.s32.totalorder %s142, %s145
    %p151 = scmp.eq.s32.totalorder %s12, 0
    %p152 = por %p150, %p151
    %p153 = scmp.ne.s32.totalorder %s142, %s145
    %p154 = scmp.eq.s32.totalorder %s17, 1
    %p155 = por %p153, %p154
    %p156 = scmp.ne.s32.totalorder %s145, %s146
    %p157 = scmp.eq.s32.totalorder %s17, 0
    %p158 = por %p156, %p157
    %p159 = scmp.ne.s32.totalorder %s145, %s146
    %p160 = scmp.eq.s32.totalorder %s18, 1
    %p161 = por %p159, %p160
    %p163 = scmp.ne.s32.totalorder %s146, %s162
    %p164 = scmp.eq.s32.totalorder %s18, 0
    %p165 = por %p163, %p164
    %p166 = scmp.le.s32.totalorder 1, %s12
    %p167 = scmp.lt.s32.totalorder %s12, 3
    %p168 = pnand %p166, %p167
    %p169 = pneg %p168
    // Predicated region
    $region9: #{vgg_forward.12} parent=5 // pred_check
      _
    $region10: #{vgg_forward.12} parent=5 // pred_check_branch
      %171 = sbr.rel (%p168) target = $region12
    $region11: #{vgg_forward.12} parent=5 // pred_region
      %s172 = ssub.s32 %s12, 1
      // Predicated region
      $region13: #{vgg_forward.12} parent=11 // pred_check
        %p173 = pneg %p59
      $region14: #{vgg_forward.12} parent=11 // pred_check_branch
        %175 = sbr.rel (%p173) target = $region16
      $region15: #{vgg_forward.12} parent=11 // pred_region
        _
      $region16: #{vgg_forward.12} parent=11 // pred_fallthru
        _
      // Predicated region
      $region17: #{vgg_forward.12} parent=11 // pred_check
        %p176 = pneg %p80
      $region18: #{vgg_forward.12} parent=11 // pred_check_branch
        %178 = sbr.rel (%p176) target = $region20
      $region19: #{vgg_forward.12} parent=11 // pred_region
        _
      $region20: #{vgg_forward.12} parent=11 // pred_fallthru
        _
    $region12: #{vgg_forward.12} parent=5 // pred_fallthru
      _
    %p179 = scmp.lt.s32.totalorder %s12, 2
    // Predicated region
    $region21: #{vgg_forward.12} parent=5 // pred_check
      %p180 = pneg %p179
    $region22: #{vgg_forward.12} parent=5 // pred_check_branch
      %182 = sbr.rel (%p180) target = $region24
    $region23: #{vgg_forward.12} parent=5 // pred_region
      // Predicated region
      $region25: #{vgg_forward.12} parent=23 // pred_check
        %p183 = pneg %p32
      $region26: #{vgg_forward.12} parent=23 // pred_check_branch
        %185 = sbr.rel (%p183) target = $region28
      $region27: #{vgg_forward.12} parent=23 // pred_region
        %p186 = scmp.lt.s32.totalorder %s12, 1
        %s187 = scalar_select %p186, %s12, 1
        %s188 = smul.addr %s187, 10
        %s189 = smul.addr %s188, 8
        %s190 = scalar_lea.vmem %s0, %s189
      $region28: #{vgg_forward.12} parent=23 // pred_fallthru
        _
    $region24: #{vgg_forward.12} parent=5 // pred_fallthru
      _
    %p191 = scmp.le.s32.totalorder 1, %s12
    %p192 = scmp.lt.s32.totalorder %s12, 3
    %p193 = pnand %p191, %p192
    %p194 = pneg %p193
    // Predicated region
    $region29: #{vgg_forward.12} parent=5 // pred_check
      _
    $region30: #{vgg_forward.12} parent=5 // pred_check_branch
      %196 = sbr.rel (%p193) target = $region32
    $region31: #{vgg_forward.12} parent=5 // pred_region
      %s197 = ssub.s32 %s12, 1
      %p198 = scmp.lt.s32.totalorder %s17, 1
      %s199 = scalar_select %p198, %s17, 1
      %s200 = smul.addr %s199, 10
      %s201 = smul.addr %s200, 8
      %s202 = scalar_lea.vmem %s0, %s201
      %p203 = pneg %p38
      %p204 = pneg %p35
      %p205 = pneg %p59
      %p206 = pneg %p56
      %p207 = pneg %p80
      %p208 = pneg %p77
      %p209 = pneg %p106
      %p210 = pneg %p103
      %p211 = scmp.lt.s32.totalorder %s17, 1
      %s212 = scalar_select %p211, %s17, 1
      %s213 = smul.addr %s212, 8
      %s214 = smul.addr %s213, 8
      %s215 = scalar_lea.vmem %s3, %s214
      %p216 = pneg %p132
      %p217 = pneg %p129
      %p218 = scmp.lt.s32.totalorder %s17, 1
      %s219 = scalar_select %p218, %s17, 1
      %s220 = scalar_lea.vmem %s4, %s219
      %p221 = pneg %p158
      %p222 = pneg %p155
      %p223 = scmp.lt.s32.totalorder %s17, 1
      %s224 = scalar_select %p223, %s17, 1
      %s225 = scalar_lea.vmem %s5, %s224
      %p226 = scmp.lt.s32.totalorder %s17, 1
      %s227 = scalar_select %p226, %s17, 1
      %s228 = smul.addr %s227, 10
      %s229 = smul.addr %s228, 8
      %s230 = scalar_lea.vmem %s0, %s229
      %p231 = scmp.lt.s32.totalorder %s17, 1
      %s232 = scalar_select %p231, %s17, 1
      %s233 = smul.addr %s232, 8
      %s234 = smul.addr %s233, 8
      %s235 = scalar_lea.vmem %s3, %s234
      %p236 = scmp.lt.s32.totalorder %s17, 1
      %s237 = scalar_select %p236, %s17, 1
      %s238 = scalar_lea.vmem %s4, %s237
      %p239 = scmp.lt.s32.totalorder %s17, 1
      %s240 = scalar_select %p239, %s17, 1
      %s241 = scalar_lea.vmem %s5, %s240
      %v243 = vld [vmem:[%s230] sm:$0xff]
      %v244 = vld [vmem:[%s230 + $0x8] sm:$0xff]
      %v245 = vld [vmem:[%s230 + $0x10] sm:$0xff]
      %v246 = vld [vmem:[%s230 + $0x18] sm:$0xff]
      %v247 = vld [vmem:[%s230 + $0x20] sm:$0xff]
      %v248 = vld [vmem:[%s230 + $0x28] sm:$0xff]
      %v249 = vld [vmem:[%s230 + $0x30] sm:$0xff]
      %v250 = vld [vmem:[%s230 + $0x38] sm:$0xff]
      %v251 = vld [vmem:[%s230 + $0x40] sm:$0xff]
      %v252 = vld [vmem:[%s230 + $0x48] sm:$0xff]
      %v253 = vpack.c.bf16 %v244, %v243
      %v254 = vpack.c.bf16 %v246, %v245
      %v255 = vpack.c.bf16 %v248, %v247
      %v256 = vpack.c.bf16 %v250, %v249
      %v257 = vld [vmem:[%s1] sm:$0xf]
      %v258 = vld [vmem:[%s1 + $0x4] sm:$0xf]
      %v259 = vld [vmem:[%s1 + $0x8] sm:$0xf]
      %v260 = vld [vmem:[%s1 + $0xc] sm:$0xf]
      %v261 = vld [vmem:[%s1 + $0x10] sm:$0xf]
      %v262 = vld [vmem:[%s1 + $0x14] sm:$0xf]
      %v263 = vld [vmem:[%s1 + $0x18] sm:$0xf]
      %v264 = vld [vmem:[%s1 + $0x1c] sm:$0xf]
      %v265 = vld [vmem:[%s1 + $0x20] sm:$0xf]
      %v266 = vld [vmem:[%s1 + $0x24] sm:$0xf]
      %v267 = vld [vmem:[%s1 + $0x28] sm:$0xf]
      %v268 = vld [vmem:[%s1 + $0x2c] sm:$0xf]
      %v269 = vpack.c.bf16 %v245, %v244
      %v270 = vpack.c.bf16 %v247, %v246
      %v271 = vpack.c.bf16 %v249, %v248
      %v272 = vpack.c.bf16 %v251, %v250
      %s273 = scalar_lea.vmem %s1, 48
      %v274 = vld [vmem:[%s273] sm:$0xf]
      %v275 = vld [vmem:[%s273 + $0x4] sm:$0xf]
      %v276 = vld [vmem:[%s273 + $0x8] sm:$0xf]
      %v277 = vld [vmem:[%s273 + $0xc] sm:$0xf]
      %v278 = vld [vmem:[%s273 + $0x10] sm:$0xf]
      %v279 = vld [vmem:[%s273 + $0x14] sm:$0xf]
      %v280 = vld [vmem:[%s273 + $0x18] sm:$0xf]
      %v281 = vld [vmem:[%s273 + $0x1c] sm:$0xf]
      %v282 = vld [vmem:[%s273 + $0x20] sm:$0xf]
      %v283 = vld [vmem:[%s273 + $0x24] sm:$0xf]
      %v284 = vld [vmem:[%s273 + $0x28] sm:$0xf]
      %v285 = vld [vmem:[%s273 + $0x2c] sm:$0xf]
      %v298 = vunpack.c.l.b16 %v274
      %v299 = vunpack.c.l.b16 %v275
      %v300 = vunpack.c.l.b16 %v276
      %v301 = vunpack.c.l.b16 %v277
      %v302 = vunpack.c.l.b16 %v278
      %v303 = vunpack.c.l.b16 %v279
      %v304 = vunpack.c.l.b16 %v280
      %v305 = vunpack.c.l.b16 %v281
      %v306 = vunpack.c.l.b16 %v282
      %v307 = vunpack.c.l.b16 %v283
      %v308 = vunpack.c.l.b16 %v284
      %v309 = vunpack.c.l.b16 %v285
      %v310 = vpack.c.b16 %v299, %v298
      %v311 = vpack.c.b16 %v301, %v300
      %v312 = vpack.c.b16 %v303, %v302
      %v313 = vpack.c.b16 %v305, %v304
      %v314 = vpack.c.b16 %v307, %v306
      %v315 = vpack.c.b16 %v309, %v308
      %vm322 = vcmask 785408
      %v324 = vsel %vm322, %v269, 0
      %v327 = vsel %vm322, %v270, 0
      %v330 = vsel %vm322, %v271, 0
      %v333 = vsel %vm322, %v272, 0
      %335 = vmatprep.subr.bf16.mxu0 0
      %336 = vmatpush1.bf16.msra.mxu0 %v310
      %337 = vmatprep.subr.bf16.mxu0 0
      %338 = vmatpush1.bf16.msra.mxu0 %v311
      %339 = vmatprep.subr.bf16.mxu0 0
      %340 = vmatpush1.bf16.msra.mxu0 %v312
      %341 = vmatprep.subr.bf16.mxu0 0
      %342 = vmatpush1.bf16.msra.mxu0 %v313
      %343 = vmatprep.subr.bf16.mxu0 0
      %344 = vmatpush1.bf16.msra.mxu0 %v314
      %345 = vmatprep.subr.bf16.mxu0 0
      %346 = vmatpush1.bf16.msra.mxu0 %v315
      %347 = vmatprep.subr.bf16.mxu0 0
      %348 = vmatpush1.bf16.msra.mxu0 0
      %349 = vmatprep.subr.bf16.mxu0 0
      %350 = vmatpush1.bf16.msra.mxu0 0
      %351 = vmatprep.subr.bf16.mxu0 0
      %352 = vmatpush1.bf16.msra.mxu0 0
      %353 = vmatprep.subr.bf16.mxu0 0
      %354 = vmatpush1.bf16.msra.mxu0 0
      %355 = vmatprep.subr.bf16.mxu0 0
      %356 = vmatpush1.bf16.msra.mxu0 0
      %357 = vmatprep.subr.bf16.mxu0 0
      %358 = vmatpush1.bf16.msra.mxu0 0
      %359 = vmatprep.subr.bf16.mxu0 0
      %360 = vmatpush1.bf16.msra.mxu0 0
      %361 = vmatprep.subr.bf16.mxu0 0
      %362 = vmatpush1.bf16.msra.mxu0 0
      %363 = vmatprep.subr.bf16.mxu0 0
      %364 = vmatpush1.bf16.msra.mxu0 0
      %365 = vmatprep.subr.bf16.mxu0 0
      %366 = vmatpush1.bf16.msra.mxu0 0
      %367 = vmatprep.mubr.bf16.mxu0 0
      %368 = vmatmul.mubr.bf16.gmra.mrb[0].mxu0 %v324
      %v369 = vpop.f32.mrb[0].mxu0
      %v370 = vadd.f32 0.0, %v369
      %v371 = vpop.f32.mrb[0].mxu0
      %v372 = vpop.f32.mrb[0].mxu0
      %v373 = vadd.f32 0.0, %v372
      %v374 = vpop.f32.mrb[0].mxu0
      %375 = vmatprep.mubr.bf16.mxu0 0
      %376 = vmatmul.mubr.bf16.gmra.mrb[0].mxu0 %v327
      %v377 = vpop.f32.mrb[0].mxu0
      %v378 = vadd.f32 0.0, %v377
      %v379 = vpop.f32.mrb[0].mxu0
      %v380 = vpop.f32.mrb[0].mxu0
      %v381 = vadd.f32 0.0, %v380
      %v382 = vpop.f32.mrb[0].mxu0
      %383 = vmatprep.mubr.bf16.mxu0 0
      %384 = vmatmul.mubr.bf16.gmra.mrb[0].mxu0 %v330
      %v385 = vpop.f32.mrb[0].mxu0
      %v386 = vadd.f32 0.0, %v385
      %v387 = vpop.f32.mrb[0].mxu0
      %v388 = vpop.f32.mrb[0].mxu0
      %v389 = vadd.f32 0.0, %v388
      %v390 = vpop.f32.mrb[0].mxu0
      %391 = vmatprep.mubr.bf16.mxu0 0
      %392 = vmatmul.mubr.bf16.gmra.mrb[0].mxu0 %v333
      %v393 = vpop.f32.mrb[0].mxu0
      %v394 = vadd.f32 0.0, %v393
      %v395 = vpop.f32.mrb[0].mxu0
      %v396 = vpop.f32.mrb[0].mxu0
      %v397 = vadd.f32 0.0, %v396
      %v398 = vpop.f32.mrb[0].mxu0
      %399 = vdwg.mxu0
      %v412 = vunpack.c.l.b16 %v257
      %v413 = vunpack.c.l.b16 %v258
      %v414 = vunpack.c.l.b16 %v259
      %v415 = vunpack.c.l.b16 %v260
      %v416 = vunpack.c.l.b16 %v261
      %v417 = vunpack.c.l.b16 %v262
      %v418 = vunpack.c.l.b16 %v263
      %v419 = vunpack.c.l.b16 %v264
      %v420 = vunpack.c.l.b16 %v265
      %v421 = vunpack.c.l.b16 %v266
      %v422 = vunpack.c.l.b16 %v267
      %v423 = vunpack.c.l.b16 %v268
      %v424 = vpack.c.b16 %v413, %v412
      %v425 = vpack.c.b16 %v415, %v414
      %v426 = vpack.c.b16 %v417, %v416
      %v427 = vpack.c.b16 %v419, %v418
      %v428 = vpack.c.b16 %v421, %v420
      %v429 = vpack.c.b16 %v423, %v422
      %v437 = vsel %vm322, %v253, 0
      %v440 = vsel %vm322, %v254, 0
      %v443 = vsel %vm322, %v255, 0
      %v446 = vsel %vm322, %v256, 0
      %448 = vmatprep.subr.bf16.mxu0 0
      %449 = vmatpush1.bf16.msra.mxu0 %v424
      %450 = vmatprep.subr.bf16.mxu0 0
      %451 = vmatpush1.bf16.msra.mxu0 %v425
      %452 = vmatprep.subr.bf16.mxu0 0
      %453 = vmatpush1.bf16.msra.mxu0 %v426
      %454 = vmatprep.subr.bf16.mxu0 0
      %455 = vmatpush1.bf16.msra.mxu0 %v427
      %456 = vmatprep.subr.bf16.mxu0 0
      %457 = vmatpush1.bf16.msra.mxu0 %v428
      %458 = vmatprep.subr.bf16.mxu0 0
      %459 = vmatpush1.bf16.msra.mxu0 %v429
      %460 = vmatprep.subr.bf16.mxu0 0
      %461 = vmatpush1.bf16.msra.mxu0 0
      %462 = vmatprep.subr.bf16.mxu0 0
      %463 = vmatpush1.bf16.msra.mxu0 0
      %464 = vmatprep.subr.bf16.mxu0 0
      %465 = vmatpush1.bf16.msra.mxu0 0
      %466 = vmatprep.subr.bf16.mxu0 0
      %467 = vmatpush1.bf16.msra.mxu0 0
      %468 = vmatprep.subr.bf16.mxu0 0
      %469 = vmatpush1.bf16.msra.mxu0 0
      %470 = vmatprep.subr.bf16.mxu0 0
      %471 = vmatpush1.bf16.msra.mxu0 0
      %472 = vmatprep.subr.bf16.mxu0 0
      %473 = vmatpush1.bf16.msra.mxu0 0
      %474 = vmatprep.subr.bf16.mxu0 0
      %475 = vmatpush1.bf16.msra.mxu0 0
      %476 = vmatprep.subr.bf16.mxu0 0
      %477 = vmatpush1.bf16.msra.mxu0 0
      %478 = vmatprep.subr.bf16.mxu0 0
      %479 = vmatpush1.bf16.msra.mxu0 0
      %480 = vmatprep.mubr.bf16.mxu0 0
      %481 = vmatmul.mubr.bf16.gmra.mrb[0].mxu0 %v437
      %v482 = vpop.f32.mrb[0].mxu0
      %v483 = vadd.f32 %v370, %v482
      %v484 = vpop.f32.mrb[0].mxu0
      %v485 = vpop.f32.mrb[0].mxu0
      %v486 = vadd.f32 %v373, %v485
      %v487 = vpop.f32.mrb[0].mxu0
      %488 = vmatprep.mubr.bf16.mxu0 0
      %489 = vmatmul.mubr.bf16.gmra.mrb[0].mxu0 %v440
      %v490 = vpop.f32.mrb[0].mxu0
      %v491 = vadd.f32 %v378, %v490
      %v492 = vpop.f32.mrb[0].mxu0
      %v493 = vpop.f32.mrb[0].mxu0
      %v494 = vadd.f32 %v381, %v493
      %v495 = vpop.f32.mrb[0].mxu0
      %496 = vmatprep.mubr.bf16.mxu0 0
      %497 = vmatmul.mubr.bf16.gmra.mrb[0].mxu0 %v443
      %v498 = vpop.f32.mrb[0].mxu0
      %v499 = vadd.f32 %v386, %v498
      %v500 = vpop.f32.mrb[0].mxu0
      %v501 = vpop.f32.mrb[0].mxu0
      %v502 = vadd.f32 %v389, %v501
      %v503 = vpop.f32.mrb[0].mxu0
      %504 = vmatprep.mubr.bf16.mxu0 0
      %505 = vmatmul.mubr.bf16.gmra.mrb[0].mxu0 %v446
      %v506 = vpop.f32.mrb[0].mxu0
      %v507 = vadd.f32 %v394, %v506
      %v508 = vpop.f32.mrb[0].mxu0
      %v509 = vpop.f32.mrb[0].mxu0
      %v510 = vadd.f32 %v397, %v509
      %v511 = vpop.f32.mrb[0].mxu0
      %512 = vdwg.mxu0
      %v513 = vpack.c.bf16 %v252, %v251
      %s514 = scalar_lea.vmem %s1, 96
      %v515 = vld [vmem:[%s514] sm:$0xf]
      %v516 = vld [vmem:[%s514 + $0x4] sm:$0xf]
      %v517 = vld [vmem:[%s514 + $0x8] sm:$0xf]
      %v518 = vld [vmem:[%s514 + $0xc] sm:$0xf]
      %v519 = vld [vmem:[%s514 + $0x10] sm:$0xf]
      %v520 = vld [vmem:[%s514 + $0x14] sm:$0xf]
      %v521 = vld [vmem:[%s514 + $0x18] sm:$0xf]
      %v522 = vld [vmem:[%s514 + $0x1c] sm:$0xf]
      %v523 = vld [vmem:[%s514 + $0x20] sm:$0xf]
      %v524 = vld [vmem:[%s514 + $0x24] sm:$0xf]
      %v525 = vld [vmem:[%s514 + $0x28] sm:$0xf]
      %v526 = vld [vmem:[%s514 + $0x2c] sm:$0xf]
      %v539 = vunpack.c.l.b16 %v515
      %v540 = vunpack.c.l.b16 %v516
      %v541 = vunpack.c.l.b16 %v517
      %v542 = vunpack.c.l.b16 %v518
      %v543 = vunpack.c.l.b16 %v519
      %v544 = vunpack.c.l.b16 %v520
      %v545 = vunpack.c.l.b16 %v521
      %v546 = vunpack.c.l.b16 %v522
      %v547 = vunpack.c.l.b16 %v523
      %v548 = vunpack.c.l.b16 %v524
      %v549 = vunpack.c.l.b16 %v525
      %v550 = vunpack.c.l.b16 %v526
      %v551 = vpack.c.b16 %v540, %v539
      %v552 = vpack.c.b16 %v542, %v541
      %v553 = vpack.c.b16 %v544, %v543
      %v554 = vpack.c.b16 %v546, %v545
      %v555 = vpack.c.b16 %v548, %v547
      %v556 = vpack.c.b16 %v550, %v549
      %v564 = vsel %vm322, %v513, 0
      %566 = vmatprep.subr.bf16.mxu0 0
      %567 = vmatpush1.bf16.msra.mxu0 %v551
      %568 = vmatprep.subr.bf16.mxu0 0
      %569 = vmatpush1.bf16.msra.mxu0 %v552
      %570 = vmatprep.subr.bf16.mxu0 0
      %571 = vmatpush1.bf16.msra.mxu0 %v553
      %572 = vmatprep.subr.bf16.mxu0 0
      %573 = vmatpush1.bf16.msra.mxu0 %v554
      %574 = vmatprep.subr.bf16.mxu0 0
      %575 = vmatpush1.bf16.msra.mxu0 %v555
      %576 = vmatprep.subr.bf16.mxu0 0
      %577 = vmatpush1.bf16.msra.mxu0 %v556
      %578 = vmatprep.subr.bf16.mxu0 0
      %579 = vmatpush1.bf16.msra.mxu0 0
      %580 = vmatprep.subr.bf16.mxu0 0
      %581 = vmatpush1.bf16.msra.mxu0 0
      %582 = vmatprep.subr.bf16.mxu0 0
      %583 = vmatpush1.bf16.msra.mxu0 0
      %584 = vmatprep.subr.bf16.mxu0 0
      %585 = vmatpush1.bf16.msra.mxu0 0
      %586 = vmatprep.subr.bf16.mxu0 0
      %587 = vmatpush1.bf16.msra.mxu0 0
      %588 = vmatprep.subr.bf16.mxu0 0
      %589 = vmatpush1.bf16.msra.mxu0 0
      %590 = vmatprep.subr.bf16.mxu0 0
      %591 = vmatpush1.bf16.msra.mxu0 0
      %592 = vmatprep.subr.bf16.mxu0 0
      %593 = vmatpush1.bf16.msra.mxu0 0
      %594 = vmatprep.subr.bf16.mxu0 0
      %595 = vmatpush1.bf16.msra.mxu0 0
      %596 = vmatprep.subr.bf16.mxu0 0
      %597 = vmatpush1.bf16.msra.mxu0 0
      %598 = vmatprep.mubr.bf16.mxu0 0
      %599 = vmatmul.mubr.bf16.gmra.mrb[0].mxu0 %v440
      %v600 = vpop.f32.mrb[0].mxu0
      %v601 = vadd.f32 0.0, %v600
      %v602 = vpop.f32.mrb[0].mxu0
      %v603 = vpop.f32.mrb[0].mxu0
      %v604 = vadd.f32 0.0, %v603
      %v605 = vpop.f32.mrb[0].mxu0
      %606 = vmatprep.mubr.bf16.mxu0 0
      %607 = vmatmul.mubr.bf16.gmra.mrb[0].mxu0 %v443
      %v608 = vpop.f32.mrb[0].mxu0
      %v609 = vadd.f32 0.0, %v608
      %v610 = vpop.f32.mrb[0].mxu0
      %v611 = vpop.f32.mrb[0].mxu0
      %v612 = vadd.f32 0.0, %v611
      %v613 = vpop.f32.mrb[0].mxu0
      %614 = vmatprep.mubr.bf16.mxu0 0
      %615 = vmatmul.mubr.bf16.gmra.mrb[0].mxu0 %v446
      %v616 = vpop.f32.mrb[0].mxu0
      %v617 = vadd.f32 0.0, %v616
      %v618 = vpop.f32.mrb[0].mxu0
      %v619 = vpop.f32.mrb[0].mxu0
      %v620 = vadd.f32 0.0, %v619
      %v621 = vpop.f32.mrb[0].mxu0
      %622 = vmatprep.mubr.bf16.mxu0 0
      %623 = vmatmul.mubr.bf16.gmra.mrb[0].mxu0 %v564
      %v624 = vpop.f32.mrb[0].mxu0
      %v625 = vadd.f32 0.0, %v624
      %v626 = vpop.f32.mrb[0].mxu0
      %v627 = vpop.f32.mrb[0].mxu0
      %v628 = vadd.f32 0.0, %v627
      %v629 = vpop.f32.mrb[0].mxu0
      %630 = vdwg.mxu0
      %v631 = vadd.f32 %v483, %v601
      %v632 = vadd.f32 %v486, %v604
      %v633 = vadd.f32 %v491, %v609
      %v634 = vadd.f32 %v494, %v612
      %v635 = vadd.f32 %v499, %v617
      %v636 = vadd.f32 %v502, %v620
      %v637 = vadd.f32 %v507, %v625
      %v638 = vadd.f32 %v510, %v628
      %v639 = vld [vmem:[%s2] sm:$0x1]
      %v641 = vlaneseq
      %v642 = vshrl.u32 %v641, 7
      %v643 = vsub.s32 0, %v642
      %v644 = vrot.slane %v639, %v643
      %v646 = vadd.f32 %v631, %v644
      %v647 = vadd.f32 %v632, %v644
      %v648 = vadd.f32 %v633, %v644
      %v649 = vadd.f32 %v634, %v644
      %v650 = vadd.f32 %v635, %v644
      %v651 = vadd.f32 %v636, %v644
      %v652 = vadd.f32 %v637, %v644
      %v653 = vadd.f32 %v638, %v644
      %vm654 = vcmask 523264
      %655 = vst.msk [vmem:[%s235] sm:$0xff] %vm654, %v646
      %656 = vst.msk [vmem:[%s235 + $0x8] sm:$0xff] %vm654, %v647
      %657 = vst.msk [vmem:[%s235 + $0x10] sm:$0xff] %vm654, %v648
      %658 = vst.msk [vmem:[%s235 + $0x18] sm:$0xff] %vm654, %v649
      %659 = vst.msk [vmem:[%s235 + $0x20] sm:$0xff] %vm654, %v650
      %660 = vst.msk [vmem:[%s235 + $0x28] sm:$0xff] %vm654, %v651
      %661 = vst.msk [vmem:[%s235 + $0x30] sm:$0xff] %vm654, %v652
      %662 = vst.msk [vmem:[%s235 + $0x38] sm:$0xff] %vm654, %v653
      %v663 = vsel %vm654, %v646, 0.0
      %v664 = vsel %vm654, %v647, 0.0
      %v665 = vadd.f32 %v663, %v664
      %v666 = vsel %vm654, %v648, 0.0
      %v667 = vadd.f32 %v665, %v666
      %v668 = vsel %vm654, %v649, 0.0
      %v669 = vadd.f32 %v667, %v668
      %v670 = vsel %vm654, %v650, 0.0
      %v671 = vadd.f32 %v669, %v670
      %v672 = vsel %vm654, %v651, 0.0
      %v673 = vadd.f32 %v671, %v672
      %v674 = vsel %vm654, %v652, 0.0
      %v675 = vadd.f32 %v673, %v674
      %v676 = vsel %vm654, %v653, 0.0
      %v677 = vadd.f32 %v675, %v676
      %v678 = vrot.slane %v677, 4
      %v679 = vadd.f32 %v677, %v678
      %v680 = vrot.slane %v679, 2
      %v681 = vadd.f32 %v679, %v680
      %v682 = vrot.slane %v681, 1
      %v683 = vadd.f32 %v681, %v682
      %vm684 = vcmask 516096
      %685 = vst.msk [vmem:[%s238] sm:$0x1] %vm684, %v683
      %v686 = vmul.f32 %v646, %v646
      %v687 = vmul.f32 %v647, %v647
      %v688 = vmul.f32 %v648, %v648
      %v689 = vmul.f32 %v649, %v649
      %v690 = vmul.f32 %v650, %v650
      %v691 = vmul.f32 %v651, %v651
      %v692 = vmul.f32 %v652, %v652
      %v693 = vmul.f32 %v653, %v653
      %v694 = vsel %vm654, %v686, 0.0
      %v695 = vsel %vm654, %v687, 0.0
      %v696 = vadd.f32 %v694, %v695
      %v697 = vsel %vm654, %v688, 0.0
      %v698 = vadd.f32 %v696, %v697
      %v699 = vsel %vm654, %v689, 0.0
      %v700 = vadd.f32 %v698, %v699
      %v701 = vsel %vm654, %v690, 0.0
      %v702 = vadd.f32 %v700, %v701
      %v703 = vsel %vm654, %v691, 0.0
      %v704 = vadd.f32 %v702, %v703
      %v705 = vsel %vm654, %v692, 0.0
      %v706 = vadd.f32 %v704, %v705
      %v707 = vsel %vm654, %v693, 0.0
      %v708 = vadd.f32 %v706, %v707
      %v709 = vrot.slane %v708, 4
      %v710 = vadd.f32 %v708, %v709
      %v711 = vrot.slane %v710, 2
      %v712 = vadd.f32 %v710, %v711
      %v713 = vrot.slane %v712, 1
      %v714 = vadd.f32 %v712, %v713
      %715 = vst.msk [vmem:[%s241] sm:$0x1] %vm684, %v714
      %p716 = scmp.lt.s32.totalorder %s17, 1
      %s717 = scalar_select %p716, %s17, 1
      %s718 = smul.addr %s717, 8
      %s719 = smul.addr %s718, 8
      %s720 = scalar_lea.vmem %s3, %s719
      %p721 = scmp.lt.s32.totalorder %s17, 1
      %s722 = scalar_select %p721, %s17, 1
      %s723 = scalar_lea.vmem %s4, %s722
      %p724 = scmp.lt.s32.totalorder %s17, 1
      %s725 = scalar_select %p724, %s17, 1
      %s726 = scalar_lea.vmem %s5, %s725
      // Predicated region
      $region33: #{vgg_forward.12} parent=31 // pred_check
        %p727 = pneg %p103
      $region34: #{vgg_forward.12} parent=31 // pred_check_branch
        %729 = sbr.rel (%p727) target = $region36
      $region35: #{vgg_forward.12} parent=31 // pred_region
        _
      $region36: #{vgg_forward.12} parent=31 // pred_fallthru
        _
      // Predicated region
      $region37: #{vgg_forward.12} parent=31 // pred_check
        %p730 = pneg %p129
      $region38: #{vgg_forward.12} parent=31 // pred_check_branch
        %732 = sbr.rel (%p730) target = $region40
      $region39: #{vgg_forward.12} parent=31 // pred_region
        _
      $region40: #{vgg_forward.12} parent=31 // pred_fallthru
        _
      // Predicated region
      $region41: #{vgg_forward.12} parent=31 // pred_check
        %p733 = pneg %p155
      $region42: #{vgg_forward.12} parent=31 // pred_check_branch
        %735 = sbr.rel (%p733) target = $region44
      $region43: #{vgg_forward.12} parent=31 // pred_region
        _
      $region44: #{vgg_forward.12} parent=31 // pred_fallthru
        _
    $region32: #{vgg_forward.12} parent=5 // pred_fallthru
      _
    %p736 = scmp.le.s32.totalorder 2, %s12
    // Predicated region
    $region45: #{vgg_forward.12} parent=5 // pred_check
      %p737 = pneg %p736
    $region46: #{vgg_forward.12} parent=5 // pred_check_branch
      %739 = sbr.rel (%p737) target = $region48
    $region47: #{vgg_forward.12} parent=5 // pred_region
      %s740 = ssub.s32 %s12, 2
      // Predicated region
      $region49: #{vgg_forward.12} parent=47 // pred_check
        %p741 = pneg %p109
      $region50: #{vgg_forward.12} parent=47 // pred_check_branch
        %743 = sbr.rel (%p741) target = $region52
      $region51: #{vgg_forward.12} parent=47 // pred_region
        %p744 = scmp.lt.s32.totalorder %s18, 1
        %s745 = scalar_select %p744, %s18, 1
        %s746 = smul.addr %s745, 8
        %s747 = smul.addr %s746, 8
        %s748 = scalar_lea.vmem %s3, %s747
      $region52: #{vgg_forward.12} parent=47 // pred_fallthru
        _
      // Predicated region
      $region53: #{vgg_forward.12} parent=47 // pred_check
        %p749 = pneg %p135
      $region54: #{vgg_forward.12} parent=47 // pred_check_branch
        %751 = sbr.rel (%p749) target = $region56
      $region55: #{vgg_forward.12} parent=47 // pred_region
        %p752 = scmp.lt.s32.totalorder %s18, 1
        %s753 = scalar_select %p752, %s18, 1
        %s754 = scalar_lea.vmem %s4, %s753
      $region56: #{vgg_forward.12} parent=47 // pred_fallthru
        _
      // Predicated region
      $region57: #{vgg_forward.12} parent=47 // pred_check
        %p755 = pneg %p161
      $region58: #{vgg_forward.12} parent=47 // pred_check_branch
        %757 = sbr.rel (%p755) target = $region60
      $region59: #{vgg_forward.12} parent=47 // pred_region
        %p758 = scmp.lt.s32.totalorder %s18, 1
        %s759 = scalar_select %p758, %s18, 1
        %s760 = scalar_lea.vmem %s5, %s759
      $region60: #{vgg_forward.12} parent=47 // pred_fallthru
        _
    $region48: #{vgg_forward.12} parent=5 // pred_fallthru
      _
  $region6: #{vgg_forward.12} parent=0 // loop_footer
    %s16 = sadd.s32 1, %s12
  $region7: #{vgg_forward.12} parent=0 // loop_footer_branch
    %11 = sbr.rel target = $region3
  $region8: #{vgg_forward.12} parent=0 // loop_exit
    _

// kernel: vgg_forward.13
$region0: #{vgg_forward.13}
  #allocation0 [shape = 'u32[]', space=smem, size = 0x4, offset = 0x4, fixed_abs, tag = 'smem constant byte address 0x4 - core index']
  #allocation1 [shape = 'u32[144,128]{1,0:T(1,128)}', space=vmem, size = 0x12000, scoped, tag = 'internal scratch']
  %s0 = inlined_call_operand.vmem [shape: f32[4,16,128], index: 0, kind: input, shape index: {}]
  %s1 = inlined_call_operand.vmem [shape: f32[1,128], index: 1, kind: input, shape index: {}]
  %s2 = inlined_call_operand.vmem [shape: f32[1,128], index: 2, kind: input, shape index: {}]
  %s3 = inlined_call_operand.vmem [shape: f32[16,128], index: 3, kind: output, shape index: {}]
  %s4 = sld [smem:[#allocation0]]
  $region83: #{vgg_forward.13} parent=0
    _
  %s6 = ssub.s32 1, %s4
  %s7 = scalar_select 0, %s6, %s4
  $region1: #{vgg_forward.13} parent=0
    #allocation2 [shape = 'u8[32768]{0}', space=vmem, size = 0x8000, scoped, tag = 'input window, operand 0']
    loop: start=0, step=1, limit=4
    $region2: #{vgg_forward.13} parent=1 // loop_pre_header
      _
    $region3: #{vgg_forward.13} parent=1 // loop_header
      %s9 = sphi 0, %s13
      %p10 = scmp.ge.s32.totalorder %s9, 4
      %s19 = sphi 0, %s21
      %s22 = sphi 0, %s19
      %s23 = sphi 0, %s22
      %s39 = sphi 0, %s23
      %s43 = sphi 0, %s43
      %s45 = sphi 0, %s43
      %s46 = sphi 0, %s45
      %s60 = sphi 0, %s46
      %s64 = sphi 0, %s64
      %s66 = sphi 0, %s64
      %s67 = sphi 0, %s66
      %s81 = sphi 0, %s67
      %s87 = sphi 0, %s89
      %s90 = sphi 0, %s87
      %s91 = sphi 0, %s90
      %s107 = sphi 0, %s91
    $region4: #{vgg_forward.13} parent=1 // loop_header_branch
      %12 = sbr.rel (%p10) target = $region8
    $region5: #{vgg_forward.13} parent=1 // loop_body
      %s14 = ssub.s32 %s9, 1
      %s15 = ssub.s32 %s9, 2
      %s16 = sadd.s32 %s9, 1
      %s17 = ssub.s32 %s9, %s16
      %p18 = scmp.eq.s32.totalorder %s17, 0
      %s20 = sadd.s32 %s19, 1
      %s21 = scalar_select %p18, %s19, %s20
      %p24 = pneg %p18
      %p25 = scmp.eq.s32.totalorder %s9, 1
      %p26 = por %p24, %p25
      %p27 = scmp.ne.s32.totalorder %s19, %s22
      %p28 = scmp.eq.s32.totalorder %s9, 0
      %p29 = por %p27, %p28
      %p30 = scmp.ne.s32.totalorder %s19, %s22
      %p31 = scmp.eq.s32.totalorder %s14, 1
      %p32 = por %p30, %p31
      %p33 = scmp.ne.s32.totalorder %s22, %s23
      %p34 = scmp.eq.s32.totalorder %s14, 0
      %p35 = por %p33, %p34
      %p36 = scmp.ne.s32.totalorder %s22, %s23
      %p37 = scmp.eq.s32.totalorder %s15, 1
      %p38 = por %p36, %p37
      %p40 = scmp.ne.s32.totalorder %s23, %s39
      %p41 = scmp.eq.s32.totalorder %s15, 0
      %p42 = por %p40, %p41
      %s44 = sadd.s32 %s43, 1
      %p47 = scmp.eq.s32.totalorder %s9, 1
      %p48 = scmp.ne.s32.totalorder %s43, %s45
      %p49 = scmp.eq.s32.totalorder %s9, 0
      %p50 = por %p48, %p49
      %p51 = scmp.ne.s32.totalorder %s43, %s45
      %p52 = scmp.eq.s32.totalorder %s14, 1
      %p53 = por %p51, %p52
      %p54 = scmp.ne.s32.totalorder %s45, %s46
      %p55 = scmp.eq.s32.totalorder %s14, 0
      %p56 = por %p54, %p55
      %p57 = scmp.ne.s32.totalorder %s45, %s46
      %p58 = scmp.eq.s32.totalorder %s15, 1
      %p59 = por %p57, %p58
      %p61 = scmp.ne.s32.totalorder %s46, %s60
      %p62 = scmp.eq.s32.totalorder %s15, 0
      %p63 = por %p61, %p62
      %s65 = sadd.s32 %s64, 1
      %p68 = scmp.eq.s32.totalorder %s9, 1
      %p69 = scmp.ne.s32.totalorder %s64, %s66
      %p70 = scmp.eq.s32.totalorder %s9, 0
      %p71 = por %p69, %p70
      %p72 = scmp.ne.s32.totalorder %s64, %s66
      %p73 = scmp.eq.s32.totalorder %s14, 1
      %p74 = por %p72, %p73
      %p75 = scmp.ne.s32.totalorder %s66, %s67
      %p76 = scmp.eq.s32.totalorder %s14, 0
      %p77 = por %p75, %p76
      %p78 = scmp.ne.s32.totalorder %s66, %s67
      %p79 = scmp.eq.s32.totalorder %s15, 1
      %p80 = por %p78, %p79
      %p82 = scmp.ne.s32.totalorder %s67, %s81
      %p83 = scmp.eq.s32.totalorder %s15, 0
      %p84 = por %p82, %p83
      %s85 = ssub.s32 %s9, %s16
      %p86 = scmp.eq.s32.totalorder %s85, 0
      %s88 = sadd.s32 %s87, 1
      %s89 = scalar_select %p86, %s87, %s88
      %p92 = pneg %p86
      %p93 = scmp.eq.s32.totalorder %s9, 1
      %p94 = por %p92, %p93
      %p95 = scmp.ne.s32.totalorder %s87, %s90
      %p96 = scmp.eq.s32.totalorder %s9, 0
      %p97 = por %p95, %p96
      %p98 = scmp.ne.s32.totalorder %s87, %s90
      %p99 = scmp.eq.s32.totalorder %s14, 1
      %p100 = por %p98, %p99
      %p101 = scmp.ne.s32.totalorder %s90, %s91
      %p102 = scmp.eq.s32.totalorder %s14, 0
      %p103 = por %p101, %p102
      %p104 = scmp.ne.s32.totalorder %s90, %s91
      %p105 = scmp.eq.s32.totalorder %s15, 1
      %p106 = por %p104, %p105
      %p108 = scmp.ne.s32.totalorder %s91, %s107
      %p109 = scmp.eq.s32.totalorder %s15, 0
      %p110 = por %p108, %p109
      %p111 = scmp.le.s32.totalorder 1, %s9
      %p112 = scmp.lt.s32.totalorder %s9, 3
      %p113 = pnand %p111, %p112
      %p114 = pneg %p113
      // Predicated region
      $region9: #{vgg_forward.13} parent=5 // pred_check
        _
      $region10: #{vgg_forward.13} parent=5 // pred_check_branch
        %116 = sbr.rel (%p113) target = $region12
      $region11: #{vgg_forward.13} parent=5 // pred_region
        %s117 = ssub.s32 %s9, 1
        // Predicated region
        $region13: #{vgg_forward.13} parent=11 // pred_check
          %p118 = pneg %p56
        $region14: #{vgg_forward.13} parent=11 // pred_check_branch
          %120 = sbr.rel (%p118) target = $region16
        $region15: #{vgg_forward.13} parent=11 // pred_region
          _
        $region16: #{vgg_forward.13} parent=11 // pred_fallthru
          _
        // Predicated region
        $region17: #{vgg_forward.13} parent=11 // pred_check
          %p121 = pneg %p77
        $region18: #{vgg_forward.13} parent=11 // pred_check_branch
          %123 = sbr.rel (%p121) target = $region20
        $region19: #{vgg_forward.13} parent=11 // pred_region
          _
        $region20: #{vgg_forward.13} parent=11 // pred_fallthru
          _
      $region12: #{vgg_forward.13} parent=5 // pred_fallthru
        _
      %p124 = scmp.lt.s32.totalorder %s9, 2
      // Predicated region
      $region21: #{vgg_forward.13} parent=5 // pred_check
        %p125 = pneg %p124
      $region22: #{vgg_forward.13} parent=5 // pred_check_branch
        %127 = sbr.rel (%p125) target = $region24
      $region23: #{vgg_forward.13} parent=5 // pred_region
        // Predicated region
        $region25: #{vgg_forward.13} parent=23 // pred_check
          %p128 = pneg %p29
        $region26: #{vgg_forward.13} parent=23 // pred_check_branch
          %130 = sbr.rel (%p128) target = $region28
        $region27: #{vgg_forward.13} parent=23 // pred_region
          %s131 = sand.u32 %s19, 1
          %s132 = sand.u32 %s19, 1
          %s133 = smul.addr %s132, 32
          %s134 = scalar_lea.vmem [#allocation2], %s133
          %s135 = smul.addr %s9, 8
          %s136 = scalar_lea.vmem %s0, %s135
          // Predicated region
          $region29: #{vgg_forward.13} parent=27 // pred_check
            _
          $region30: #{vgg_forward.13} parent=27 // pred_check_branch
            %138 = sbr.rel (0) target = $region32
          $region31: #{vgg_forward.13} parent=27 // pred_region
            // Predicated region
            $region33: #{vgg_forward.13} parent=31 // pred_check
              _
            $region34: #{vgg_forward.13} parent=31 // pred_check_branch
              %140 = sbr.rel (0) target = $region36
            $region35: #{vgg_forward.13} parent=31 // pred_region
              // Predicated region
              $region48: #{vgg_forward.13} parent=35 // pred_check
                _
              $region49: #{vgg_forward.13} parent=35 // pred_check_branch
                %161 = sbr.rel (0) target = $region51
              $region50: #{vgg_forward.13} parent=35 // pred_region
                loop: start=0, step=1, limit=1
                $region52: #{vgg_forward.13} parent=50 // loop_pre_header
                  _
                $region53: #{vgg_forward.13} parent=50 // loop_header
                  %s163 = sphi 0, %s167
                  %p164 = scmp.ge.s32.totalorder %s163, 1
                  %s168 = sphi %s136, %s136
                  %s169 = sphi %s134, %s134
                $region54: #{vgg_forward.13} parent=50 // loop_header_branch
                  %166 = sbr.rel (%p164) target = $region58
                $region55: #{vgg_forward.13} parent=50 // loop_body
                  %v170 = vld [vmem:[%s168] sm:$0xff]
                  %171 = vst [vmem:[%s169] sm:$0xff] %v170
                  %v172 = vld [vmem:[%s168 + $0x10] sm:$0xff]
                  %173 = vst [vmem:[%s169 + $0x8] sm:$0xff] %v172
                  %v174 = vld [vmem:[%s168 + $0x20] sm:$0xff]
                  %175 = vst [vmem:[%s169 + $0x10] sm:$0xff] %v174
                  %v176 = vld [vmem:[%s168 + $0x30] sm:$0xff]
                  %177 = vst [vmem:[%s169 + $0x18] sm:$0xff] %v176
                $region56: #{vgg_forward.13} parent=50 // loop_footer
                  %s167 = sadd.s32 1, %s163
                $region57: #{vgg_forward.13} parent=50 // loop_footer_branch
                  %162 = sbr.rel target = $region53
                $region58: #{vgg_forward.13} parent=50 // loop_exit
                  _
              $region51: #{vgg_forward.13} parent=35 // pred_fallthru
                _
              // Predicated region
              $region59: #{vgg_forward.13} parent=35 // pred_check
                _
              $region60: #{vgg_forward.13} parent=35 // pred_check_branch
                %179 = sbr.rel target = $region62
              $region61: #{vgg_forward.13} parent=35 // pred_region
                _
              $region62: #{vgg_forward.13} parent=35 // pred_fallthru
                _
            $region36: #{vgg_forward.13} parent=31 // pred_fallthru
              _
            // Predicated region
            $region37: #{vgg_forward.13} parent=31 // pred_check
              _
            $region38: #{vgg_forward.13} parent=31 // pred_check_branch
              %142 = sbr.rel target = $region40
            $region39: #{vgg_forward.13} parent=31 // pred_region
              loop: start=0, step=1, limit=1
              $region41: #{vgg_forward.13} parent=39 // loop_pre_header
                _
              $region42: #{vgg_forward.13} parent=39 // loop_header
                %s145 = sphi 0, %s149
                %p146 = scmp.ge.s32.totalorder %s145, 1
                %s150 = sphi %s136, %s136
                %s151 = sphi %s134, %s134
              $region43: #{vgg_forward.13} parent=39 // loop_header_branch
                %148 = sbr.rel (%p146) target = $region47
              $region44: #{vgg_forward.13} parent=39 // loop_body
                %v152 = vld [vmem:[%s150] sm:$0xff]
                %153 = vst [vmem:[%s151] sm:$0xff] %v152
                %v154 = vld [vmem:[%s150 + $0x10] sm:$0xff]
                %155 = vst [vmem:[%s151 + $0x8] sm:$0xff] %v154
                %v156 = vld [vmem:[%s150 + $0x20] sm:$0xff]
                %157 = vst [vmem:[%s151 + $0x10] sm:$0xff] %v156
                %v158 = vld [vmem:[%s150 + $0x30] sm:$0xff]
                %159 = vst [vmem:[%s151 + $0x18] sm:$0xff] %v158
              $region45: #{vgg_forward.13} parent=39 // loop_footer
                %s149 = sadd.s32 1, %s145
              $region46: #{vgg_forward.13} parent=39 // loop_footer_branch
                %144 = sbr.rel target = $region42
              $region47: #{vgg_forward.13} parent=39 // loop_exit
                _
            $region40: #{vgg_forward.13} parent=31 // pred_fallthru
              _
          $region32: #{vgg_forward.13} parent=27 // pred_fallthru
            _
          %180 = vnop
        $region28: #{vgg_forward.13} parent=23 // pred_fallthru
          _
      $region24: #{vgg_forward.13} parent=5 // pred_fallthru
        _
      %p181 = scmp.le.s32.totalorder 1, %s9
      %p182 = scmp.lt.s32.totalorder %s9, 3
      %p183 = pnand %p181, %p182
      %p184 = pneg %p183
      // Predicated region
      $region63: #{vgg_forward.13} parent=5 // pred_check
        _
      $region64: #{vgg_forward.13} parent=5 // pred_check_branch
        %186 = sbr.rel (%p183) target = $region66
      $region65: #{vgg_forward.13} parent=5 // pred_region
        %s187 = ssub.s32 %s9, 1
        %s188 = sand.u32 %s22, 1
        %s189 = sand.u32 %s22, 1
        %s190 = smul.addr %s189, 32
        %s191 = scalar_lea.vmem [#allocation2], %s190
        // Predicated region
        $region67: #{vgg_forward.13} parent=65 // pred_check
          %p192 = pneg %p35
        $region68: #{vgg_forward.13} parent=65 // pred_check_branch
          %194 = sbr.rel (%p192) target = $region70
        $region69: #{vgg_forward.13} parent=65 // pred_region
          _
        $region70: #{vgg_forward.13} parent=65 // pred_fallthru
          _
        %s195 = sand.u32 %s22, 1
        %s196 = sand.u32 %s22, 1
        %s197 = smul.addr %s196, 32
        %s198 = scalar_lea.vmem [#allocation2], %s197
        %p199 = pneg %p35
        %p200 = pneg %p32
        %p201 = pneg %p56
        %p202 = pneg %p53
        %p203 = pneg %p77
        %p204 = pneg %p74
        %p205 = pneg %p103
        %p206 = pneg %p100
        %p207 = scmp.lt.s32.totalorder %s14, 1
        %s208 = scalar_select %p207, %s14, 1
        %s209 = smul.addr %s208, 8
        %s210 = scalar_lea.vmem %s3, %s209
        %p211 = scmp.lt.s32.totalorder %s14, 1
        %s212 = scalar_select %p211, %s14, 1
        %s213 = smul.addr %s212, 8
        %s214 = scalar_lea.vmem %s3, %s213
        %v215 = vld [vmem:[%s191] sm:$0xff]
        %v216 = vld [vmem:[%s191 + $0x8] sm:$0xff]
        %v217 = vld [vmem:[%s191 + $0x10] sm:$0xff]
        %v218 = vld [vmem:[%s191 + $0x18] sm:$0xff]
        %v219 = vld [vmem:[%s1] sm:$0x1]
        %v221 = vlaneseq
        %v222 = vshrl.u32 %v221, 7
        %v223 = vsub.s32 0, %v222
        %v224 = vrot.slane %v219, %v223
        %v226 = vmul.f32 %v215, %v224
        %v227 = vmul.f32 %v216, %v224
        %v228 = vmul.f32 %v217, %v224
        %v229 = vmul.f32 %v218, %v224
        %v230 = vld [vmem:[%s2] sm:$0x1]
        %v232 = vlaneseq
        %v233 = vshrl.u32 %v232, 7
        %v234 = vsub.s32 0, %v233
        %v235 = vrot.slane %v230, %v234
        %v237 = vadd.f32 %v226, %v235
        %v238 = vadd.f32 %v227, %v235
        %v239 = vadd.f32 %v228, %v235
        %v240 = vadd.f32 %v229, %v235
        %v241 = vmax.f32 %v237, %v238
        %v242 = vmax.f32 %v239, %v240
        %v243 = vmax.f32 %v241, %v242
        %v244 = vtanh.pop %v243
        %245 = vst [vmem:[%s214] sm:$0xff] %v244
        %p246 = scmp.lt.s32.totalorder %s14, 1
        %s247 = scalar_select %p246, %s14, 1
        %s248 = smul.addr %s247, 8
        %s249 = scalar_lea.vmem %s3, %s248
        // Predicated region
        $region71: #{vgg_forward.13} parent=65 // pred_check
          %p250 = pneg %p100
        $region72: #{vgg_forward.13} parent=65 // pred_check_branch
          %252 = sbr.rel (%p250) target = $region74
        $region73: #{vgg_forward.13} parent=65 // pred_region
          _
        $region74: #{vgg_forward.13} parent=65 // pred_fallthru
          _
      $region66: #{vgg_forward.13} parent=5 // pred_fallthru
        _
      %p253 = scmp.le.s32.totalorder 2, %s9
      // Predicated region
      $region75: #{vgg_forward.13} parent=5 // pred_check
        %p254 = pneg %p253
      $region76: #{vgg_forward.13} parent=5 // pred_check_branch
        %256 = sbr.rel (%p254) target = $region78
      $region77: #{vgg_forward.13} parent=5 // pred_region
        %s257 = ssub.s32 %s9, 2
        // Predicated region
        $region79: #{vgg_forward.13} parent=77 // pred_check
          %p258 = pneg %p106
        $region80: #{vgg_forward.13} parent=77 // pred_check_branch
          %260 = sbr.rel (%p258) target = $region82
        $region81: #{vgg_forward.13} parent=77 // pred_region
          %p261 = scmp.lt.s32.totalorder %s15, 1
          %s262 = scalar_select %p261, %s15, 1
          %s263 = smul.addr %s262, 8
          %s264 = scalar_lea.vmem %s3, %s263
        $region82: #{vgg_forward.13} parent=77 // pred_fallthru
          _
      $region78: #{vgg_forward.13} parent=5 // pred_fallthru
        _
    $region6: #{vgg_forward.13} parent=1 // loop_footer
      %s13 = sadd.s32 1, %s9
    $region7: #{vgg_forward.13} parent=1 // loop_footer_branch
      %8 = sbr.rel target = $region3
    $region8: #{vgg_forward.13} parent=1 // loop_exit
      _

// kernel: vgg_forward.14
$region0: #{vgg_forward.14}
  #allocation0 [shape = 'u32[]', space=smem, size = 0x4, offset = 0x4, fixed_abs, tag = 'smem constant byte address 0x4 - core index']
  #allocation1 [shape = 'u32[144,128]{1,0:T(1,128)}', space=vmem, size = 0x12000, scoped, tag = 'internal scratch']
  #allocation2 [shape = 'f32[2,128]{1,0:T(2,128)}', space=vmem, size = 0x400, scoped, tag = 'scratch operand']
  %s0 = inlined_call_operand.vmem [shape: bf16[2,1024], index: 0, kind: input, shape index: {}]
  %s1 = inlined_call_operand.vmem [shape: bf16[1024,128], index: 1, kind: input, shape index: {}]
  %s2 = inlined_call_operand.vmem [shape: f32[1,128], index: 2, kind: input, shape index: {}]
  %s3 = inlined_call_operand.vmem [shape: f32[2,128], index: 3, kind: output, shape index: {}]
  %s4 = sld [smem:[#allocation0]]
  $region53: #{vgg_forward.14} parent=0
    _
  %s6 = ssub.s32 1, %s4
  %s7 = scalar_select 0, %s6, %s4
  loop: start=0, step=1, limit=4
  $region2: #{vgg_forward.14} parent=0 // loop_pre_header
    _
  $region3: #{vgg_forward.14} parent=0 // loop_header
    %s9 = sphi 0, %s13
    %p10 = scmp.ge.s32.totalorder %s9, 4
    %s16 = sphi 0, %s28
    %s17 = sphi 0, %s24
    %s18 = sphi 0, %s16
    %s19 = sphi 0, %s17
    %s20 = sphi 0, %s18
    %s21 = sphi 0, %s19
    %s33 = sphi 0, %s35
    %s36 = sphi 0, %s33
    %s37 = sphi 0, %s36
    %s53 = sphi 0, %s37
    %s59 = sphi 0, %s61
    %s62 = sphi 0, %s59
    %s63 = sphi 0, %s62
    %s79 = sphi 0, %s63
    %s83 = sphi 0, %s83
    %s85 = sphi 0, %s83
    %s86 = sphi 0, %s85
    %s100 = sphi 0, %s86
    %s106 = sphi 0, %s108
    %s109 = sphi 0, %s106
    %s110 = sphi 0, %s109
    %s126 = sphi 0, %s110
  $region4: #{vgg_forward.14} parent=0 // loop_header_branch
    %12 = sbr.rel (%p10) target = $region8
  $region5: #{vgg_forward.14} parent=0 // loop_body
    %s14 = ssub.s32 %s9, 1
    %s15 = ssub.s32 %s9, 2
    %s22 = sadd.s32 1, %s17
    %p23 = scmp.ge.s32.totalorder %s22, 2
    %s24 = scalar_select %p23, 0, %s22
    %s25 = sadd.s32 1, %s16
    %s26 = scalar_select %p23, %s25, %s16
    %p27 = scmp.ge.s32.totalorder %s26, 1
    %s28 = scalar_select %p27, 0, %s26
    %s29 = ssub.s32 %s16, %s28
    %s30 = ssub.s32 %s17, %s24
    %s31 = sor.u32 %s29, %s30
    %p32 = scmp.eq.s32.totalorder %s31, 0
    %s34 = sadd.s32 %s33, 1
    %s35 = scalar_select %p32, %s33, %s34
    %p38 = pneg %p32
    %p39 = scmp.eq.s32.totalorder %s9, 1
    %p40 = por %p38, %p39
    %p41 = scmp.ne.s32.totalorder %s33, %s36
    %p42 = scmp.eq.s32.totalorder %s9, 0
    %p43 = por %p41, %p42
    %p44 = scmp.ne.s32.totalorder %s33, %s36
    %p45 = scmp.eq.s32.totalorder %s14, 1
    %p46 = por %p44, %p45
    %p47 = scmp.ne.s32.totalorder %s36, %s37
    %p48 = scmp.eq.s32.totalorder %s14, 0
    %p49 = por %p47, %p48
    %p50 = scmp.ne.s32.totalorder %s36, %s37
    %p51 = scmp.eq.s32.totalorder %s15, 1
    %p52 = por %p50, %p51
    %p54 = scmp.ne.s32.totalorder %s37, %s53
    %p55 = scmp.eq.s32.totalorder %s15, 0
    %p56 = por %p54, %p55
    %s57 = ssub.s32 %s17, %s24
    %p58 = scmp.eq.s32.totalorder %s57, 0
    %s60 = sadd.s32 %s59, 1
    %s61 = scalar_select %p58, %s59, %s60
    %p64 = pneg %p58
    %p65 = scmp.eq.s32.totalorder %s9, 1
    %p66 = por %p64, %p65
    %p67 = scmp.ne.s32.totalorder %s59, %s62
    %p68 = scmp.eq.s32.totalorder %s9, 0
    %p69 = por %p67, %p68
    %p70 = scmp.ne.s32.totalorder %s59, %s62
    %p71 = scmp.eq.s32.totalorder %s14, 1
    %p72 = por %p70, %p71
    %p73 = scmp.ne.s32.totalorder %s62, %s63
    %p74 = scmp.eq.s32.totalorder %s14, 0
    %p75 = por %p73, %p74
    %p76 = scmp.ne.s32.totalorder %s62, %s63
    %p77 = scmp.eq.s32.totalorder %s15, 1
    %p78 = por %p76, %p77
    %p80 = scmp.ne.s32.totalorder %s63, %s79
    %p81 = scmp.eq.s32.totalorder %s15, 0
    %p82 = por %p80, %p81
    %s84 = sadd.s32 %s83, 1
    %p87 = scmp.eq.s32.totalorder %s9, 1
    %p88 = scmp.ne.s32.totalorder %s83, %s85
    %p89 = scmp.eq.s32.totalorder %s9, 0
    %p90 = por %p88, %p89
    %p91 = scmp.ne.s32.totalorder %s83, %s85
    %p92 = scmp.eq.s32.totalorder %s14, 1
    %p93 = por %p91, %p92
    %p94 = scmp.ne.s32.totalorder %s85, %s86
    %p95 = scmp.eq.s32.totalorder %s14, 0
    %p96 = por %p94, %p95
    %p97 = scmp.ne.s32.totalorder %s85, %s86
    %p98 = scmp.eq.s32.totalorder %s15, 1
    %p99 = por %p97, %p98
    %p101 = scmp.ne.s32.totalorder %s86, %s100
    %p102 = scmp.eq.s32.totalorder %s15, 0
    %p103 = por %p101, %p102
    %s104 = ssub.s32 %s16, %s28
    %p105 = scmp.eq.s32.totalorder %s104, 0
    %s107 = sadd.s32 %s106, 1
    %s108 = scalar_select %p105, %s106, %s107
    %p111 = pneg %p105
    %p112 = scmp.eq.s32.totalorder %s9, 1
    %p113 = por %p111, %p112
    %p114 = scmp.ne.s32.totalorder %s106, %s109
    %p115 = scmp.eq.s32.totalorder %s9, 0
    %p116 = por %p114, %p115
    %p117 = scmp.ne.s32.totalorder %s106, %s109
    %p118 = scmp.eq.s32.totalorder %s14, 1
    %p119 = por %p117, %p118
    %p120 = scmp.ne.s32.totalorder %s109, %s110
    %p121 = scmp.eq.s32.totalorder %s14, 0
    %p122 = por %p120, %p121
    %p123 = scmp.ne.s32.totalorder %s109, %s110
    %p124 = scmp.eq.s32.totalorder %s15, 1
    %p125 = por %p123, %p124
    %p127 = scmp.ne.s32.totalorder %s110, %s126
    %p128 = scmp.eq.s32.totalorder %s15, 0
    %p129 = por %p127, %p128
    %p130 = scmp.le.s32.totalorder 1, %s9
    %p131 = scmp.lt.s32.totalorder %s9, 3
    %p132 = pnand %p130, %p131
    %p133 = pneg %p132
    // Predicated region
    $region9: #{vgg_forward.14} parent=5 // pred_check
      _
    $region10: #{vgg_forward.14} parent=5 // pred_check_branch
      %135 = sbr.rel (%p132) target = $region12
    $region11: #{vgg_forward.14} parent=5 // pred_region
      %s136 = ssub.s32 %s9, 1
      // Predicated region
      $region13: #{vgg_forward.14} parent=11 // pred_check
        %p137 = pneg %p96
      $region14: #{vgg_forward.14} parent=11 // pred_check_branch
        %139 = sbr.rel (%p137) target = $region16
      $region15: #{vgg_forward.14} parent=11 // pred_region
        _
      $region16: #{vgg_forward.14} parent=11 // pred_fallthru
        _
    $region12: #{vgg_forward.14} parent=5 // pred_fallthru
      _
    %p140 = scmp.lt.s32.totalorder %s9, 2
    // Predicated region
    $region17: #{vgg_forward.14} parent=5 // pred_check
      %p141 = pneg %p140
    $region18: #{vgg_forward.14} parent=5 // pred_check_branch
      %143 = sbr.rel (%p141) target = $region20
    $region19: #{vgg_forward.14} parent=5 // pred_region
      // Predicated region
      $region21: #{vgg_forward.14} parent=19 // pred_check
        %p144 = pneg %p43
      $region22: #{vgg_forward.14} parent=19 // pred_check_branch
        %146 = sbr.rel (%p144) target = $region24
      $region23: #{vgg_forward.14} parent=19 // pred_region
        %s147 = smul.u32 4, %s17
        %p148 = scmp.lt.s32.totalorder %s16, 0
        %s149 = scalar_select %p148, %s16, 0
        %p150 = scmp.lt.s32.totalorder %s147, 7
        %s151 = scalar_select %p150, %s147, 7
        %s152 = smul.addr %s149, 8
        %s153 = sadd.s32 %s151, %s152
        %s154 = scalar_lea.vmem %s0, %s153
        %s155 = smul.u32 4, %s17
      $region24: #{vgg_forward.14} parent=19 // pred_fallthru
        _
      // Predicated region
      $region25: #{vgg_forward.14} parent=19 // pred_check
        %p156 = pneg %p69
      $region26: #{vgg_forward.14} parent=19 // pred_check_branch
        %158 = sbr.rel (%p156) target = $region28
      $region27: #{vgg_forward.14} parent=19 // pred_region
        %s159 = smul.u32 64, %s17
        %p160 = scmp.lt.s32.totalorder %s159, 127
        %s161 = scalar_select %p160, %s159, 127
        %s162 = smul.addr %s161, 4
        %s163 = scalar_lea.vmem %s1, %s162
        %s164 = smul.u32 64, %s17
      $region28: #{vgg_forward.14} parent=19 // pred_fallthru
        _
    $region20: #{vgg_forward.14} parent=5 // pred_fallthru
      _
    %p165 = scmp.le.s32.totalorder 1, %s9
    %p166 = scmp.lt.s32.totalorder %s9, 3
    %p167 = pnand %p165, %p166
    %p168 = pneg %p167
    // Predicated region
    $region29: #{vgg_forward.14} parent=5 // pred_check
      _
    $region30: #{vgg_forward.14} parent=5 // pred_check_branch
      %170 = sbr.rel (%p167) target = $region32
    $region31: #{vgg_forward.14} parent=5 // pred_region
      %s171 = ssub.s32 %s9, 1
      %s172 = smul.u32 4, %s19
      %p173 = scmp.lt.s32.totalorder %s18, 0
      %s174 = scalar_select %p173, %s18, 0
      %p175 = scmp.lt.s32.totalorder %s172, 7
      %s176 = scalar_select %p175, %s172, 7
      %s177 = smul.addr %s174, 8
      %s178 = sadd.s32 %s176, %s177
      %s179 = scalar_lea.vmem %s0, %s178
      %p180 = pneg %p49
      %p181 = pneg %p46
      %s182 = smul.u32 64, %s19
      %p183 = scmp.lt.s32.totalorder %s182, 127
      %s184 = scalar_select %p183, %s182, 127
      %s185 = smul.addr %s184, 4
      %s186 = scalar_lea.vmem %s1, %s185
      %p187 = pneg %p75
      %p188 = pneg %p72
      %p189 = pneg %p96
      %p190 = pneg %p93
      %p191 = pneg %p122
      %p192 = pneg %p119
      %p193 = scmp.lt.s32.totalorder %s18, 0
      %s194 = scalar_select %p193, %s18, 0
      %s195 = smul.addr %s194, 2
      %s196 = scalar_lea.vmem %s3, %s195
      %s197 = smul.u32 4, %s19
      %p198 = scmp.lt.s32.totalorder %s18, 0
      %s199 = scalar_select %p198, %s18, 0
      %p200 = scmp.lt.s32.totalorder %s197, 7
      %s201 = scalar_select %p200, %s197, 7
      %s202 = smul.addr %s199, 8
      %s203 = sadd.s32 %s201, %s202
      %s204 = scalar_lea.vmem %s0, %s203
      %s205 = smul.u32 4, %s19
      %s206 = smul.u32 64, %s19
      %p207 = scmp.lt.s32.totalorder %s206, 127
      %s208 = scalar_select %p207, %s206, 127
      %s209 = smul.addr %s208, 4
      %s210 = scalar_lea.vmem %s1, %s209
      %s211 = smul.u32 64, %s19
      %p212 = scmp.lt.s32.totalorder %s18, 0
      %s213 = scalar_select %p212, %s18, 0
      %s214 = smul.addr %s213, 2
      %s215 = scalar_lea.vmem %s3, %s214
      %p217 = scmp.eq.s32.totalorder %s19, 0
      // Predicated region
      $region33: #{vgg_forward.14} parent=31 // pred_check
        %p218 = pneg %p217
      $region34: #{vgg_forward.14} parent=31 // pred_check_branch
        %220 = sbr.rel (%p218) target = $region36
      $region35: #{vgg_forward.14} parent=31 // pred_region
        %221 = vst [vmem:[#allocation2] sm:$0x3] 0.0
      $region36: #{vgg_forward.14} parent=31 // pred_fallthru
        _
      %v222 = vld [vmem:[#allocation2] sm:$0x3]
      %v223 = vld [vmem:[%s204] sm:$0xf]
      %v224 = vld [vmem:[%s210] sm:$0xf]
      %v225 = vld [vmem:[%s210 + $0x4] sm:$0xf]
      %v226 = vld [vmem:[%s210 + $0x8] sm:$0xf]
      %v227 = vld [vmem:[%s210 + $0xc] sm:$0xf]
      %v228 = vld [vmem:[%s210 + $0x10] sm:$0xf]
      %v229 = vld [vmem:[%s210 + $0x14] sm:$0xf]
      %v230 = vld [vmem:[%s210 + $0x18] sm:$0xf]
      %v231 = vld [vmem:[%s210 + $0x1c] sm:$0xf]
      %v232 = vld [vmem:[%s210 + $0x20] sm:$0xf]
      %v233 = vld [vmem:[%s210 + $0x24] sm:$0xf]
      %v234 = vld [vmem:[%s210 + $0x28] sm:$0xf]
      %v235 = vld [vmem:[%s210 + $0x2c] sm:$0xf]
      %v236 = vld [vmem:[%s210 + $0x30] sm:$0xf]
      %v237 = vld [vmem:[%s210 + $0x34] sm:$0xf]
      %v238 = vld [vmem:[%s210 + $0x38] sm:$0xf]
      %v239 = vld [vmem:[%s210 + $0x3c] sm:$0xf]
      %v240 = vld [vmem:[%s210 + $0x40] sm:$0xf]
      %v241 = vld [vmem:[%s210 + $0x44] sm:$0xf]
      %v242 = vld [vmem:[%s210 + $0x48] sm:$0xf]
      %v243 = vld [vmem:[%s210 + $0x4c] sm:$0xf]
      %v244 = vld [vmem:[%s210 + $0x50] sm:$0xf]
      %v245 = vld [vmem:[%s210 + $0x54] sm:$0xf]
      %v246 = vld [vmem:[%s210 + $0x58] sm:$0xf]
      %v247 = vld [vmem:[%s210 + $0x5c] sm:$0xf]
      %v248 = vld [vmem:[%s210 + $0x60] sm:$0xf]
      %v249 = vld [vmem:[%s210 + $0x64] sm:$0xf]
      %v250 = vld [vmem:[%s210 + $0x68] sm:$0xf]
      %v251 = vld [vmem:[%s210 + $0x6c] sm:$0xf]
      %v252 = vld [vmem:[%s210 + $0x70] sm:$0xf]
      %v253 = vld [vmem:[%s210 + $0x74] sm:$0xf]
      %v254 = vld [vmem:[%s210 + $0x78] sm:$0xf]
      %v255 = vld [vmem:[%s210 + $0x7c] sm:$0xf]
      %v256 = vld [vmem:[%s210 + $0x80] sm:$0xf]
      %v257 = vld [vmem:[%s210 + $0x84] sm:$0xf]
      %v258 = vld [vmem:[%s210 + $0x88] sm:$0xf]
      %v259 = vld [vmem:[%s210 + $0x8c] sm:$0xf]
      %v260 = vld [vmem:[%s210 + $0x90] sm:$0xf]
      %v261 = vld [vmem:[%s210 + $0x94] sm:$0xf]
      %v262 = vld [vmem:[%s210 + $0x98] sm:$0xf]
      %v263 = vld [vmem:[%s210 + $0x9c] sm:$0xf]
      %v264 = vld [vmem:[%s210 + $0xa0] sm:$0xf]
      %v265 = vld [vmem:[%s210 + $0xa4] sm:$0xf]
      %v266 = vld [vmem:[%s210 + $0xa8] sm:$0xf]
      %v267 = vld [vmem:[%s210 + $0xac] sm:$0xf]
      %v268 = vld [vmem:[%s210 + $0xb0] sm:$0xf]
      %v269 = vld [vmem:[%s210 + $0xb4] sm:$0xf]
      %v270 = vld [vmem:[%s210 + $0xb8] sm:$0xf]
      %v271 = vld [vmem:[%s210 + $0xbc] sm:$0xf]
      %v272 = vld [vmem:[%s210 + $0xc0] sm:$0xf]
      %v273 = vld [vmem:[%s210 + $0xc4] sm:$0xf]
      %v274 = vld [vmem:[%s210 + $0xc8] sm:$0xf]
      %v275 = vld [vmem:[%s210 + $0xcc] sm:$0xf]
      %v276 = vld [vmem:[%s210 + $0xd0] sm:$0xf]
      %v277 = vld [vmem:[%s210 + $0xd4] sm:$0xf]
      %v278 = vld [vmem:[%s210 + $0xd8] sm:$0xf]
      %v279 = vld [vmem:[%s210 + $0xdc] sm:$0xf]
      %v280 = vld [vmem:[%s210 + $0xe0] sm:$0xf]
      %v281 = vld [vmem:[%s210 + $0xe4] sm:$0xf]
      %v282 = vld [vmem:[%s210 + $0xe8] sm:$0xf]
      %v283 = vld [vmem:[%s210 + $0xec] sm:$0xf]
      %v284 = vld [vmem:[%s210 + $0xf0] sm:$0xf]
      %v285 = vld [vmem:[%s210 + $0xf4] sm:$0xf]
      %v286 = vld [vmem:[%s210 + $0xf8] sm:$0xf]
      %v287 = vld [vmem:[%s210 + $0xfc] sm:$0xf]
      %v290 = vunpack.c.l.s4 1966171168
      %v291 = vunpack.c.0.s8 %v290
      %v292 = vlaneseq
      %v293 = vshrl.u32 %v292, 7
      %v294 = vsub.s32 %v291, %v293
      %v295 = vrot.slane %v223, %v294
      %v296 = vcombine.high %v295, %v295
      %v298 = vunpack.c.l.s4 1966171168
      %v299 = vunpack.c.0.s8 %v298
      %v300 = vlaneseq
      %v301 = vshrl.u32 %v300, 7
      %v302 = vsub.s32 %v299, %v301
      %v303 = vrot.slane %v295, %v302
      %v305 = vunpack.c.l.s4 1966171168
      %v306 = vunpack.c.0.s8 %v305
      %v307 = vlaneseq
      %v308 = vshrl.u32 %v307, 7
      %v309 = vsub.s32 %v306, %v308
      %v310 = vrot.slane %v296, %v309
      %v311 = vcombine.high %v303, %v303
      %v312 = vcombine.high %v310, %v310
      %v381 = vunpack.c.l.b16 %v224
      %v382 = vunpack.c.l.b16 %v225
      %v383 = vunpack.c.l.b16 %v226
      %v384 = vunpack.c.l.b16 %v227
      %v385 = vunpack.c.l.b16 %v228
      %v386 = vunpack.c.l.b16 %v229
      %v387 = vunpack.c.l.b16 %v230
      %v388 = vunpack.c.l.b16 %v231
      %v389 = vunpack.c.l.b16 %v232
      %v390 = vunpack.c.l.b16 %v233
      %v391 = vunpack.c.l.b16 %v234
      %v392 = vunpack.c.l.b16 %v235
      %v393 = vunpack.c.l.b16 %v236
      %v394 = vunpack.c.l.b16 %v237
      %v395 = vunpack.c.l.b16 %v238
      %v396 = vunpack.c.l.b16 %v239
      %v397 = vunpack.c.l.b16 %v240
      %v398 = vunpack.c.l.b16 %v241
      %v399 = vunpack.c.l.b16 %v242
      %v400 = vunpack.c.l.b16 %v243
      %v401 = vunpack.c.l.b16 %v244
      %v402 = vunpack.c.l.b16 %v245
      %v403 = vunpack.c.l.b16 %v246
      %v404 = vunpack.c.l.b16 %v247
      %v405 = vunpack.c.l.b16 %v248
      %v406 = vunpack.c.l.b16 %v249
      %v407 = vunpack.c.l.b16 %v250
      %v408 = vunpack.c.l.b16 %v251
      %v409 = vunpack.c.l.b16 %v252
      %v410 = vunpack.c.l.b16 %v253
      %v411 = vunpack.c.l.b16 %v254
      %v412 = vunpack.c.l.b16 %v255
      %v413 = vunpack.c.l.b16 %v256
      %v414 = vunpack.c.l.b16 %v257
      %v415 = vunpack.c.l.b16 %v258
      %v416 = vunpack.c.l.b16 %v259
      %v417 = vunpack.c.l.b16 %v260
      %v418 = vunpack.c.l.b16 %v261
      %v419 = vunpack.c.l.b16 %v262
      %v420 = vunpack.c.l.b16 %v263
      %v421 = vunpack.c.l.b16 %v264
      %v422 = vunpack.c.l.b16 %v265
      %v423 = vunpack.c.l.b16 %v266
      %v424 = vunpack.c.l.b16 %v267
      %v425 = vunpack.c.l.b16 %v268
      %v426 = vunpack.c.l.b16 %v269
      %v427 = vunpack.c.l.b16 %v270
      %v428 = vunpack.c.l.b16 %v271
      %v429 = vunpack.c.l.b16 %v272
      %v430 = vunpack.c.l.b16 %v273
      %v431 = vunpack.c.l.b16 %v274
      %v432 = vunpack.c.l.b16 %v275
      %v433 = vunpack.c.l.b16 %v276
      %v434 = vunpack.c.l.b16 %v277
      %v435 = vunpack.c.l.b16 %v278
      %v436 = vunpack.c.l.b16 %v279
      %v437 = vunpack.c.l.b16 %v280
      %v438 = vunpack.c.l.b16 %v281
      %v439 = vunpack.c.l.b16 %v282
      %v440 = vunpack.c.l.b16 %v283
      %v441 = vunpack.c.l.b16 %v284
      %v442 = vunpack.c.l.b16 %v285
      %v443 = vunpack.c.l.b16 %v286
      %v444 = vunpack.c.l.b16 %v287
      %v445 = vpack.c.b16 %v382, %v381
      %v446 = vpack.c.b16 %v384, %v383
      %v447 = vpack.c.b16 %v386, %v385
      %v448 = vpack.c.b16 %v388, %v387
      %v449 = vpack.c.b16 %v390, %v389
      %v450 = vpack.c.b16 %v392, %v391
      %v451 = vpack.c.b16 %v394, %v393
      %v452 = vpack.c.b16 %v396, %v395
      %v453 = vpack.c.b16 %v398, %v397
      %v454 = vpack.c.b16 %v400, %v399
      %v455 = vpack.c.b16 %v402, %v401
      %v456 = vpack.c.b16 %v404, %v403
      %v457 = vpack.c.b16 %v406, %v405
      %v458 = vpack.c.b16 %v408, %v407
      %v459 = vpack.c.b16 %v410, %v409
      %v460 = vpack.c.b16 %v412, %v411
      %v461 = vpack.c.b16 %v414, %v413
      %v462 = vpack.c.b16 %v416, %v415
      %v463 = vpack.c.b16 %v418, %v417
      %v464 = vpack.c.b16 %v420, %v419
      %v465 = vpack.c.b16 %v422, %v421
      %v466 = vpack.c.b16 %v424, %v423
      %v467 = vpack.c.b16 %v426, %v425
      %v468 = vpack.c.b16 %v428, %v427
      %v469 = vpack.c.b16 %v430, %v429
      %v470 = vpack.c.b16 %v432, %v431
      %v471 = vpack.c.b16 %v434, %v433
      %v472 = vpack.c.b16 %v436, %v435
      %v473 = vpack.c.b16 %v438, %v437
      %v474 = vpack.c.b16 %v440, %v439
      %v475 = vpack.c.b16 %v442, %v441
      %v476 = vpack.c.b16 %v444, %v443
      %509 = vmatprep.subr.bf16.mxu0 0
      %510 = vmatpush1.bf16.msra.mxu0 %v445
      %511 = vmatprep.subr.bf16.mxu0 0
      %512 = vmatpush1.bf16.msra.mxu0 %v446
      %513 = vmatprep.subr.bf16.mxu0 0
      %514 = vmatpush1.bf16.msra.mxu0 %v447
      %515 = vmatprep.subr.bf16.mxu0 0
      %516 = vmatpush1.bf16.msra.mxu0 %v448
      %517 = vmatprep.subr.bf16.mxu0 0
      %518 = vmatpush1.bf16.msra.mxu0 %v449
      %519 = vmatprep.subr.bf16.mxu0 0
      %520 = vmatpush1.bf16.msra.mxu0 %v450
      %521 = vmatprep.subr.bf16.mxu0 0
      %522 = vmatpush1.bf16.msra.mxu0 %v451
      %523 = vmatprep.subr.bf16.mxu0 0
      %524 = vmatpush1.bf16.msra.mxu0 %v452
      %525 = vmatprep.subr.bf16.mxu0 0
      %526 = vmatpush1.bf16.msra.mxu0 %v453
      %527 = vmatprep.subr.bf16.mxu0 0
      %528 = vmatpush1.bf16.msra.mxu0 %v454
      %529 = vmatprep.subr.bf16.mxu0 0
      %530 = vmatpush1.bf16.msra.mxu0 %v455
      %531 = vmatprep.subr.bf16.mxu0 0
      %532 = vmatpush1.bf16.msra.mxu0 %v456
      %533 = vmatprep.subr.bf16.mxu0 0
      %534 = vmatpush1.bf16.msra.mxu0 %v457
      %535 = vmatprep.subr.bf16.mxu0 0
      %536 = vmatpush1.bf16.msra.mxu0 %v458
      %537 = vmatprep.subr.bf16.mxu0 0
      %538 = vmatpush1.bf16.msra.mxu0 %v459
      %539 = vmatprep.subr.bf16.mxu0 0
      %540 = vmatpush1.bf16.msra.mxu0 %v460
      %541 = vmatprep.mubr.bf16.mxu0 %v310
      %542 = vmatmul.mubr.bf16.gmra.mrb[0].mxu0 %v303
      %v543 = vpop.f32.mrb[0].mxu0
      %v544 = vadd.f32 0.0, %v543
      %v545 = vpop.f32.mrb[0].mxu0
      %v546 = vpop.f32.mrb[0].mxu0
      %v547 = vpop.f32.mrb[0].mxu0
      %548 = vdwg.mxu0
      %549 = vmatprep.subr.bf16.mxu0 0
      %550 = vmatpush1.bf16.msra.mxu0 %v461
      %551 = vmatprep.subr.bf16.mxu0 0
      %552 = vmatpush1.bf16.msra.mxu0 %v462
      %553 = vmatprep.subr.bf16.mxu0 0
      %554 = vmatpush1.bf16.msra.mxu0 %v463
      %555 = vmatprep.subr.bf16.mxu0 0
      %556 = vmatpush1.bf16.msra.mxu0 %v464
      %557 = vmatprep.subr.bf16.mxu0 0
      %558 = vmatpush1.bf16.msra.mxu0 %v465
      %559 = vmatprep.subr.bf16.mxu0 0
      %560 = vmatpush1.bf16.msra.mxu0 %v466
      %561 = vmatprep.subr.bf16.mxu0 0
      %562 = vmatpush1.bf16.msra.mxu0 %v467
      %563 = vmatprep.subr.bf16.mxu0 0
      %564 = vmatpush1.bf16.msra.mxu0 %v468
      %565 = vmatprep.subr.bf16.mxu0 0
      %566 = vmatpush1.bf16.msra.mxu0 %v469
      %567 = vmatprep.subr.bf16.mxu0 0
      %568 = vmatpush1.bf16.msra.mxu0 %v470
      %569 = vmatprep.subr.bf16.mxu0 0
      %570 = vmatpush1.bf16.msra.mxu0 %v471
      %571 = vmatprep.subr.bf16.mxu0 0
      %572 = vmatpush1.bf16.msra.mxu0 %v472
      %573 = vmatprep.subr.bf16.mxu0 0
      %574 = vmatpush1.bf16.msra.mxu0 %v473
      %575 = vmatprep.subr.bf16.mxu0 0
      %576 = vmatpush1.bf16.msra.mxu0 %v474
      %577 = vmatprep.subr.bf16.mxu0 0
      %578 = vmatpush1.bf16.msra.mxu0 %v475
      %579 = vmatprep.subr.bf16.mxu0 0
      %580 = vmatpush1.bf16.msra.mxu0 %v476
      %581 = vmatprep.mubr.bf16.mxu0 %v312
      %582 = vmatmul.mubr.bf16.gmra.mrb[0].mxu0 %v311
      %v583 = vpop.f32.mrb[0].mxu0
      %v584 = vadd.f32 %v544, %v583
      %v585 = vpop.f32.mrb[0].mxu0
      %v586 = vpop.f32.mrb[0].mxu0
      %v587 = vpop.f32.mrb[0].mxu0
      %588 = vdwg.mxu0
      %v589 = vadd.f32 %v222, %v584
      %590 = vst [vmem:[#allocation2] sm:$0x3] %v589
      %p591 = scmp.eq.s32.totalorder %s19, 1
      // Predicated region
      $region37: #{vgg_forward.14} parent=31 // pred_check
        %p592 = pneg %p591
      $region38: #{vgg_forward.14} parent=31 // pred_check_branch
        %594 = sbr.rel (%p592) target = $region40
      $region39: #{vgg_forward.14} parent=31 // pred_region
        %v595 = vld [vmem:[#allocation2] sm:$0x3]
        %v596 = vld [vmem:[%s2] sm:$0x1]
        %v598 = vlaneseq
        %v599 = vshrl.u32 %v598, 7
        %v600 = vsub.s32 0, %v599
        %v601 = vrot.slane %v596, %v600
        %v603 = vadd.f32 %v595, %v601
        %604 = vst [vmem:[%s215] sm:$0x3] %v603
      $region40: #{vgg_forward.14} parent=31 // pred_fallthru
        _
      %p605 = scmp.lt.s32.totalorder %s18, 0
      %s606 = scalar_select %p605, %s18, 0
      %s607 = smul.addr %s606, 2
      %s608 = scalar_lea.vmem %s3, %s607
      // Predicated region
      $region41: #{vgg_forward.14} parent=31 // pred_check
        %p609 = pneg %p119
      $region42: #{vgg_forward.14} parent=31 // pred_check_branch
        %611 = sbr.rel (%p609) target = $region44
      $region43: #{vgg_forward.14} parent=31 // pred_region
        _
      $region44: #{vgg_forward.14} parent=31 // pred_fallthru
        _
      // Predicated region
      $region45: #{vgg_forward.14} parent=31 // pred_check
        %p612 = pneg %p119
      $region46: #{vgg_forward.14} parent=31 // pred_check_branch
        %614 = sbr.rel (%p612) target = $region48
      $region47: #{vgg_forward.14} parent=31 // pred_region
        %p615 = scmp.lt.s32.totalorder %s18, 0
        %s616 = scalar_select %p615, %s18, 0
        %s617 = smul.addr %s616, 2
        %s618 = scalar_lea.vmem %s3, %s617
      $region48: #{vgg_forward.14} parent=31 // pred_fallthru
        _
    $region32: #{vgg_forward.14} parent=5 // pred_fallthru
      _
    %p619 = scmp.le.s32.totalorder 2, %s9
    // Predicated region
    $region49: #{vgg_forward.14} parent=5 // pred_check
      %p620 = pneg %p619
    $region50: #{vgg_forward.14} parent=5 // pred_check_branch
      %622 = sbr.rel (%p620) target = $region52
    $region51: #{vgg_forward.14} parent=5 // pred_region
      %s623 = ssub.s32 %s9, 2
    $region52: #{vgg_forward.14} parent=5 // pred_fallthru
      _
  $region6: #{vgg_forward.14} parent=0 // loop_footer
    %s13 = sadd.s32 1, %s9
  $region7: #{vgg_forward.14} parent=0 // loop_footer_branch
    %8 = sbr.rel target = $region3
  $region8: #{vgg_forward.14} parent=0 // loop_exit
    _

// kernel: vgg_forward.15
$region0: #{vgg_forward.15}
  #allocation0 [shape = 'u32[]', space=smem, size = 0x4, offset = 0x4, fixed_abs, tag = 'smem constant byte address 0x4 - core index']
  #allocation1 [shape = 'u32[144,128]{1,0:T(1,128)}', space=vmem, size = 0x12000, scoped, tag = 'internal scratch']
  #allocation2 [shape = 'f32[2,10]{1,0:T(2,128)}', space=vmem, size = 0x400, scoped, tag = 'scratch operand']
  %s0 = inlined_call_operand.vmem [shape: bf16[2,128], index: 0, kind: input, shape index: {}]
  %s1 = inlined_call_operand.vmem [shape: bf16[128,10], index: 1, kind: input, shape index: {}]
  %s2 = inlined_call_operand.vmem [shape: f32[1,10], index: 2, kind: input, shape index: {}]
  %s3 = inlined_call_operand.hbm [shape: f32[2,10], index: 3, kind: output, shape index: {}]
  %s4 = sld [smem:[#allocation0]]
  $region30: #{vgg_forward.15} parent=0
    _
  %s6 = ssub.s32 1, %s4
  %s7 = scalar_select 0, %s6, %s4
  $region1: #{vgg_forward.15} parent=0
    #allocation3 [shape = 'u8[1024]{0}', space=vmem, size = 0x400, scoped, tag = 'output window, operand 0, single buffered']
    #allocation4 [shape = 's32[1]{0}', space=sflag, size = 0x4, scoped, tag = 'scoped memory for vgg_forward.15']
    %8 = vsyncpa [#allocation4], 0
    // Predicated region
    $region2: #{vgg_forward.15} parent=1 // pred_check
      _
    $region3: #{vgg_forward.15} parent=1 // pred_check_branch
      %10 = sbr.rel (0) target = $region5
    $region4: #{vgg_forward.15} parent=1 // pred_region
      _
    $region5: #{vgg_forward.15} parent=1 // pred_fallthru
      _
    // Predicated region
    $region6: #{vgg_forward.15} parent=1 // pred_check
      _
    $region7: #{vgg_forward.15} parent=1 // pred_check_branch
      %12 = sbr.rel (0) target = $region9
    $region8: #{vgg_forward.15} parent=1 // pred_region
      _
    $region9: #{vgg_forward.15} parent=1 // pred_fallthru
      _
    // Predicated region
    $region10: #{vgg_forward.15} parent=1 // pred_check
      _
    $region11: #{vgg_forward.15} parent=1 // pred_check_branch
      %14 = sbr.rel (0) target = $region13
    $region12: #{vgg_forward.15} parent=1 // pred_region
      _
    $region13: #{vgg_forward.15} parent=1 // pred_fallthru
      _
    %p16 = scmp.eq.s32.totalorder 0, 0
    // Predicated region
    $region14: #{vgg_forward.15} parent=1 // pred_check
      %p17 = pneg %p16
    $region15: #{vgg_forward.15} parent=1 // pred_check_branch
      %19 = sbr.rel (%p17) target = $region17
    $region16: #{vgg_forward.15} parent=1 // pred_region
      %vm20 = vcmask 74752
      %21 = vst.msk [vmem:[#allocation2] sm:$0x3] %vm20, 0.0
    $region17: #{vgg_forward.15} parent=1 // pred_fallthru
      _
    %v22 = vld [vmem:[#allocation2] sm:$0x3]
    %v23 = vld [vmem:[%s0] sm:$0x1]
    %v24 = vld [vmem:[%s1] sm:$0xf]
    %v25 = vld [vmem:[%s1 + $0x4] sm:$0xf]
    %v26 = vld [vmem:[%s1 + $0x8] sm:$0xf]
    %v27 = vld [vmem:[%s1 + $0xc] sm:$0xf]
    %v28 = vld [vmem:[%s1 + $0x10] sm:$0xf]
    %v29 = vld [vmem:[%s1 + $0x14] sm:$0xf]
    %v30 = vld [vmem:[%s1 + $0x18] sm:$0xf]
    %v31 = vld [vmem:[%s1 + $0x1c] sm:$0xf]
    %v32 = vld [vmem:[%s1 + $0x20] sm:$0xf]
    %v33 = vld [vmem:[%s1 + $0x24] sm:$0xf]
    %v34 = vld [vmem:[%s1 + $0x28] sm:$0xf]
    %v35 = vld [vmem:[%s1 + $0x2c] sm:$0xf]
    %v36 = vld [vmem:[%s1 + $0x30] sm:$0xf]
    %v37 = vld [vmem:[%s1 + $0x34] sm:$0xf]
    %v38 = vld [vmem:[%s1 + $0x38] sm:$0xf]
    %v39 = vld [vmem:[%s1 + $0x3c] sm:$0xf]
    %v56 = vunpack.c.l.b16 %v24
    %v57 = vunpack.c.l.b16 %v25
    %v58 = vunpack.c.l.b16 %v26
    %v59 = vunpack.c.l.b16 %v27
    %v60 = vunpack.c.l.b16 %v28
    %v61 = vunpack.c.l.b16 %v29
    %v62 = vunpack.c.l.b16 %v30
    %v63 = vunpack.c.l.b16 %v31
    %v64 = vunpack.c.l.b16 %v32
    %v65 = vunpack.c.l.b16 %v33
    %v66 = vunpack.c.l.b16 %v34
    %v67 = vunpack.c.l.b16 %v35
    %v68 = vunpack.c.l.b16 %v36
    %v69 = vunpack.c.l.b16 %v37
    %v70 = vunpack.c.l.b16 %v38
    %v71 = vunpack.c.l.b16 %v39
    %v72 = vpack.c.b16 %v57, %v56
    %v73 = vpack.c.b16 %v59, %v58
    %v74 = vpack.c.b16 %v61, %v60
    %v75 = vpack.c.b16 %v63, %v62
    %v76 = vpack.c.b16 %v65, %v64
    %v77 = vpack.c.b16 %v67, %v66
    %v78 = vpack.c.b16 %v69, %v68
    %v79 = vpack.c.b16 %v71, %v70
    %88 = vmatprep.subr.bf16.mxu0 0
    %89 = vmatpush1.bf16.msra.mxu0 %v72
    %90 = vmatprep.subr.bf16.mxu0 0
    %91 = vmatpush1.bf16.msra.mxu0 %v73
    %92 = vmatprep.subr.bf16.mxu0 0
    %93 = vmatpush1.bf16.msra.mxu0 %v74
    %94 = vmatprep.subr.bf16.mxu0 0
    %95 = vmatpush1.bf16.msra.mxu0 %v75
    %96 = vmatprep.subr.bf16.mxu0 0
    %97 = vmatpush1.bf16.msra.mxu0 %v76
    %98 = vmatprep.subr.bf16.mxu0 0
    %99 = vmatpush1.bf16.msra.mxu0 %v77
    %100 = vmatprep.subr.bf16.mxu0 0
    %101 = vmatpush1.bf16.msra.mxu0 %v78
    %102 = vmatprep.subr.bf16.mxu0 0
    %103 = vmatpush1.bf16.msra.mxu0 %v79
    %104 = vmatprep.subr.bf16.mxu0 0
    %105 = vmatpush1.bf16.msra.mxu0 0
    %106 = vmatprep.subr.bf16.mxu0 0
    %107 = vmatpush1.bf16.msra.mxu0 0
    %108 = vmatprep.subr.bf16.mxu0 0
    %109 = vmatpush1.bf16.msra.mxu0 0
    %110 = vmatprep.subr.bf16.mxu0 0
    %111 = vmatpush1.bf16.msra.mxu0 0
    %112 = vmatprep.subr.bf16.mxu0 0
    %113 = vmatpush1.bf16.msra.mxu0 0
    %114 = vmatprep.subr.bf16.mxu0 0
    %115 = vmatpush1.bf16.msra.mxu0 0
    %116 = vmatprep.subr.bf16.mxu0 0
    %117 = vmatpush1.bf16.msra.mxu0 0
    %118 = vmatprep.subr.bf16.mxu0 0
    %119 = vmatpush1.bf16.msra.mxu0 0
    %120 = vmatprep.mubr.bf16.mxu0 0
    %121 = vmatmul.mubr.bf16.gmra.mrb[0].mxu0 %v23
    %v122 = vpop.f32.mrb[0].mxu0
    %v123 = vadd.f32 0.0, %v122
    %v124 = vpop.f32.mrb[0].mxu0
    %v125 = vpop.f32.mrb[0].mxu0
    %v126 = vpop.f32.mrb[0].mxu0
    %127 = vdwg.mxu0
    %v128 = vadd.f32 %v22, %v123
    %vm129 = vcmask 74752
    %130 = vst.msk [vmem:[#allocation2] sm:$0x3] %vm129, %v128
    // Predicated region
    $region18: #{vgg_forward.15} parent=1 // pred_check
      %p131 = pneg %p16
    $region19: #{vgg_forward.15} parent=1 // pred_check_branch
      %133 = sbr.rel (%p131) target = $region21
    $region20: #{vgg_forward.15} parent=1 // pred_region
      %v134 = vld [vmem:[#allocation2] sm:$0x3]
      %v135 = vld [vmem:[%s2] sm:$0x1]
      %v137 = vlaneseq
      %v138 = vshrl.u32 %v137, 7
      %v139 = vsub.s32 0, %v138
      %v140 = vrot.slane %v135, %v139
      %v142 = vadd.f32 %v134, %v140
      %143 = vst.msk [vmem:[#allocation3] sm:$0x3] %vm129, %v142
    $region21: #{vgg_forward.15} parent=1 // pred_fallthru
      _
    // Predicated region
    $region22: #{vgg_forward.15} parent=1 // pred_check
      _
    $region23: #{vgg_forward.15} parent=1 // pred_check_branch
      %145 = sbr.rel (0) target = $region25
    $region24: #{vgg_forward.15} parent=1 // pred_region
      %s147 = ssub.s32 32, 32
      %148 = vsyncadd [#allocation4], %s147
      %s150 = sshll.u32 [#allocation3], 4
      %s151 = int_to_ptr.vmem [resolvable:$true] %s150
      %153 = dma.vmem_to_hbm [thread:$0]  %s151, 32, %s3, [#allocation4]
    $region25: #{vgg_forward.15} parent=1 // pred_fallthru
      _
    // Predicated region
    $region26: #{vgg_forward.15} parent=1 // pred_check
      _
    $region27: #{vgg_forward.15} parent=1 // pred_check_branch
      %155 = sbr.rel (0) target = $region29
    $region28: #{vgg_forward.15} parent=1 // pred_region
      %156 = dma.done [#allocation4], 32
    $region29: #{vgg_forward.15} parent=1 // pred_fallthru
      _
    %157 = vsyncpa [#allocation4], 1

</llo_original>
